<compile_context>
chip_gen: v7x
topology: tpu7x:2x2x1
jax: 0.10.0
libtpu: 0.0.40
codegen_flags: <defaults>
</compile_context>

<pallas_src>
import functools
import numpy as np
import jax
import jax.numpy as jnp
from jax.experimental import pallas as pl
from jax.experimental.pallas import tpu as pltpu


OUT_DIM = 10    # nn.Linear(hidden_dim, 10) in the PyTorch module
OUT_PAD = 128   # lane-dense final output width (sliced back to OUT_DIM in wrapper)


# --------------------------- Fused forward kernel ---------------------------
def fused_cnn_lstm_kernel(*refs, seq_len, batch_p, hidden, num_layers, ksize):
    # refs layout: x_flat, conv_w, conv_b, [wih, whh, b] * L, fc_w, fc_b, out
    xf_ref, convw_ref, convb_ref = refs[0], refs[1], refs[2]
    lstm_refs = refs[3:3 + 3 * num_layers]
    fcw_ref = refs[3 + 3 * num_layers]
    fcb_ref = refs[4 + 3 * num_layers]
    out_ref = refs[5 + 3 * num_layers]

    S, BP, H = seq_len, batch_p, hidden

    # ---- hoisted gate-activation constants (single-tanh sigmoid trick) ------
    # PyTorch gate order: i, f, g, o.  sigmoid(z) = 0.5 * (1 + tanh(z / 2)),
    # so i/f/o columns get a 0.5 pre-scale into tanh and a 0.5*t + 0.5 fixup;
    # the g columns pass straight through tanh.  Note post_mul == pre.
    col = jax.lax.broadcasted_iota(jnp.int32, (1, 4 * H), 1)
    is_g = jnp.logical_and(col >= 2 * H, col < 3 * H)
    pre = jnp.where(is_g, 1.0, 0.5).astype(jnp.float32)        # (1, 4H)
    post_add = jnp.where(is_g, 0.0, 0.5).astype(jnp.float32)   # (1, 4H)

    # ---- Conv1d(k=3, pad=1) + ReLU: K shifted-row matmuls on flat input -----
    # xf_ref: ((S+K-1)*BP, Cin), time-major, zero-padded in time and batch.
    xf = xf_ref[...]
    acc = jnp.dot(xf[0:S * BP, :], convw_ref[0],
                  preferred_element_type=jnp.float32)
    for k in range(1, ksize):
        acc = acc + jnp.dot(xf[k * BP:k * BP + S * BP, :], convw_ref[k],
                            preferred_element_type=jnp.float32)
    layer_in = jnp.maximum(acc + convb_ref[...], 0.0)           # (S*BP, Cout)

    # ---- layer-0 input projection hoisted out of the recurrence -------------
    gx0 = (jnp.dot(layer_in, lstm_refs[0][...],
                   preferred_element_type=jnp.float32) + lstm_refs[2][...])
    gx = [gx0[t * BP:(t + 1) * BP, :] for t in range(S)]        # per-step (BP, 4H)

    # ---- multi-layer LSTM; state + activations stay VMEM/vreg resident ------
    last_h = None
    for l in range(num_layers):
        whh = lstm_refs[3 * l + 1][...]                         # (H, 4H)
        has_next = l + 1 < num_layers
        if has_next:
            wih_n = lstm_refs[3 * (l + 1)][...]                 # (H, 4H)
            b_n = lstm_refs[3 * (l + 1) + 2][...]               # (1, 4H)

        h = jnp.zeros((BP, H), jnp.float32)
        c = jnp.zeros((BP, H), jnp.float32)
        gx_next = []
        for t in range(S):  # static, fully unrolled (S is small)
            gates = gx[t] + jnp.dot(h, whh, preferred_element_type=jnp.float32)
            # one EUP tanh pass covers i, f, g and o
            act = jnp.tanh(gates * pre) * pre + post_add        # (BP, 4H)
            i = act[:, 0 * H:1 * H]
            f = act[:, 1 * H:2 * H]
            g = act[:, 2 * H:3 * H]
            o = act[:, 3 * H:4 * H]
            c = f * c + i * g
            h = o * jnp.tanh(c)
            if has_next:
                # interleave next layer's input projection -> fills the idle
                # MXU inside this layer's serial chain, no concatenate needed
                gx_next.append(
                    jnp.dot(h, wih_n, preferred_element_type=jnp.float32) + b_n)
        last_h = h
        gx = gx_next

    # ---- final Linear on the last timestep (lane-padded, unmasked store) ----
    out = (jnp.dot(last_h, fcw_ref[...], preferred_element_type=jnp.float32)
           + fcb_ref[...])                                      # (BP, OUT_PAD)
    out_ref[...] = out.astype(out_ref.dtype)
    # TODO(synk): weight-stationary whh via pltpu.matmul_push_rhs/acc_lhs/pop and
    # the v7x MRB in-place accumulate are further wins but were left out to keep
    # this kernel portable and guaranteed to lower on v5e/v6e/v7x.


# ------------------------------- Wrapper ------------------------------------
def prepare_params(params):
    """One-time layout prep (hoisted out of the per-inference path)."""
    out_dim = params["fc_w"].shape[1]
    return {
        "conv_w": params["conv_w"],                              # (K, Cin, Cout)
        "conv_b": params["conv_b"],                              # (1, Cout)
        "lstm": params["lstm"],                                  # [(wih, whh, b)]
        "fc_w": jnp.pad(params["fc_w"], ((0, 0), (0, OUT_PAD - out_dim))),
        "fc_b": jnp.pad(params["fc_b"], ((0, 0), (0, OUT_PAD - out_dim))),
    }


def cnn_lstm_forward(x_bsc, prepared):
    B, S, Cin = x_bsc.shape
    K, _, Cout = prepared["conv_w"].shape
    H = prepared["lstm"][0][1].shape[0]
    L = len(prepared["lstm"])

    BP = max(8, ((B + 7) // 8) * 8)     # pad batch to sublane multiple
    pad = (K - 1) // 2

    # time-major flat input, zero-padded in time + batch (single fused XLA copy)
    xp = jnp.pad(x_bsc, ((0, BP - B), (pad, pad), (0, 0)))       # (BP, S+K-1, Cin)
    x_flat = jnp.transpose(xp, (1, 0, 2)).reshape((S + K - 1) * BP, Cin)

    lstm_flat = [a for layer in prepared["lstm"] for a in layer]
    n_in = 5 + 3 * L

    flops = 2 * (K * S * BP * Cin * Cout            # conv matmuls
                 + S * BP * Cout * 4 * H            # layer-0 input projection
                 + (L - 1) * S * BP * H * 4 * H     # interleaved projections
                 + L * S * BP * H * 4 * H           # recurrent matmuls
                 + BP * H * OUT_PAD)                # fc
    trans = L * S * BP * 5 * H                      # tanh(gates) + tanh(c)
    bytes_accessed = 4 * (int(x_flat.size) + int(prepared["conv_w"].size)
                          + int(prepared["conv_b"].size)
                          + sum(int(a.size) for a in lstm_flat)
                          + int(prepared["fc_w"].size) + int(prepared["fc_b"].size)
                          + BP * OUT_PAD)

    kern = functools.partial(fused_cnn_lstm_kernel, seq_len=S, batch_p=BP,
                             hidden=H, num_layers=L, ksize=K)
    out = pl.pallas_call(
        kern,
        out_shape=jax.ShapeDtypeStruct((BP, OUT_PAD), jnp.float32),
        in_specs=[pl.BlockSpec(memory_space=pltpu.MemorySpace.VMEM)] * n_in,
        out_specs=pl.BlockSpec(memory_space=pltpu.MemorySpace.VMEM),
        cost_estimate=pl.CostEstimate(flops=flops, transcendentals=trans,
                                      bytes_accessed=bytes_accessed),
    )(x_flat, prepared["conv_w"], prepared["conv_b"], *lstm_flat,
      prepared["fc_w"], prepared["fc_b"])
    return out[:B, :OUT_DIM]


# ------------------------- Pure-JAX reference ------------------------------
def reference_forward(x_bsc, params):
    B, S, Cin = x_bsc.shape
    K = params["conv_w"].shape[0]
    pad = (K - 1) // 2
    xp = jnp.pad(x_bsc, ((0, 0), (pad, pad), (0, 0)))
    acc = sum(jnp.einsum("bsc,co->bso", xp[:, k:k + S, :], params["conv_w"][k])
              for k in range(K))
    h = jax.nn.relu(acc + params["conv_b"][None])                # (B, S, 64)

    h = jnp.transpose(h, (1, 0, 2))                              # (S, B, 64)
    for (wih, whh, b) in params["lstm"]:
        H = whh.shape[0]

        def step(carry, xt):
            hh, cc = carry
            gates = xt @ wih + hh @ whh + b[0]
            i = jax.nn.sigmoid(gates[:, :H])
            f = jax.nn.sigmoid(gates[:, H:2 * H])
            g = jnp.tanh(gates[:, 2 * H:3 * H])
            o = jax.nn.sigmoid(gates[:, 3 * H:])
            cc = f * cc + i * g
            hh = o * jnp.tanh(cc)
            return (hh, cc), hh

        init = (jnp.zeros((B, H)), jnp.zeros((B, H)))
        _, h = jax.lax.scan(step, init, h)                       # (S, B, H)
    return h[-1] @ params["fc_w"] + params["fc_b"]


# ------------------------------ Params -------------------------------------
def init_params(key, input_dim, hidden_dim, num_layers, conv_ch=64, out_dim=OUT_DIM):
    ks = jax.random.split(key, 4 + 3 * num_layers)
    params = {}
    # Conv1d: PyTorch weight (64, Cin, 3) -> stored (3, Cin, 64)
    params["conv_w"] = 0.1 * jax.random.normal(ks[0], (3, input_dim, conv_ch),
                                               dtype=jnp.float32)
    params["conv_b"] = 0.1 * jax.random.normal(ks[1], (1, conv_ch),
                                               dtype=jnp.float32)
    # LSTM layers: PyTorch W_ih (4H, Din), W_hh (4H, H) -> stored transposed
    layers = []
    for l in range(num_layers):
        din = conv_ch if l == 0 else hidden_dim
        wih = 0.1 * jax.random.normal(ks[2 + 3 * l], (din, 4 * hidden_dim),
                                      dtype=jnp.float32)
        whh = 0.1 * jax.random.normal(ks[3 + 3 * l], (hidden_dim, 4 * hidden_dim),
                                      dtype=jnp.float32)
        # combined b_ih + b_hh
        b = 0.1 * jax.random.normal(ks[4 + 3 * l], (1, 4 * hidden_dim),
                                    dtype=jnp.float32)
        layers.append((wih, whh, b))
    params["lstm"] = layers
    # Linear: PyTorch (10, H) -> stored (H, 10)
    params["fc_w"] = 0.1 * jax.random.normal(ks[-2], (hidden_dim, out_dim),
                                             dtype=jnp.float32)
    params["fc_b"] = 0.1 * jax.random.normal(ks[-1], (1, out_dim),
                                             dtype=jnp.float32)
    return params


if __name__ == "__main__":
    key = jax.random.PRNGKey(0)
    B, S, INPUT_DIM = 2, 8, 4
    HIDDEN, NUM_LAYERS = 32, 2

    k_x, k_p = jax.random.split(key)
    x = jax.random.normal(k_x, (B, S, INPUT_DIM), dtype=jnp.float32)
    params = init_params(k_p, INPUT_DIM, HIDDEN, NUM_LAYERS)
    prepared = prepare_params(params)     # one-time layout prep (hoisted)

    fwd = jax.jit(cnn_lstm_forward)
    out = jax.block_until_ready(fwd(x, prepared))

    ref = jax.block_until_ready(reference_forward(x, params))
    assert out.shape == (B, OUT_DIM), out.shape
    np.testing.assert_allclose(np.asarray(out), np.asarray(ref),
                               rtol=1e-4, atol=1e-4)
    print("KERNEL_OK")
</pallas_src>

<mosaic_0001>
module attributes {stable_mosaic.version = 11 : i64} {
  func.func @fused_cnn_lstm_kernel(%arg0: memref<80x4xf32, #tpu.memory_space<vmem>>, %arg1: memref<3x4x64xf32, #tpu.memory_space<vmem>>, %arg2: memref<1x64xf32, #tpu.memory_space<vmem>>, %arg3: memref<64x128xf32, #tpu.memory_space<vmem>>, %arg4: memref<32x128xf32, #tpu.memory_space<vmem>>, %arg5: memref<1x128xf32, #tpu.memory_space<vmem>>, %arg6: memref<32x128xf32, #tpu.memory_space<vmem>>, %arg7: memref<32x128xf32, #tpu.memory_space<vmem>>, %arg8: memref<1x128xf32, #tpu.memory_space<vmem>>, %arg9: memref<32x128xf32, #tpu.memory_space<vmem>>, %arg10: memref<1x128xf32, #tpu.memory_space<vmem>>, %arg11: memref<8x128xf32, #tpu.memory_space<vmem>>) attributes {dimension_semantics = [], scalar_prefetch = 0 : i64, scratch_operands = 0 : i64, tpu.core_type = #tpu.core_type<tc>} {
    %0 = tpu.iota {dimensions = array<i32: 1>} : vector<1x128xi32>
    %c64_i32 = arith.constant 64 : i32
    %1 = vector.broadcast %c64_i32 : i32 to vector<1x128xi32>
    %2 = arith.cmpi sge, %0, %1 : vector<1x128xi32>
    %c96_i32 = arith.constant 96 : i32
    %3 = vector.broadcast %c96_i32 : i32 to vector<1x128xi32>
    %4 = arith.cmpi slt, %0, %3 : vector<1x128xi32>
    %5 = arith.andi %2, %4 : vector<1x128xi1>
    %cst = arith.constant 1.000000e+00 : f32
    %cst_0 = arith.constant 5.000000e-01 : f32
    %6 = vector.broadcast %cst : f32 to vector<1x128xf32>
    %7 = vector.broadcast %cst_0 : f32 to vector<1x128xf32>
    %8 = arith.select %5, %6, %7 : vector<1x128xi1>, vector<1x128xf32>
    %cst_1 = arith.constant 0.000000e+00 : f32
    %cst_2 = arith.constant 5.000000e-01 : f32
    %9 = vector.broadcast %cst_1 : f32 to vector<1x128xf32>
    %10 = vector.broadcast %cst_2 : f32 to vector<1x128xf32>
    %11 = arith.select %5, %9, %10 : vector<1x128xi1>, vector<1x128xf32>
    %c0 = arith.constant 0 : index
    %c0_3 = arith.constant 0 : index
    %12 = vector.load %arg0[%c0, %c0_3] : memref<80x4xf32, #tpu.memory_space<vmem>>, vector<80x4xf32>
    %13 = vector.extract_strided_slice %12 {offsets = [0, 0], sizes = [64, 4], strides = [1, 1]} : vector<80x4xf32> to vector<64x4xf32>
    %c0_4 = arith.constant 0 : index
    %c0_5 = arith.constant 0 : index
    %c0_6 = arith.constant 0 : index
    %14 = vector.load %arg1[%c0_4, %c0_5, %c0_6] : memref<3x4x64xf32, #tpu.memory_space<vmem>>, vector<1x4x64xf32>
    %15 = vector.shape_cast %14 : vector<1x4x64xf32> to vector<4x64xf32>
    %cst_7 = arith.constant dense<0.000000e+00> : vector<64x64xf32>
    %16 = tpu.matmul %13, %15, %cst_7 {dimension_numbers = #tpu.dot_dimension_numbers<[1], [0], [0], [1], [0, 0, 1, 1], [], []>} : vector<64x4xf32>, vector<4x64xf32>, vector<64x64xf32> -> vector<64x64xf32>
    %17 = vector.extract_strided_slice %12 {offsets = [8, 0], sizes = [64, 4], strides = [1, 1]} : vector<80x4xf32> to vector<64x4xf32>
    %c1 = arith.constant 1 : index
    %c0_8 = arith.constant 0 : index
    %c0_9 = arith.constant 0 : index
    %18 = vector.load %arg1[%c1, %c0_8, %c0_9] : memref<3x4x64xf32, #tpu.memory_space<vmem>>, vector<1x4x64xf32>
    %19 = vector.shape_cast %18 : vector<1x4x64xf32> to vector<4x64xf32>
    %cst_10 = arith.constant dense<0.000000e+00> : vector<64x64xf32>
    %20 = tpu.matmul %17, %19, %cst_10 {dimension_numbers = #tpu.dot_dimension_numbers<[1], [0], [0], [1], [0, 0, 1, 1], [], []>} : vector<64x4xf32>, vector<4x64xf32>, vector<64x64xf32> -> vector<64x64xf32>
    %21 = arith.addf %16, %20 : vector<64x64xf32>
    %22 = vector.extract_strided_slice %12 {offsets = [16, 0], sizes = [64, 4], strides = [1, 1]} : vector<80x4xf32> to vector<64x4xf32>
    %c2 = arith.constant 2 : index
    %c0_11 = arith.constant 0 : index
    %c0_12 = arith.constant 0 : index
    %23 = vector.load %arg1[%c2, %c0_11, %c0_12] : memref<3x4x64xf32, #tpu.memory_space<vmem>>, vector<1x4x64xf32>
    %24 = vector.shape_cast %23 : vector<1x4x64xf32> to vector<4x64xf32>
    %cst_13 = arith.constant dense<0.000000e+00> : vector<64x64xf32>
    %25 = tpu.matmul %22, %24, %cst_13 {dimension_numbers = #tpu.dot_dimension_numbers<[1], [0], [0], [1], [0, 0, 1, 1], [], []>} : vector<64x4xf32>, vector<4x64xf32>, vector<64x64xf32> -> vector<64x64xf32>
    %26 = arith.addf %21, %25 : vector<64x64xf32>
    %c0_14 = arith.constant 0 : index
    %c0_15 = arith.constant 0 : index
    %27 = vector.load %arg2[%c0_14, %c0_15] : memref<1x64xf32, #tpu.memory_space<vmem>>, vector<1x64xf32>
    %28 = vector.broadcast %27 : vector<1x64xf32> to vector<64x64xf32>
    %29 = arith.addf %26, %28 : vector<64x64xf32>
    %cst_16 = arith.constant 0.000000e+00 : f32
    %30 = vector.broadcast %cst_16 : f32 to vector<64x64xf32>
    %31 = arith.maximumf %29, %30 : vector<64x64xf32>
    %c0_17 = arith.constant 0 : index
    %c0_18 = arith.constant 0 : index
    %32 = vector.load %arg3[%c0_17, %c0_18] : memref<64x128xf32, #tpu.memory_space<vmem>>, vector<64x128xf32>
    %cst_19 = arith.constant dense<0.000000e+00> : vector<64x128xf32>
    %33 = tpu.matmul %31, %32, %cst_19 {dimension_numbers = #tpu.dot_dimension_numbers<[1], [0], [0], [1], [0, 0, 1, 1], [], []>} : vector<64x64xf32>, vector<64x128xf32>, vector<64x128xf32> -> vector<64x128xf32>
    %c0_20 = arith.constant 0 : index
    %c0_21 = arith.constant 0 : index
    %34 = vector.load %arg5[%c0_20, %c0_21] : memref<1x128xf32, #tpu.memory_space<vmem>>, vector<1x128xf32>
    %35 = vector.broadcast %34 : vector<1x128xf32> to vector<64x128xf32>
    %36 = arith.addf %33, %35 : vector<64x128xf32>
    %37 = vector.extract_strided_slice %36 {offsets = [0, 0], sizes = [8, 128], strides = [1, 1]} : vector<64x128xf32> to vector<8x128xf32>
    %38 = vector.extract_strided_slice %36 {offsets = [8, 0], sizes = [8, 128], strides = [1, 1]} : vector<64x128xf32> to vector<8x128xf32>
    %39 = vector.extract_strided_slice %36 {offsets = [16, 0], sizes = [8, 128], strides = [1, 1]} : vector<64x128xf32> to vector<8x128xf32>
    %40 = vector.extract_strided_slice %36 {offsets = [24, 0], sizes = [8, 128], strides = [1, 1]} : vector<64x128xf32> to vector<8x128xf32>
    %41 = vector.extract_strided_slice %36 {offsets = [32, 0], sizes = [8, 128], strides = [1, 1]} : vector<64x128xf32> to vector<8x128xf32>
    %42 = vector.extract_strided_slice %36 {offsets = [40, 0], sizes = [8, 128], strides = [1, 1]} : vector<64x128xf32> to vector<8x128xf32>
    %43 = vector.extract_strided_slice %36 {offsets = [48, 0], sizes = [8, 128], strides = [1, 1]} : vector<64x128xf32> to vector<8x128xf32>
    %44 = vector.extract_strided_slice %36 {offsets = [56, 0], sizes = [8, 128], strides = [1, 1]} : vector<64x128xf32> to vector<8x128xf32>
    %c0_22 = arith.constant 0 : index
    %c0_23 = arith.constant 0 : index
    %45 = vector.load %arg4[%c0_22, %c0_23] : memref<32x128xf32, #tpu.memory_space<vmem>>, vector<32x128xf32>
    %c0_24 = arith.constant 0 : index
    %c0_25 = arith.constant 0 : index
    %46 = vector.load %arg6[%c0_24, %c0_25] : memref<32x128xf32, #tpu.memory_space<vmem>>, vector<32x128xf32>
    %c0_26 = arith.constant 0 : index
    %c0_27 = arith.constant 0 : index
    %47 = vector.load %arg8[%c0_26, %c0_27] : memref<1x128xf32, #tpu.memory_space<vmem>>, vector<1x128xf32>
    %cst_28 = arith.constant 0.000000e+00 : f32
    %48 = vector.broadcast %cst_28 : f32 to vector<8x32xf32>
    %cst_29 = arith.constant 0.000000e+00 : f32
    %49 = vector.broadcast %cst_29 : f32 to vector<8x32xf32>
    %cst_30 = arith.constant dense<0.000000e+00> : vector<8x128xf32>
    %50 = tpu.matmul %48, %45, %cst_30 {dimension_numbers = #tpu.dot_dimension_numbers<[1], [0], [0], [1], [0, 0, 1, 1], [], []>} : vector<8x32xf32>, vector<32x128xf32>, vector<8x128xf32> -> vector<8x128xf32>
    %51 = arith.addf %37, %50 : vector<8x128xf32>
    %52 = vector.broadcast %8 : vector<1x128xf32> to vector<8x128xf32>
    %53 = arith.mulf %51, %52 : vector<8x128xf32>
    %54 = math.tanh %53 : vector<8x128xf32>
    %55 = vector.broadcast %8 : vector<1x128xf32> to vector<8x128xf32>
    %56 = arith.mulf %54, %55 : vector<8x128xf32>
    %57 = vector.broadcast %11 : vector<1x128xf32> to vector<8x128xf32>
    %58 = arith.addf %56, %57 : vector<8x128xf32>
    %59 = vector.extract_strided_slice %58 {offsets = [0, 0], sizes = [8, 32], strides = [1, 1]} : vector<8x128xf32> to vector<8x32xf32>
    %60 = vector.extract_strided_slice %58 {offsets = [0, 32], sizes = [8, 32], strides = [1, 1]} : vector<8x128xf32> to vector<8x32xf32>
    %61 = vector.extract_strided_slice %58 {offsets = [0, 64], sizes = [8, 32], strides = [1, 1]} : vector<8x128xf32> to vector<8x32xf32>
    %62 = vector.extract_strided_slice %58 {offsets = [0, 96], sizes = [8, 32], strides = [1, 1]} : vector<8x128xf32> to vector<8x32xf32>
    %63 = arith.mulf %60, %49 : vector<8x32xf32>
    %64 = arith.mulf %59, %61 : vector<8x32xf32>
    %65 = arith.addf %63, %64 : vector<8x32xf32>
    %66 = math.tanh %65 : vector<8x32xf32>
    %67 = arith.mulf %62, %66 : vector<8x32xf32>
    %cst_31 = arith.constant dense<0.000000e+00> : vector<8x128xf32>
    %68 = tpu.matmul %67, %46, %cst_31 {dimension_numbers = #tpu.dot_dimension_numbers<[1], [0], [0], [1], [0, 0, 1, 1], [], []>} : vector<8x32xf32>, vector<32x128xf32>, vector<8x128xf32> -> vector<8x128xf32>
    %69 = vector.broadcast %47 : vector<1x128xf32> to vector<8x128xf32>
    %70 = arith.addf %68, %69 : vector<8x128xf32>
    %cst_32 = arith.constant dense<0.000000e+00> : vector<8x128xf32>
    %71 = tpu.matmul %67, %45, %cst_32 {dimension_numbers = #tpu.dot_dimension_numbers<[1], [0], [0], [1], [0, 0, 1, 1], [], []>} : vector<8x32xf32>, vector<32x128xf32>, vector<8x128xf32> -> vector<8x128xf32>
    %72 = arith.addf %38, %71 : vector<8x128xf32>
    %73 = vector.broadcast %8 : vector<1x128xf32> to vector<8x128xf32>
    %74 = arith.mulf %72, %73 : vector<8x128xf32>
    %75 = math.tanh %74 : vector<8x128xf32>
    %76 = vector.broadcast %8 : vector<1x128xf32> to vector<8x128xf32>
    %77 = arith.mulf %75, %76 : vector<8x128xf32>
    %78 = vector.broadcast %11 : vector<1x128xf32> to vector<8x128xf32>
    %79 = arith.addf %77, %78 : vector<8x128xf32>
    %80 = vector.extract_strided_slice %79 {offsets = [0, 0], sizes = [8, 32], strides = [1, 1]} : vector<8x128xf32> to vector<8x32xf32>
    %81 = vector.extract_strided_slice %79 {offsets = [0, 32], sizes = [8, 32], strides = [1, 1]} : vector<8x128xf32> to vector<8x32xf32>
    %82 = vector.extract_strided_slice %79 {offsets = [0, 64], sizes = [8, 32], strides = [1, 1]} : vector<8x128xf32> to vector<8x32xf32>
    %83 = vector.extract_strided_slice %79 {offsets = [0, 96], sizes = [8, 32], strides = [1, 1]} : vector<8x128xf32> to vector<8x32xf32>
    %84 = arith.mulf %81, %65 : vector<8x32xf32>
    %85 = arith.mulf %80, %82 : vector<8x32xf32>
    %86 = arith.addf %84, %85 : vector<8x32xf32>
    %87 = math.tanh %86 : vector<8x32xf32>
    %88 = arith.mulf %83, %87 : vector<8x32xf32>
    %cst_33 = arith.constant dense<0.000000e+00> : vector<8x128xf32>
    %89 = tpu.matmul %88, %46, %cst_33 {dimension_numbers = #tpu.dot_dimension_numbers<[1], [0], [0], [1], [0, 0, 1, 1], [], []>} : vector<8x32xf32>, vector<32x128xf32>, vector<8x128xf32> -> vector<8x128xf32>
    %90 = vector.broadcast %47 : vector<1x128xf32> to vector<8x128xf32>
    %91 = arith.addf %89, %90 : vector<8x128xf32>
    %cst_34 = arith.constant dense<0.000000e+00> : vector<8x128xf32>
    %92 = tpu.matmul %88, %45, %cst_34 {dimension_numbers = #tpu.dot_dimension_numbers<[1], [0], [0], [1], [0, 0, 1, 1], [], []>} : vector<8x32xf32>, vector<32x128xf32>, vector<8x128xf32> -> vector<8x128xf32>
    %93 = arith.addf %39, %92 : vector<8x128xf32>
    %94 = vector.broadcast %8 : vector<1x128xf32> to vector<8x128xf32>
    %95 = arith.mulf %93, %94 : vector<8x128xf32>
    %96 = math.tanh %95 : vector<8x128xf32>
    %97 = vector.broadcast %8 : vector<1x128xf32> to vector<8x128xf32>
    %98 = arith.mulf %96, %97 : vector<8x128xf32>
    %99 = vector.broadcast %11 : vector<1x128xf32> to vector<8x128xf32>
    %100 = arith.addf %98, %99 : vector<8x128xf32>
    %101 = vector.extract_strided_slice %100 {offsets = [0, 0], sizes = [8, 32], strides = [1, 1]} : vector<8x128xf32> to vector<8x32xf32>
    %102 = vector.extract_strided_slice %100 {offsets = [0, 32], sizes = [8, 32], strides = [1, 1]} : vector<8x128xf32> to vector<8x32xf32>
    %103 = vector.extract_strided_slice %100 {offsets = [0, 64], sizes = [8, 32], strides = [1, 1]} : vector<8x128xf32> to vector<8x32xf32>
    %104 = vector.extract_strided_slice %100 {offsets = [0, 96], sizes = [8, 32], strides = [1, 1]} : vector<8x128xf32> to vector<8x32xf32>
    %105 = arith.mulf %102, %86 : vector<8x32xf32>
    %106 = arith.mulf %101, %103 : vector<8x32xf32>
    %107 = arith.addf %105, %106 : vector<8x32xf32>
    %108 = math.tanh %107 : vector<8x32xf32>
    %109 = arith.mulf %104, %108 : vector<8x32xf32>
    %cst_35 = arith.constant dense<0.000000e+00> : vector<8x128xf32>
    %110 = tpu.matmul %109, %46, %cst_35 {dimension_numbers = #tpu.dot_dimension_numbers<[1], [0], [0], [1], [0, 0, 1, 1], [], []>} : vector<8x32xf32>, vector<32x128xf32>, vector<8x128xf32> -> vector<8x128xf32>
    %111 = vector.broadcast %47 : vector<1x128xf32> to vector<8x128xf32>
    %112 = arith.addf %110, %111 : vector<8x128xf32>
    %cst_36 = arith.constant dense<0.000000e+00> : vector<8x128xf32>
    %113 = tpu.matmul %109, %45, %cst_36 {dimension_numbers = #tpu.dot_dimension_numbers<[1], [0], [0], [1], [0, 0, 1, 1], [], []>} : vector<8x32xf32>, vector<32x128xf32>, vector<8x128xf32> -> vector<8x128xf32>
    %114 = arith.addf %40, %113 : vector<8x128xf32>
    %115 = vector.broadcast %8 : vector<1x128xf32> to vector<8x128xf32>
    %116 = arith.mulf %114, %115 : vector<8x128xf32>
    %117 = math.tanh %116 : vector<8x128xf32>
    %118 = vector.broadcast %8 : vector<1x128xf32> to vector<8x128xf32>
    %119 = arith.mulf %117, %118 : vector<8x128xf32>
    %120 = vector.broadcast %11 : vector<1x128xf32> to vector<8x128xf32>
    %121 = arith.addf %119, %120 : vector<8x128xf32>
    %122 = vector.extract_strided_slice %121 {offsets = [0, 0], sizes = [8, 32], strides = [1, 1]} : vector<8x128xf32> to vector<8x32xf32>
    %123 = vector.extract_strided_slice %121 {offsets = [0, 32], sizes = [8, 32], strides = [1, 1]} : vector<8x128xf32> to vector<8x32xf32>
    %124 = vector.extract_strided_slice %121 {offsets = [0, 64], sizes = [8, 32], strides = [1, 1]} : vector<8x128xf32> to vector<8x32xf32>
    %125 = vector.extract_strided_slice %121 {offsets = [0, 96], sizes = [8, 32], strides = [1, 1]} : vector<8x128xf32> to vector<8x32xf32>
    %126 = arith.mulf %123, %107 : vector<8x32xf32>
    %127 = arith.mulf %122, %124 : vector<8x32xf32>
    %128 = arith.addf %126, %127 : vector<8x32xf32>
    %129 = math.tanh %128 : vector<8x32xf32>
    %130 = arith.mulf %125, %129 : vector<8x32xf32>
    %cst_37 = arith.constant dense<0.000000e+00> : vector<8x128xf32>
    %131 = tpu.matmul %130, %46, %cst_37 {dimension_numbers = #tpu.dot_dimension_numbers<[1], [0], [0], [1], [0, 0, 1, 1], [], []>} : vector<8x32xf32>, vector<32x128xf32>, vector<8x128xf32> -> vector<8x128xf32>
    %132 = vector.broadcast %47 : vector<1x128xf32> to vector<8x128xf32>
    %133 = arith.addf %131, %132 : vector<8x128xf32>
    %cst_38 = arith.constant dense<0.000000e+00> : vector<8x128xf32>
    %134 = tpu.matmul %130, %45, %cst_38 {dimension_numbers = #tpu.dot_dimension_numbers<[1], [0], [0], [1], [0, 0, 1, 1], [], []>} : vector<8x32xf32>, vector<32x128xf32>, vector<8x128xf32> -> vector<8x128xf32>
    %135 = arith.addf %41, %134 : vector<8x128xf32>
    %136 = vector.broadcast %8 : vector<1x128xf32> to vector<8x128xf32>
    %137 = arith.mulf %135, %136 : vector<8x128xf32>
    %138 = math.tanh %137 : vector<8x128xf32>
    %139 = vector.broadcast %8 : vector<1x128xf32> to vector<8x128xf32>
    %140 = arith.mulf %138, %139 : vector<8x128xf32>
    %141 = vector.broadcast %11 : vector<1x128xf32> to vector<8x128xf32>
    %142 = arith.addf %140, %141 : vector<8x128xf32>
    %143 = vector.extract_strided_slice %142 {offsets = [0, 0], sizes = [8, 32], strides = [1, 1]} : vector<8x128xf32> to vector<8x32xf32>
    %144 = vector.extract_strided_slice %142 {offsets = [0, 32], sizes = [8, 32], strides = [1, 1]} : vector<8x128xf32> to vector<8x32xf32>
    %145 = vector.extract_strided_slice %142 {offsets = [0, 64], sizes = [8, 32], strides = [1, 1]} : vector<8x128xf32> to vector<8x32xf32>
    %146 = vector.extract_strided_slice %142 {offsets = [0, 96], sizes = [8, 32], strides = [1, 1]} : vector<8x128xf32> to vector<8x32xf32>
    %147 = arith.mulf %144, %128 : vector<8x32xf32>
    %148 = arith.mulf %143, %145 : vector<8x32xf32>
    %149 = arith.addf %147, %148 : vector<8x32xf32>
    %150 = math.tanh %149 : vector<8x32xf32>
    %151 = arith.mulf %146, %150 : vector<8x32xf32>
    %cst_39 = arith.constant dense<0.000000e+00> : vector<8x128xf32>
    %152 = tpu.matmul %151, %46, %cst_39 {dimension_numbers = #tpu.dot_dimension_numbers<[1], [0], [0], [1], [0, 0, 1, 1], [], []>} : vector<8x32xf32>, vector<32x128xf32>, vector<8x128xf32> -> vector<8x128xf32>
    %153 = vector.broadcast %47 : vector<1x128xf32> to vector<8x128xf32>
    %154 = arith.addf %152, %153 : vector<8x128xf32>
    %cst_40 = arith.constant dense<0.000000e+00> : vector<8x128xf32>
    %155 = tpu.matmul %151, %45, %cst_40 {dimension_numbers = #tpu.dot_dimension_numbers<[1], [0], [0], [1], [0, 0, 1, 1], [], []>} : vector<8x32xf32>, vector<32x128xf32>, vector<8x128xf32> -> vector<8x128xf32>
    %156 = arith.addf %42, %155 : vector<8x128xf32>
    %157 = vector.broadcast %8 : vector<1x128xf32> to vector<8x128xf32>
    %158 = arith.mulf %156, %157 : vector<8x128xf32>
    %159 = math.tanh %158 : vector<8x128xf32>
    %160 = vector.broadcast %8 : vector<1x128xf32> to vector<8x128xf32>
    %161 = arith.mulf %159, %160 : vector<8x128xf32>
    %162 = vector.broadcast %11 : vector<1x128xf32> to vector<8x128xf32>
    %163 = arith.addf %161, %162 : vector<8x128xf32>
    %164 = vector.extract_strided_slice %163 {offsets = [0, 0], sizes = [8, 32], strides = [1, 1]} : vector<8x128xf32> to vector<8x32xf32>
    %165 = vector.extract_strided_slice %163 {offsets = [0, 32], sizes = [8, 32], strides = [1, 1]} : vector<8x128xf32> to vector<8x32xf32>
    %166 = vector.extract_strided_slice %163 {offsets = [0, 64], sizes = [8, 32], strides = [1, 1]} : vector<8x128xf32> to vector<8x32xf32>
    %167 = vector.extract_strided_slice %163 {offsets = [0, 96], sizes = [8, 32], strides = [1, 1]} : vector<8x128xf32> to vector<8x32xf32>
    %168 = arith.mulf %165, %149 : vector<8x32xf32>
    %169 = arith.mulf %164, %166 : vector<8x32xf32>
    %170 = arith.addf %168, %169 : vector<8x32xf32>
    %171 = math.tanh %170 : vector<8x32xf32>
    %172 = arith.mulf %167, %171 : vector<8x32xf32>
    %cst_41 = arith.constant dense<0.000000e+00> : vector<8x128xf32>
    %173 = tpu.matmul %172, %46, %cst_41 {dimension_numbers = #tpu.dot_dimension_numbers<[1], [0], [0], [1], [0, 0, 1, 1], [], []>} : vector<8x32xf32>, vector<32x128xf32>, vector<8x128xf32> -> vector<8x128xf32>
    %174 = vector.broadcast %47 : vector<1x128xf32> to vector<8x128xf32>
    %175 = arith.addf %173, %174 : vector<8x128xf32>
    %cst_42 = arith.constant dense<0.000000e+00> : vector<8x128xf32>
    %176 = tpu.matmul %172, %45, %cst_42 {dimension_numbers = #tpu.dot_dimension_numbers<[1], [0], [0], [1], [0, 0, 1, 1], [], []>} : vector<8x32xf32>, vector<32x128xf32>, vector<8x128xf32> -> vector<8x128xf32>
    %177 = arith.addf %43, %176 : vector<8x128xf32>
    %178 = vector.broadcast %8 : vector<1x128xf32> to vector<8x128xf32>
    %179 = arith.mulf %177, %178 : vector<8x128xf32>
    %180 = math.tanh %179 : vector<8x128xf32>
    %181 = vector.broadcast %8 : vector<1x128xf32> to vector<8x128xf32>
    %182 = arith.mulf %180, %181 : vector<8x128xf32>
    %183 = vector.broadcast %11 : vector<1x128xf32> to vector<8x128xf32>
    %184 = arith.addf %182, %183 : vector<8x128xf32>
    %185 = vector.extract_strided_slice %184 {offsets = [0, 0], sizes = [8, 32], strides = [1, 1]} : vector<8x128xf32> to vector<8x32xf32>
    %186 = vector.extract_strided_slice %184 {offsets = [0, 32], sizes = [8, 32], strides = [1, 1]} : vector<8x128xf32> to vector<8x32xf32>
    %187 = vector.extract_strided_slice %184 {offsets = [0, 64], sizes = [8, 32], strides = [1, 1]} : vector<8x128xf32> to vector<8x32xf32>
    %188 = vector.extract_strided_slice %184 {offsets = [0, 96], sizes = [8, 32], strides = [1, 1]} : vector<8x128xf32> to vector<8x32xf32>
    %189 = arith.mulf %186, %170 : vector<8x32xf32>
    %190 = arith.mulf %185, %187 : vector<8x32xf32>
    %191 = arith.addf %189, %190 : vector<8x32xf32>
    %192 = math.tanh %191 : vector<8x32xf32>
    %193 = arith.mulf %188, %192 : vector<8x32xf32>
    %cst_43 = arith.constant dense<0.000000e+00> : vector<8x128xf32>
    %194 = tpu.matmul %193, %46, %cst_43 {dimension_numbers = #tpu.dot_dimension_numbers<[1], [0], [0], [1], [0, 0, 1, 1], [], []>} : vector<8x32xf32>, vector<32x128xf32>, vector<8x128xf32> -> vector<8x128xf32>
    %195 = vector.broadcast %47 : vector<1x128xf32> to vector<8x128xf32>
    %196 = arith.addf %194, %195 : vector<8x128xf32>
    %cst_44 = arith.constant dense<0.000000e+00> : vector<8x128xf32>
    %197 = tpu.matmul %193, %45, %cst_44 {dimension_numbers = #tpu.dot_dimension_numbers<[1], [0], [0], [1], [0, 0, 1, 1], [], []>} : vector<8x32xf32>, vector<32x128xf32>, vector<8x128xf32> -> vector<8x128xf32>
    %198 = arith.addf %44, %197 : vector<8x128xf32>
    %199 = vector.broadcast %8 : vector<1x128xf32> to vector<8x128xf32>
    %200 = arith.mulf %198, %199 : vector<8x128xf32>
    %201 = math.tanh %200 : vector<8x128xf32>
    %202 = vector.broadcast %8 : vector<1x128xf32> to vector<8x128xf32>
    %203 = arith.mulf %201, %202 : vector<8x128xf32>
    %204 = vector.broadcast %11 : vector<1x128xf32> to vector<8x128xf32>
    %205 = arith.addf %203, %204 : vector<8x128xf32>
    %206 = vector.extract_strided_slice %205 {offsets = [0, 0], sizes = [8, 32], strides = [1, 1]} : vector<8x128xf32> to vector<8x32xf32>
    %207 = vector.extract_strided_slice %205 {offsets = [0, 32], sizes = [8, 32], strides = [1, 1]} : vector<8x128xf32> to vector<8x32xf32>
    %208 = vector.extract_strided_slice %205 {offsets = [0, 64], sizes = [8, 32], strides = [1, 1]} : vector<8x128xf32> to vector<8x32xf32>
    %209 = vector.extract_strided_slice %205 {offsets = [0, 96], sizes = [8, 32], strides = [1, 1]} : vector<8x128xf32> to vector<8x32xf32>
    %210 = arith.mulf %207, %191 : vector<8x32xf32>
    %211 = arith.mulf %206, %208 : vector<8x32xf32>
    %212 = arith.addf %210, %211 : vector<8x32xf32>
    %213 = math.tanh %212 : vector<8x32xf32>
    %214 = arith.mulf %209, %213 : vector<8x32xf32>
    %cst_45 = arith.constant dense<0.000000e+00> : vector<8x128xf32>
    %215 = tpu.matmul %214, %46, %cst_45 {dimension_numbers = #tpu.dot_dimension_numbers<[1], [0], [0], [1], [0, 0, 1, 1], [], []>} : vector<8x32xf32>, vector<32x128xf32>, vector<8x128xf32> -> vector<8x128xf32>
    %216 = vector.broadcast %47 : vector<1x128xf32> to vector<8x128xf32>
    %217 = arith.addf %215, %216 : vector<8x128xf32>
    %c0_46 = arith.constant 0 : index
    %c0_47 = arith.constant 0 : index
    %218 = vector.load %arg7[%c0_46, %c0_47] : memref<32x128xf32, #tpu.memory_space<vmem>>, vector<32x128xf32>
    %cst_48 = arith.constant 0.000000e+00 : f32
    %219 = vector.broadcast %cst_48 : f32 to vector<8x32xf32>
    %cst_49 = arith.constant 0.000000e+00 : f32
    %220 = vector.broadcast %cst_49 : f32 to vector<8x32xf32>
    %cst_50 = arith.constant dense<0.000000e+00> : vector<8x128xf32>
    %221 = tpu.matmul %219, %218, %cst_50 {dimension_numbers = #tpu.dot_dimension_numbers<[1], [0], [0], [1], [0, 0, 1, 1], [], []>} : vector<8x32xf32>, vector<32x128xf32>, vector<8x128xf32> -> vector<8x128xf32>
    %222 = arith.addf %70, %221 : vector<8x128xf32>
    %223 = vector.broadcast %8 : vector<1x128xf32> to vector<8x128xf32>
    %224 = arith.mulf %222, %223 : vector<8x128xf32>
    %225 = math.tanh %224 : vector<8x128xf32>
    %226 = vector.broadcast %8 : vector<1x128xf32> to vector<8x128xf32>
    %227 = arith.mulf %225, %226 : vector<8x128xf32>
    %228 = vector.broadcast %11 : vector<1x128xf32> to vector<8x128xf32>
    %229 = arith.addf %227, %228 : vector<8x128xf32>
    %230 = vector.extract_strided_slice %229 {offsets = [0, 0], sizes = [8, 32], strides = [1, 1]} : vector<8x128xf32> to vector<8x32xf32>
    %231 = vector.extract_strided_slice %229 {offsets = [0, 32], sizes = [8, 32], strides = [1, 1]} : vector<8x128xf32> to vector<8x32xf32>
    %232 = vector.extract_strided_slice %229 {offsets = [0, 64], sizes = [8, 32], strides = [1, 1]} : vector<8x128xf32> to vector<8x32xf32>
    %233 = vector.extract_strided_slice %229 {offsets = [0, 96], sizes = [8, 32], strides = [1, 1]} : vector<8x128xf32> to vector<8x32xf32>
    %234 = arith.mulf %231, %220 : vector<8x32xf32>
    %235 = arith.mulf %230, %232 : vector<8x32xf32>
    %236 = arith.addf %234, %235 : vector<8x32xf32>
    %237 = math.tanh %236 : vector<8x32xf32>
    %238 = arith.mulf %233, %237 : vector<8x32xf32>
    %cst_51 = arith.constant dense<0.000000e+00> : vector<8x128xf32>
    %239 = tpu.matmul %238, %218, %cst_51 {dimension_numbers = #tpu.dot_dimension_numbers<[1], [0], [0], [1], [0, 0, 1, 1], [], []>} : vector<8x32xf32>, vector<32x128xf32>, vector<8x128xf32> -> vector<8x128xf32>
    %240 = arith.addf %91, %239 : vector<8x128xf32>
    %241 = vector.broadcast %8 : vector<1x128xf32> to vector<8x128xf32>
    %242 = arith.mulf %240, %241 : vector<8x128xf32>
    %243 = math.tanh %242 : vector<8x128xf32>
    %244 = vector.broadcast %8 : vector<1x128xf32> to vector<8x128xf32>
    %245 = arith.mulf %243, %244 : vector<8x128xf32>
    %246 = vector.broadcast %11 : vector<1x128xf32> to vector<8x128xf32>
    %247 = arith.addf %245, %246 : vector<8x128xf32>
    %248 = vector.extract_strided_slice %247 {offsets = [0, 0], sizes = [8, 32], strides = [1, 1]} : vector<8x128xf32> to vector<8x32xf32>
    %249 = vector.extract_strided_slice %247 {offsets = [0, 32], sizes = [8, 32], strides = [1, 1]} : vector<8x128xf32> to vector<8x32xf32>
    %250 = vector.extract_strided_slice %247 {offsets = [0, 64], sizes = [8, 32], strides = [1, 1]} : vector<8x128xf32> to vector<8x32xf32>
    %251 = vector.extract_strided_slice %247 {offsets = [0, 96], sizes = [8, 32], strides = [1, 1]} : vector<8x128xf32> to vector<8x32xf32>
    %252 = arith.mulf %249, %236 : vector<8x32xf32>
    %253 = arith.mulf %248, %250 : vector<8x32xf32>
    %254 = arith.addf %252, %253 : vector<8x32xf32>
    %255 = math.tanh %254 : vector<8x32xf32>
    %256 = arith.mulf %251, %255 : vector<8x32xf32>
    %cst_52 = arith.constant dense<0.000000e+00> : vector<8x128xf32>
    %257 = tpu.matmul %256, %218, %cst_52 {dimension_numbers = #tpu.dot_dimension_numbers<[1], [0], [0], [1], [0, 0, 1, 1], [], []>} : vector<8x32xf32>, vector<32x128xf32>, vector<8x128xf32> -> vector<8x128xf32>
    %258 = arith.addf %112, %257 : vector<8x128xf32>
    %259 = vector.broadcast %8 : vector<1x128xf32> to vector<8x128xf32>
    %260 = arith.mulf %258, %259 : vector<8x128xf32>
    %261 = math.tanh %260 : vector<8x128xf32>
    %262 = vector.broadcast %8 : vector<1x128xf32> to vector<8x128xf32>
    %263 = arith.mulf %261, %262 : vector<8x128xf32>
    %264 = vector.broadcast %11 : vector<1x128xf32> to vector<8x128xf32>
    %265 = arith.addf %263, %264 : vector<8x128xf32>
    %266 = vector.extract_strided_slice %265 {offsets = [0, 0], sizes = [8, 32], strides = [1, 1]} : vector<8x128xf32> to vector<8x32xf32>
    %267 = vector.extract_strided_slice %265 {offsets = [0, 32], sizes = [8, 32], strides = [1, 1]} : vector<8x128xf32> to vector<8x32xf32>
    %268 = vector.extract_strided_slice %265 {offsets = [0, 64], sizes = [8, 32], strides = [1, 1]} : vector<8x128xf32> to vector<8x32xf32>
    %269 = vector.extract_strided_slice %265 {offsets = [0, 96], sizes = [8, 32], strides = [1, 1]} : vector<8x128xf32> to vector<8x32xf32>
    %270 = arith.mulf %267, %254 : vector<8x32xf32>
    %271 = arith.mulf %266, %268 : vector<8x32xf32>
    %272 = arith.addf %270, %271 : vector<8x32xf32>
    %273 = math.tanh %272 : vector<8x32xf32>
    %274 = arith.mulf %269, %273 : vector<8x32xf32>
    %cst_53 = arith.constant dense<0.000000e+00> : vector<8x128xf32>
    %275 = tpu.matmul %274, %218, %cst_53 {dimension_numbers = #tpu.dot_dimension_numbers<[1], [0], [0], [1], [0, 0, 1, 1], [], []>} : vector<8x32xf32>, vector<32x128xf32>, vector<8x128xf32> -> vector<8x128xf32>
    %276 = arith.addf %133, %275 : vector<8x128xf32>
    %277 = vector.broadcast %8 : vector<1x128xf32> to vector<8x128xf32>
    %278 = arith.mulf %276, %277 : vector<8x128xf32>
    %279 = math.tanh %278 : vector<8x128xf32>
    %280 = vector.broadcast %8 : vector<1x128xf32> to vector<8x128xf32>
    %281 = arith.mulf %279, %280 : vector<8x128xf32>
    %282 = vector.broadcast %11 : vector<1x128xf32> to vector<8x128xf32>
    %283 = arith.addf %281, %282 : vector<8x128xf32>
    %284 = vector.extract_strided_slice %283 {offsets = [0, 0], sizes = [8, 32], strides = [1, 1]} : vector<8x128xf32> to vector<8x32xf32>
    %285 = vector.extract_strided_slice %283 {offsets = [0, 32], sizes = [8, 32], strides = [1, 1]} : vector<8x128xf32> to vector<8x32xf32>
    %286 = vector.extract_strided_slice %283 {offsets = [0, 64], sizes = [8, 32], strides = [1, 1]} : vector<8x128xf32> to vector<8x32xf32>
    %287 = vector.extract_strided_slice %283 {offsets = [0, 96], sizes = [8, 32], strides = [1, 1]} : vector<8x128xf32> to vector<8x32xf32>
    %288 = arith.mulf %285, %272 : vector<8x32xf32>
    %289 = arith.mulf %284, %286 : vector<8x32xf32>
    %290 = arith.addf %288, %289 : vector<8x32xf32>
    %291 = math.tanh %290 : vector<8x32xf32>
    %292 = arith.mulf %287, %291 : vector<8x32xf32>
    %cst_54 = arith.constant dense<0.000000e+00> : vector<8x128xf32>
    %293 = tpu.matmul %292, %218, %cst_54 {dimension_numbers = #tpu.dot_dimension_numbers<[1], [0], [0], [1], [0, 0, 1, 1], [], []>} : vector<8x32xf32>, vector<32x128xf32>, vector<8x128xf32> -> vector<8x128xf32>
    %294 = arith.addf %154, %293 : vector<8x128xf32>
    %295 = vector.broadcast %8 : vector<1x128xf32> to vector<8x128xf32>
    %296 = arith.mulf %294, %295 : vector<8x128xf32>
    %297 = math.tanh %296 : vector<8x128xf32>
    %298 = vector.broadcast %8 : vector<1x128xf32> to vector<8x128xf32>
    %299 = arith.mulf %297, %298 : vector<8x128xf32>
    %300 = vector.broadcast %11 : vector<1x128xf32> to vector<8x128xf32>
    %301 = arith.addf %299, %300 : vector<8x128xf32>
    %302 = vector.extract_strided_slice %301 {offsets = [0, 0], sizes = [8, 32], strides = [1, 1]} : vector<8x128xf32> to vector<8x32xf32>
    %303 = vector.extract_strided_slice %301 {offsets = [0, 32], sizes = [8, 32], strides = [1, 1]} : vector<8x128xf32> to vector<8x32xf32>
    %304 = vector.extract_strided_slice %301 {offsets = [0, 64], sizes = [8, 32], strides = [1, 1]} : vector<8x128xf32> to vector<8x32xf32>
    %305 = vector.extract_strided_slice %301 {offsets = [0, 96], sizes = [8, 32], strides = [1, 1]} : vector<8x128xf32> to vector<8x32xf32>
    %306 = arith.mulf %303, %290 : vector<8x32xf32>
    %307 = arith.mulf %302, %304 : vector<8x32xf32>
    %308 = arith.addf %306, %307 : vector<8x32xf32>
    %309 = math.tanh %308 : vector<8x32xf32>
    %310 = arith.mulf %305, %309 : vector<8x32xf32>
    %cst_55 = arith.constant dense<0.000000e+00> : vector<8x128xf32>
    %311 = tpu.matmul %310, %218, %cst_55 {dimension_numbers = #tpu.dot_dimension_numbers<[1], [0], [0], [1], [0, 0, 1, 1], [], []>} : vector<8x32xf32>, vector<32x128xf32>, vector<8x128xf32> -> vector<8x128xf32>
    %312 = arith.addf %175, %311 : vector<8x128xf32>
    %313 = vector.broadcast %8 : vector<1x128xf32> to vector<8x128xf32>
    %314 = arith.mulf %312, %313 : vector<8x128xf32>
    %315 = math.tanh %314 : vector<8x128xf32>
    %316 = vector.broadcast %8 : vector<1x128xf32> to vector<8x128xf32>
    %317 = arith.mulf %315, %316 : vector<8x128xf32>
    %318 = vector.broadcast %11 : vector<1x128xf32> to vector<8x128xf32>
    %319 = arith.addf %317, %318 : vector<8x128xf32>
    %320 = vector.extract_strided_slice %319 {offsets = [0, 0], sizes = [8, 32], strides = [1, 1]} : vector<8x128xf32> to vector<8x32xf32>
    %321 = vector.extract_strided_slice %319 {offsets = [0, 32], sizes = [8, 32], strides = [1, 1]} : vector<8x128xf32> to vector<8x32xf32>
    %322 = vector.extract_strided_slice %319 {offsets = [0, 64], sizes = [8, 32], strides = [1, 1]} : vector<8x128xf32> to vector<8x32xf32>
    %323 = vector.extract_strided_slice %319 {offsets = [0, 96], sizes = [8, 32], strides = [1, 1]} : vector<8x128xf32> to vector<8x32xf32>
    %324 = arith.mulf %321, %308 : vector<8x32xf32>
    %325 = arith.mulf %320, %322 : vector<8x32xf32>
    %326 = arith.addf %324, %325 : vector<8x32xf32>
    %327 = math.tanh %326 : vector<8x32xf32>
    %328 = arith.mulf %323, %327 : vector<8x32xf32>
    %cst_56 = arith.constant dense<0.000000e+00> : vector<8x128xf32>
    %329 = tpu.matmul %328, %218, %cst_56 {dimension_numbers = #tpu.dot_dimension_numbers<[1], [0], [0], [1], [0, 0, 1, 1], [], []>} : vector<8x32xf32>, vector<32x128xf32>, vector<8x128xf32> -> vector<8x128xf32>
    %330 = arith.addf %196, %329 : vector<8x128xf32>
    %331 = vector.broadcast %8 : vector<1x128xf32> to vector<8x128xf32>
    %332 = arith.mulf %330, %331 : vector<8x128xf32>
    %333 = math.tanh %332 : vector<8x128xf32>
    %334 = vector.broadcast %8 : vector<1x128xf32> to vector<8x128xf32>
    %335 = arith.mulf %333, %334 : vector<8x128xf32>
    %336 = vector.broadcast %11 : vector<1x128xf32> to vector<8x128xf32>
    %337 = arith.addf %335, %336 : vector<8x128xf32>
    %338 = vector.extract_strided_slice %337 {offsets = [0, 0], sizes = [8, 32], strides = [1, 1]} : vector<8x128xf32> to vector<8x32xf32>
    %339 = vector.extract_strided_slice %337 {offsets = [0, 32], sizes = [8, 32], strides = [1, 1]} : vector<8x128xf32> to vector<8x32xf32>
    %340 = vector.extract_strided_slice %337 {offsets = [0, 64], sizes = [8, 32], strides = [1, 1]} : vector<8x128xf32> to vector<8x32xf32>
    %341 = vector.extract_strided_slice %337 {offsets = [0, 96], sizes = [8, 32], strides = [1, 1]} : vector<8x128xf32> to vector<8x32xf32>
    %342 = arith.mulf %339, %326 : vector<8x32xf32>
    %343 = arith.mulf %338, %340 : vector<8x32xf32>
    %344 = arith.addf %342, %343 : vector<8x32xf32>
    %345 = math.tanh %344 : vector<8x32xf32>
    %346 = arith.mulf %341, %345 : vector<8x32xf32>
    %cst_57 = arith.constant dense<0.000000e+00> : vector<8x128xf32>
    %347 = tpu.matmul %346, %218, %cst_57 {dimension_numbers = #tpu.dot_dimension_numbers<[1], [0], [0], [1], [0, 0, 1, 1], [], []>} : vector<8x32xf32>, vector<32x128xf32>, vector<8x128xf32> -> vector<8x128xf32>
    %348 = arith.addf %217, %347 : vector<8x128xf32>
    %349 = vector.broadcast %8 : vector<1x128xf32> to vector<8x128xf32>
    %350 = arith.mulf %348, %349 : vector<8x128xf32>
    %351 = math.tanh %350 : vector<8x128xf32>
    %352 = vector.broadcast %8 : vector<1x128xf32> to vector<8x128xf32>
    %353 = arith.mulf %351, %352 : vector<8x128xf32>
    %354 = vector.broadcast %11 : vector<1x128xf32> to vector<8x128xf32>
    %355 = arith.addf %353, %354 : vector<8x128xf32>
    %356 = vector.extract_strided_slice %355 {offsets = [0, 0], sizes = [8, 32], strides = [1, 1]} : vector<8x128xf32> to vector<8x32xf32>
    %357 = vector.extract_strided_slice %355 {offsets = [0, 32], sizes = [8, 32], strides = [1, 1]} : vector<8x128xf32> to vector<8x32xf32>
    %358 = vector.extract_strided_slice %355 {offsets = [0, 64], sizes = [8, 32], strides = [1, 1]} : vector<8x128xf32> to vector<8x32xf32>
    %359 = vector.extract_strided_slice %355 {offsets = [0, 96], sizes = [8, 32], strides = [1, 1]} : vector<8x128xf32> to vector<8x32xf32>
    %360 = arith.mulf %357, %344 : vector<8x32xf32>
    %361 = arith.mulf %356, %358 : vector<8x32xf32>
    %362 = arith.addf %360, %361 : vector<8x32xf32>
    %363 = math.tanh %362 : vector<8x32xf32>
    %364 = arith.mulf %359, %363 : vector<8x32xf32>
    %c0_58 = arith.constant 0 : index
    %c0_59 = arith.constant 0 : index
    %365 = vector.load %arg9[%c0_58, %c0_59] : memref<32x128xf32, #tpu.memory_space<vmem>>, vector<32x128xf32>
    %cst_60 = arith.constant dense<0.000000e+00> : vector<8x128xf32>
    %366 = tpu.matmul %364, %365, %cst_60 {dimension_numbers = #tpu.dot_dimension_numbers<[1], [0], [0], [1], [0, 0, 1, 1], [], []>} : vector<8x32xf32>, vector<32x128xf32>, vector<8x128xf32> -> vector<8x128xf32>
    %c0_61 = arith.constant 0 : index
    %c0_62 = arith.constant 0 : index
    %367 = vector.load %arg10[%c0_61, %c0_62] : memref<1x128xf32, #tpu.memory_space<vmem>>, vector<1x128xf32>
    %368 = vector.broadcast %367 : vector<1x128xf32> to vector<8x128xf32>
    %369 = arith.addf %366, %368 : vector<8x128xf32>
    %c0_63 = arith.constant 0 : index
    %c0_64 = arith.constant 0 : index
    %370 = vector.load %arg11[%c0_63, %c0_64] : memref<8x128xf32, #tpu.memory_space<vmem>>, vector<8x128xf32>
    tpu.vector_store %arg11[%c0_63, %c0_64], %369 {strides = array<i32>} : memref<8x128xf32, #tpu.memory_space<vmem>>, vector<8x128xf32>,
    return
  }
}

</mosaic_0001>

<llo_original>
// kernel: cnn_lstm_forward.1
$region0: #{cnn_lstm_forward.1}
  #allocation0 [shape = 'u32[]', space=smem, size = 0x4, offset = 0x4, fixed_abs, tag = 'smem constant byte address 0x4 - core index']
  #allocation1 [shape = 'u32[144,128]{1,0:T(1,128)}', space=vmem, size = 0x12000, scoped, tag = 'internal scratch']
  %s0 = inlined_call_operand.vmem [shape: f32[80,4], index: 0, kind: input, shape index: {}]
  %s1 = inlined_call_operand.hbm [shape: f32[3,4,64], index: 1, kind: input, shape index: {}]
  %s2 = inlined_call_operand.vmem [shape: f32[1,64], index: 2, kind: input, shape index: {}]
  %s3 = inlined_call_operand.vmem [shape: f32[64,128], index: 3, kind: input, shape index: {}]
  %s4 = inlined_call_operand.vmem [shape: f32[32,128], index: 4, kind: input, shape index: {}]
  %s5 = inlined_call_operand.vmem [shape: f32[1,128], index: 5, kind: input, shape index: {}]
  %s6 = inlined_call_operand.vmem [shape: f32[32,128], index: 6, kind: input, shape index: {}]
  %s7 = inlined_call_operand.vmem [shape: f32[32,128], index: 7, kind: input, shape index: {}]
  %s8 = inlined_call_operand.vmem [shape: f32[1,128], index: 8, kind: input, shape index: {}]
  %s9 = inlined_call_operand.hbm [shape: f32[32,128], index: 9, kind: input, shape index: {}]
  %s10 = inlined_call_operand.vmem [shape: f32[1,128], index: 10, kind: input, shape index: {}]
  %s11 = inlined_call_operand.vmem [shape: f32[8,128], index: 11, kind: output, shape index: {}]
  %s12 = sld [smem:[#allocation0]]
  $region62: #{cnn_lstm_forward.1} parent=0
    _
  %s14 = ssub.s32 1, %s12
  %s15 = scalar_select 0, %s14, %s12
  $region1: #{cnn_lstm_forward.1} parent=0
    #allocation2 [shape = 'u8[6144]{0}', space=vmem, size = 0x1800, scoped, tag = 'input window, operand 1, single buffered']
    #allocation3 [shape = 's32[1]{0}', space=sflag, size = 0x4, scoped, tag = 'scoped memory for cnn_lstm_forward.1']
    #allocation4 [shape = 'u8[16384]{0}', space=vmem, size = 0x4000, scoped, tag = 'input window, operand 9, single buffered']
    #allocation5 [shape = 's32[1]{0}', space=sflag, size = 0x4, scoped, tag = 'scoped memory for cnn_lstm_forward.1']
    %16 = vsyncpa [#allocation3], 0
    %17 = vsyncpa [#allocation5], 0
    // Predicated region
    $region2: #{cnn_lstm_forward.1} parent=1 // pred_check
      _
    $region3: #{cnn_lstm_forward.1} parent=1 // pred_check_branch
      %19 = sbr.rel (0) target = $region5
    $region4: #{cnn_lstm_forward.1} parent=1 // pred_region
      _
    $region5: #{cnn_lstm_forward.1} parent=1 // pred_fallthru
      _
    // Predicated region
    $region6: #{cnn_lstm_forward.1} parent=1 // pred_check
      _
    $region7: #{cnn_lstm_forward.1} parent=1 // pred_check_branch
      %21 = sbr.rel (0) target = $region9
    $region8: #{cnn_lstm_forward.1} parent=1 // pred_region
      %s23 = ssub.s32 192, 192
      %24 = vsyncadd [#allocation3], %s23
      %s25 = sshll.u32 [#allocation2], 4
      %s26 = int_to_ptr.vmem [resolvable:$true] %s25
      %31 = dma.hbm_to_vmem [thread:$0]  %s1, 192, %s26, [#allocation3], 64, 64, 4
    $region9: #{cnn_lstm_forward.1} parent=1 // pred_fallthru
      _
    // Predicated region
    $region10: #{cnn_lstm_forward.1} parent=1 // pred_check
      _
    $region11: #{cnn_lstm_forward.1} parent=1 // pred_check_branch
      %33 = sbr.rel (0) target = $region13
    $region12: #{cnn_lstm_forward.1} parent=1 // pred_region
      _
    $region13: #{cnn_lstm_forward.1} parent=1 // pred_fallthru
      _
    // Predicated region
    $region14: #{cnn_lstm_forward.1} parent=1 // pred_check
      _
    $region15: #{cnn_lstm_forward.1} parent=1 // pred_check_branch
      %35 = sbr.rel (0) target = $region17
    $region16: #{cnn_lstm_forward.1} parent=1 // pred_region
      _
    $region17: #{cnn_lstm_forward.1} parent=1 // pred_fallthru
      _
    // Predicated region
    $region18: #{cnn_lstm_forward.1} parent=1 // pred_check
      _
    $region19: #{cnn_lstm_forward.1} parent=1 // pred_check_branch
      %37 = sbr.rel (0) target = $region21
    $region20: #{cnn_lstm_forward.1} parent=1 // pred_region
      _
    $region21: #{cnn_lstm_forward.1} parent=1 // pred_fallthru
      _
    // Predicated region
    $region22: #{cnn_lstm_forward.1} parent=1 // pred_check
      _
    $region23: #{cnn_lstm_forward.1} parent=1 // pred_check_branch
      %39 = sbr.rel (0) target = $region25
    $region24: #{cnn_lstm_forward.1} parent=1 // pred_region
      _
    $region25: #{cnn_lstm_forward.1} parent=1 // pred_fallthru
      _
    // Predicated region
    $region26: #{cnn_lstm_forward.1} parent=1 // pred_check
      _
    $region27: #{cnn_lstm_forward.1} parent=1 // pred_check_branch
      %41 = sbr.rel (0) target = $region29
    $region28: #{cnn_lstm_forward.1} parent=1 // pred_region
      _
    $region29: #{cnn_lstm_forward.1} parent=1 // pred_fallthru
      _
    // Predicated region
    $region30: #{cnn_lstm_forward.1} parent=1 // pred_check
      _
    $region31: #{cnn_lstm_forward.1} parent=1 // pred_check_branch
      %43 = sbr.rel (0) target = $region33
    $region32: #{cnn_lstm_forward.1} parent=1 // pred_region
      _
    $region33: #{cnn_lstm_forward.1} parent=1 // pred_fallthru
      _
    // Predicated region
    $region34: #{cnn_lstm_forward.1} parent=1 // pred_check
      _
    $region35: #{cnn_lstm_forward.1} parent=1 // pred_check_branch
      %45 = sbr.rel (0) target = $region37
    $region36: #{cnn_lstm_forward.1} parent=1 // pred_region
      _
    $region37: #{cnn_lstm_forward.1} parent=1 // pred_fallthru
      _
    // Predicated region
    $region38: #{cnn_lstm_forward.1} parent=1 // pred_check
      _
    $region39: #{cnn_lstm_forward.1} parent=1 // pred_check_branch
      %47 = sbr.rel (0) target = $region41
    $region40: #{cnn_lstm_forward.1} parent=1 // pred_region
      %s49 = ssub.s32 512, 512
      %50 = vsyncadd [#allocation5], %s49
      %s51 = sshll.u32 [#allocation4], 4
      %s52 = int_to_ptr.vmem [resolvable:$true] %s51
      %57 = dma.hbm_to_vmem [thread:$0]  %s9, 512, %s52, [#allocation5], 128, 128, 8
    $region41: #{cnn_lstm_forward.1} parent=1 // pred_fallthru
      _
    // Predicated region
    $region42: #{cnn_lstm_forward.1} parent=1 // pred_check
      _
    $region43: #{cnn_lstm_forward.1} parent=1 // pred_check_branch
      %59 = sbr.rel (0) target = $region45
    $region44: #{cnn_lstm_forward.1} parent=1 // pred_region
      _
    $region45: #{cnn_lstm_forward.1} parent=1 // pred_fallthru
      _
    // Predicated region
    $region46: #{cnn_lstm_forward.1} parent=1 // pred_check
      _
    $region47: #{cnn_lstm_forward.1} parent=1 // pred_check_branch
      %61 = sbr.rel (0) target = $region49
    $region48: #{cnn_lstm_forward.1} parent=1 // pred_region
      %62 = dma.done [#allocation3], 192
    $region49: #{cnn_lstm_forward.1} parent=1 // pred_fallthru
      _
    // Predicated region
    $region50: #{cnn_lstm_forward.1} parent=1 // pred_check
      _
    $region51: #{cnn_lstm_forward.1} parent=1 // pred_check_branch
      %64 = sbr.rel (0) target = $region53
    $region52: #{cnn_lstm_forward.1} parent=1 // pred_region
      %65 = dma.done [#allocation5], 512
    $region53: #{cnn_lstm_forward.1} parent=1 // pred_fallthru
      _
    %v66 = vlaneseq
    %v67 = vand.u32 %v66, 127
    %vm68 = vcmp.ge.s32.totalorder %v67, 64
    %vm69 = vcmp.lt.s32.totalorder %v67, 96
    %vm70 = vmand %vm68, %vm69
    %v71 = vsel %vm70, 1.0, 0.5
    %v72 = vsel %vm70, 0.0, 0.5
    %v73 = vld [vmem:[%s0] sm:$0xff]
    %v74 = vld [vmem:[%s0 + $0x8] sm:$0xff]
    %v75 = vld [vmem:[%s0 + $0x10] sm:$0xff]
    %v76 = vld [vmem:[%s0 + $0x18] sm:$0xff]
    %v77 = vld [vmem:[%s0 + $0x20] sm:$0xff]
    %v78 = vld [vmem:[%s0 + $0x28] sm:$0xff]
    %v79 = vld [vmem:[%s0 + $0x30] sm:$0xff]
    %v80 = vld [vmem:[%s0 + $0x38] sm:$0xff]
    %v81 = vld [vmem:[%s0 + $0x40] sm:$0xff]
    %v82 = vld [vmem:[%s0 + $0x48] sm:$0xff]
    %v83 = vld [vmem:[#allocation2] sm:$0xf]
    %s84 = scalar_lea.vmem [#allocation2], 4
    %v85 = vld [vmem:[%s84] sm:$0xf]
    %vm86 = vcmask 31744
    %v88 = vsel %vm86, %v74, 0
    %v91 = vsel %vm86, %v75, 0
    %v94 = vsel %vm86, %v76, 0
    %v97 = vsel %vm86, %v77, 0
    %v100 = vsel %vm86, %v78, 0
    %v103 = vsel %vm86, %v79, 0
    %v106 = vsel %vm86, %v80, 0
    %v109 = vsel %vm86, %v81, 0
    %vm111 = vcmask 1043456
    %v113 = vsel %vm111, %v85, 0
    %115 = vmatprep.subr.mxu0 0.0
    %116 = vmatpush1.msra.mxu0 %v113
    %117 = vmatprep.subr.mxu0 0.0
    %118 = vmatpush1.msra.mxu0 0.0
    %119 = vmatprep.subr.mxu0 0.0
    %120 = vmatpush1.msra.mxu0 0.0
    %121 = vmatprep.subr.mxu0 0.0
    %122 = vmatpush1.msra.mxu0 0.0
    %123 = vmatprep.subr.mxu0 0.0
    %124 = vmatpush1.msra.mxu0 0.0
    %125 = vmatprep.subr.mxu0 0.0
    %126 = vmatpush1.msra.mxu0 0.0
    %127 = vmatprep.subr.mxu0 0.0
    %128 = vmatpush1.msra.mxu0 0.0
    %129 = vmatprep.subr.mxu0 0.0
    %130 = vmatpush1.msra.mxu0 0.0
    %131 = vmatprep.subr.mxu0 0.0
    %132 = vmatpush1.msra.mxu0 0.0
    %133 = vmatprep.subr.mxu0 0.0
    %134 = vmatpush1.msra.mxu0 0.0
    %135 = vmatprep.subr.mxu0 0.0
    %136 = vmatpush1.msra.mxu0 0.0
    %137 = vmatprep.subr.mxu0 0.0
    %138 = vmatpush1.msra.mxu0 0.0
    %139 = vmatprep.subr.mxu0 0.0
    %140 = vmatpush1.msra.mxu0 0.0
    %141 = vmatprep.subr.mxu0 0.0
    %142 = vmatpush1.msra.mxu0 0.0
    %143 = vmatprep.subr.mxu0 0.0
    %144 = vmatpush1.msra.mxu0 0.0
    %145 = vmatprep.subr.mxu0 0.0
    %146 = vmatpush1.msra.mxu0 0.0
    %147 = vmatprep.subr.mxu0 0.0
    %148 = vmatpush1.msra.mxu0 0.0
    %149 = vmatprep.subr.mxu0 0.0
    %150 = vmatpush1.msra.mxu0 0.0
    %151 = vmatprep.subr.mxu0 0.0
    %152 = vmatpush1.msra.mxu0 0.0
    %153 = vmatprep.subr.mxu0 0.0
    %154 = vmatpush1.msra.mxu0 0.0
    %155 = vmatprep.subr.mxu0 0.0
    %156 = vmatpush1.msra.mxu0 0.0
    %157 = vmatprep.subr.mxu0 0.0
    %158 = vmatpush1.msra.mxu0 0.0
    %159 = vmatprep.subr.mxu0 0.0
    %160 = vmatpush1.msra.mxu0 0.0
    %161 = vmatprep.subr.mxu0 0.0
    %162 = vmatpush1.msra.mxu0 0.0
    %163 = vmatprep.subr.mxu0 0.0
    %164 = vmatpush1.msra.mxu0 0.0
    %165 = vmatprep.subr.mxu0 0.0
    %166 = vmatpush1.msra.mxu0 0.0
    %167 = vmatprep.subr.mxu0 0.0
    %168 = vmatpush1.msra.mxu0 0.0
    %169 = vmatprep.subr.mxu0 0.0
    %170 = vmatpush1.msra.mxu0 0.0
    %171 = vmatprep.subr.mxu0 0.0
    %172 = vmatpush1.msra.mxu0 0.0
    %173 = vmatprep.subr.mxu0 0.0
    %174 = vmatpush1.msra.mxu0 0.0
    %175 = vmatprep.subr.mxu0 0.0
    %176 = vmatpush1.msra.mxu0 0.0
    %177 = vmatprep.subr.mxu0 0.0
    %178 = vmatpush1.msra.mxu0 0.0
    %179 = vmatprep.mubr.f32.mxu0 0.0
    %180 = vmatmul.mubr.f32.gmra.mrb[0].mxu0 %v88
    %v181 = vpop.f32.mrb[0].mxu0
    %v182 = vadd.f32 0.0, %v181
    %v183 = vpop.f32.mrb[0].mxu0
    %184 = vmatprep.mubr.f32.mxu0 0.0
    %185 = vmatmul.mubr.f32.gmra.mrb[0].mxu0 %v91
    %v186 = vpop.f32.mrb[0].mxu0
    %v187 = vadd.f32 0.0, %v186
    %v188 = vpop.f32.mrb[0].mxu0
    %189 = vmatprep.mubr.f32.mxu0 0.0
    %190 = vmatmul.mubr.f32.gmra.mrb[0].mxu0 %v94
    %v191 = vpop.f32.mrb[0].mxu0
    %v192 = vadd.f32 0.0, %v191
    %v193 = vpop.f32.mrb[0].mxu0
    %194 = vmatprep.mubr.f32.mxu0 0.0
    %195 = vmatmul.mubr.f32.gmra.mrb[0].mxu0 %v97
    %v196 = vpop.f32.mrb[0].mxu0
    %v197 = vadd.f32 0.0, %v196
    %v198 = vpop.f32.mrb[0].mxu0
    %199 = vmatprep.mubr.f32.mxu0 0.0
    %200 = vmatmul.mubr.f32.gmra.mrb[0].mxu0 %v100
    %v201 = vpop.f32.mrb[0].mxu0
    %v202 = vadd.f32 0.0, %v201
    %v203 = vpop.f32.mrb[0].mxu0
    %204 = vmatprep.mubr.f32.mxu0 0.0
    %205 = vmatmul.mubr.f32.gmra.mrb[0].mxu0 %v103
    %v206 = vpop.f32.mrb[0].mxu0
    %v207 = vadd.f32 0.0, %v206
    %v208 = vpop.f32.mrb[0].mxu0
    %209 = vmatprep.mubr.f32.mxu0 0.0
    %210 = vmatmul.mubr.f32.gmra.mrb[0].mxu0 %v106
    %v211 = vpop.f32.mrb[0].mxu0
    %v212 = vadd.f32 0.0, %v211
    %v213 = vpop.f32.mrb[0].mxu0
    %214 = vmatprep.mubr.f32.mxu0 0.0
    %215 = vmatmul.mubr.f32.gmra.mrb[0].mxu0 %v109
    %v216 = vpop.f32.mrb[0].mxu0
    %v217 = vadd.f32 0.0, %v216
    %v218 = vpop.f32.mrb[0].mxu0
    %219 = vdwg.mxu0
    %v221 = vsel %vm86, %v73, 0
    %v224 = vsel %vm111, %v83, 0
    %226 = vmatprep.subr.mxu0 0.0
    %227 = vmatpush1.msra.mxu0 %v224
    %228 = vmatprep.subr.mxu0 0.0
    %229 = vmatpush1.msra.mxu0 0.0
    %230 = vmatprep.subr.mxu0 0.0
    %231 = vmatpush1.msra.mxu0 0.0
    %232 = vmatprep.subr.mxu0 0.0
    %233 = vmatpush1.msra.mxu0 0.0
    %234 = vmatprep.subr.mxu0 0.0
    %235 = vmatpush1.msra.mxu0 0.0
    %236 = vmatprep.subr.mxu0 0.0
    %237 = vmatpush1.msra.mxu0 0.0
    %238 = vmatprep.subr.mxu0 0.0
    %239 = vmatpush1.msra.mxu0 0.0
    %240 = vmatprep.subr.mxu0 0.0
    %241 = vmatpush1.msra.mxu0 0.0
    %242 = vmatprep.subr.mxu0 0.0
    %243 = vmatpush1.msra.mxu0 0.0
    %244 = vmatprep.subr.mxu0 0.0
    %245 = vmatpush1.msra.mxu0 0.0
    %246 = vmatprep.subr.mxu0 0.0
    %247 = vmatpush1.msra.mxu0 0.0
    %248 = vmatprep.subr.mxu0 0.0
    %249 = vmatpush1.msra.mxu0 0.0
    %250 = vmatprep.subr.mxu0 0.0
    %251 = vmatpush1.msra.mxu0 0.0
    %252 = vmatprep.subr.mxu0 0.0
    %253 = vmatpush1.msra.mxu0 0.0
    %254 = vmatprep.subr.mxu0 0.0
    %255 = vmatpush1.msra.mxu0 0.0
    %256 = vmatprep.subr.mxu0 0.0
    %257 = vmatpush1.msra.mxu0 0.0
    %258 = vmatprep.subr.mxu0 0.0
    %259 = vmatpush1.msra.mxu0 0.0
    %260 = vmatprep.subr.mxu0 0.0
    %261 = vmatpush1.msra.mxu0 0.0
    %262 = vmatprep.subr.mxu0 0.0
    %263 = vmatpush1.msra.mxu0 0.0
    %264 = vmatprep.subr.mxu0 0.0
    %265 = vmatpush1.msra.mxu0 0.0
    %266 = vmatprep.subr.mxu0 0.0
    %267 = vmatpush1.msra.mxu0 0.0
    %268 = vmatprep.subr.mxu0 0.0
    %269 = vmatpush1.msra.mxu0 0.0
    %270 = vmatprep.subr.mxu0 0.0
    %271 = vmatpush1.msra.mxu0 0.0
    %272 = vmatprep.subr.mxu0 0.0
    %273 = vmatpush1.msra.mxu0 0.0
    %274 = vmatprep.subr.mxu0 0.0
    %275 = vmatpush1.msra.mxu0 0.0
    %276 = vmatprep.subr.mxu0 0.0
    %277 = vmatpush1.msra.mxu0 0.0
    %278 = vmatprep.subr.mxu0 0.0
    %279 = vmatpush1.msra.mxu0 0.0
    %280 = vmatprep.subr.mxu0 0.0
    %281 = vmatpush1.msra.mxu0 0.0
    %282 = vmatprep.subr.mxu0 0.0
    %283 = vmatpush1.msra.mxu0 0.0
    %284 = vmatprep.subr.mxu0 0.0
    %285 = vmatpush1.msra.mxu0 0.0
    %286 = vmatprep.subr.mxu0 0.0
    %287 = vmatpush1.msra.mxu0 0.0
    %288 = vmatprep.subr.mxu0 0.0
    %289 = vmatpush1.msra.mxu0 0.0
    %290 = vmatprep.mubr.f32.mxu0 0.0
    %291 = vmatmul.mubr.f32.gmra.mrb[0].mxu0 %v221
    %v292 = vpop.f32.mrb[0].mxu0
    %v293 = vadd.f32 %v182, %v292
    %v294 = vpop.f32.mrb[0].mxu0
    %295 = vmatprep.mubr.f32.mxu0 0.0
    %296 = vmatmul.mubr.f32.gmra.mrb[0].mxu0 %v88
    %v297 = vpop.f32.mrb[0].mxu0
    %v298 = vadd.f32 %v187, %v297
    %v299 = vpop.f32.mrb[0].mxu0
    %300 = vmatprep.mubr.f32.mxu0 0.0
    %301 = vmatmul.mubr.f32.gmra.mrb[0].mxu0 %v91
    %v302 = vpop.f32.mrb[0].mxu0
    %v303 = vadd.f32 %v192, %v302
    %v304 = vpop.f32.mrb[0].mxu0
    %305 = vmatprep.mubr.f32.mxu0 0.0
    %306 = vmatmul.mubr.f32.gmra.mrb[0].mxu0 %v94
    %v307 = vpop.f32.mrb[0].mxu0
    %v308 = vadd.f32 %v197, %v307
    %v309 = vpop.f32.mrb[0].mxu0
    %310 = vmatprep.mubr.f32.mxu0 0.0
    %311 = vmatmul.mubr.f32.gmra.mrb[0].mxu0 %v97
    %v312 = vpop.f32.mrb[0].mxu0
    %v313 = vadd.f32 %v202, %v312
    %v314 = vpop.f32.mrb[0].mxu0
    %315 = vmatprep.mubr.f32.mxu0 0.0
    %316 = vmatmul.mubr.f32.gmra.mrb[0].mxu0 %v100
    %v317 = vpop.f32.mrb[0].mxu0
    %v318 = vadd.f32 %v207, %v317
    %v319 = vpop.f32.mrb[0].mxu0
    %320 = vmatprep.mubr.f32.mxu0 0.0
    %321 = vmatmul.mubr.f32.gmra.mrb[0].mxu0 %v103
    %v322 = vpop.f32.mrb[0].mxu0
    %v323 = vadd.f32 %v212, %v322
    %v324 = vpop.f32.mrb[0].mxu0
    %325 = vmatprep.mubr.f32.mxu0 0.0
    %326 = vmatmul.mubr.f32.gmra.mrb[0].mxu0 %v106
    %v327 = vpop.f32.mrb[0].mxu0
    %v328 = vadd.f32 %v217, %v327
    %v329 = vpop.f32.mrb[0].mxu0
    %330 = vdwg.mxu0
    %s331 = scalar_lea.vmem [#allocation2], 8
    %v332 = vld [vmem:[%s331] sm:$0xf]
    %v334 = vsel %vm86, %v82, 0
    %v337 = vsel %vm111, %v332, 0
    %339 = vmatprep.subr.mxu0 0.0
    %340 = vmatpush1.msra.mxu0 %v337
    %341 = vmatprep.subr.mxu0 0.0
    %342 = vmatpush1.msra.mxu0 0.0
    %343 = vmatprep.subr.mxu0 0.0
    %344 = vmatpush1.msra.mxu0 0.0
    %345 = vmatprep.subr.mxu0 0.0
    %346 = vmatpush1.msra.mxu0 0.0
    %347 = vmatprep.subr.mxu0 0.0
    %348 = vmatpush1.msra.mxu0 0.0
    %349 = vmatprep.subr.mxu0 0.0
    %350 = vmatpush1.msra.mxu0 0.0
    %351 = vmatprep.subr.mxu0 0.0
    %352 = vmatpush1.msra.mxu0 0.0
    %353 = vmatprep.subr.mxu0 0.0
    %354 = vmatpush1.msra.mxu0 0.0
    %355 = vmatprep.subr.mxu0 0.0
    %356 = vmatpush1.msra.mxu0 0.0
    %357 = vmatprep.subr.mxu0 0.0
    %358 = vmatpush1.msra.mxu0 0.0
    %359 = vmatprep.subr.mxu0 0.0
    %360 = vmatpush1.msra.mxu0 0.0
    %361 = vmatprep.subr.mxu0 0.0
    %362 = vmatpush1.msra.mxu0 0.0
    %363 = vmatprep.subr.mxu0 0.0
    %364 = vmatpush1.msra.mxu0 0.0
    %365 = vmatprep.subr.mxu0 0.0
    %366 = vmatpush1.msra.mxu0 0.0
    %367 = vmatprep.subr.mxu0 0.0
    %368 = vmatpush1.msra.mxu0 0.0
    %369 = vmatprep.subr.mxu0 0.0
    %370 = vmatpush1.msra.mxu0 0.0
    %371 = vmatprep.subr.mxu0 0.0
    %372 = vmatpush1.msra.mxu0 0.0
    %373 = vmatprep.subr.mxu0 0.0
    %374 = vmatpush1.msra.mxu0 0.0
    %375 = vmatprep.subr.mxu0 0.0
    %376 = vmatpush1.msra.mxu0 0.0
    %377 = vmatprep.subr.mxu0 0.0
    %378 = vmatpush1.msra.mxu0 0.0
    %379 = vmatprep.subr.mxu0 0.0
    %380 = vmatpush1.msra.mxu0 0.0
    %381 = vmatprep.subr.mxu0 0.0
    %382 = vmatpush1.msra.mxu0 0.0
    %383 = vmatprep.subr.mxu0 0.0
    %384 = vmatpush1.msra.mxu0 0.0
    %385 = vmatprep.subr.mxu0 0.0
    %386 = vmatpush1.msra.mxu0 0.0
    %387 = vmatprep.subr.mxu0 0.0
    %388 = vmatpush1.msra.mxu0 0.0
    %389 = vmatprep.subr.mxu0 0.0
    %390 = vmatpush1.msra.mxu0 0.0
    %391 = vmatprep.subr.mxu0 0.0
    %392 = vmatpush1.msra.mxu0 0.0
    %393 = vmatprep.subr.mxu0 0.0
    %394 = vmatpush1.msra.mxu0 0.0
    %395 = vmatprep.subr.mxu0 0.0
    %396 = vmatpush1.msra.mxu0 0.0
    %397 = vmatprep.subr.mxu0 0.0
    %398 = vmatpush1.msra.mxu0 0.0
    %399 = vmatprep.subr.mxu0 0.0
    %400 = vmatpush1.msra.mxu0 0.0
    %401 = vmatprep.subr.mxu0 0.0
    %402 = vmatpush1.msra.mxu0 0.0
    %403 = vmatprep.mubr.f32.mxu0 0.0
    %404 = vmatmul.mubr.f32.gmra.mrb[0].mxu0 %v91
    %v405 = vpop.f32.mrb[0].mxu0
    %v406 = vadd.f32 0.0, %v405
    %v407 = vpop.f32.mrb[0].mxu0
    %408 = vmatprep.mubr.f32.mxu0 0.0
    %409 = vmatmul.mubr.f32.gmra.mrb[0].mxu0 %v94
    %v410 = vpop.f32.mrb[0].mxu0
    %v411 = vadd.f32 0.0, %v410
    %v412 = vpop.f32.mrb[0].mxu0
    %413 = vmatprep.mubr.f32.mxu0 0.0
    %414 = vmatmul.mubr.f32.gmra.mrb[0].mxu0 %v97
    %v415 = vpop.f32.mrb[0].mxu0
    %v416 = vadd.f32 0.0, %v415
    %v417 = vpop.f32.mrb[0].mxu0
    %418 = vmatprep.mubr.f32.mxu0 0.0
    %419 = vmatmul.mubr.f32.gmra.mrb[0].mxu0 %v100
    %v420 = vpop.f32.mrb[0].mxu0
    %v421 = vadd.f32 0.0, %v420
    %v422 = vpop.f32.mrb[0].mxu0
    %423 = vmatprep.mubr.f32.mxu0 0.0
    %424 = vmatmul.mubr.f32.gmra.mrb[0].mxu0 %v103
    %v425 = vpop.f32.mrb[0].mxu0
    %v426 = vadd.f32 0.0, %v425
    %v427 = vpop.f32.mrb[0].mxu0
    %428 = vmatprep.mubr.f32.mxu0 0.0
    %429 = vmatmul.mubr.f32.gmra.mrb[0].mxu0 %v106
    %v430 = vpop.f32.mrb[0].mxu0
    %v431 = vadd.f32 0.0, %v430
    %v432 = vpop.f32.mrb[0].mxu0
    %433 = vmatprep.mubr.f32.mxu0 0.0
    %434 = vmatmul.mubr.f32.gmra.mrb[0].mxu0 %v109
    %v435 = vpop.f32.mrb[0].mxu0
    %v436 = vadd.f32 0.0, %v435
    %v437 = vpop.f32.mrb[0].mxu0
    %438 = vmatprep.mubr.f32.mxu0 0.0
    %439 = vmatmul.mubr.f32.gmra.mrb[0].mxu0 %v334
    %v440 = vpop.f32.mrb[0].mxu0
    %v441 = vadd.f32 0.0, %v440
    %v442 = vpop.f32.mrb[0].mxu0
    %443 = vdwg.mxu0
    %v444 = vadd.f32 %v293, %v406
    %v445 = vadd.f32 %v298, %v411
    %v446 = vadd.f32 %v303, %v416
    %v447 = vadd.f32 %v308, %v421
    %v448 = vadd.f32 %v313, %v426
    %v449 = vadd.f32 %v318, %v431
    %v450 = vadd.f32 %v323, %v436
    %v451 = vadd.f32 %v328, %v441
    %v452 = vld [vmem:[%s2] sm:$0x1]
    %v454 = vlaneseq
    %v455 = vshrl.u32 %v454, 7
    %v456 = vsub.s32 0, %v455
    %v457 = vrot.slane %v452, %v456
    %v459 = vadd.f32 %v444, %v457
    %v460 = vadd.f32 %v445, %v457
    %v461 = vadd.f32 %v446, %v457
    %v462 = vadd.f32 %v447, %v457
    %v463 = vadd.f32 %v448, %v457
    %v464 = vadd.f32 %v449, %v457
    %v465 = vadd.f32 %v450, %v457
    %v466 = vadd.f32 %v451, %v457
    %v467 = vmax.f32 %v459, 0.0
    %v468 = vmax.f32 %v460, 0.0
    %v469 = vmax.f32 %v461, 0.0
    %v470 = vmax.f32 %v462, 0.0
    %v471 = vmax.f32 %v463, 0.0
    %v472 = vmax.f32 %v464, 0.0
    %v473 = vmax.f32 %v465, 0.0
    %v474 = vmax.f32 %v466, 0.0
    %v475 = vld [vmem:[%s3] sm:$0xff]
    %v476 = vld [vmem:[%s3 + $0x8] sm:$0xff]
    %v477 = vld [vmem:[%s3 + $0x10] sm:$0xff]
    %v478 = vld [vmem:[%s3 + $0x18] sm:$0xff]
    %v479 = vld [vmem:[%s3 + $0x20] sm:$0xff]
    %v480 = vld [vmem:[%s3 + $0x28] sm:$0xff]
    %v481 = vld [vmem:[%s3 + $0x30] sm:$0xff]
    %v482 = vld [vmem:[%s3 + $0x38] sm:$0xff]
    %v483 = vld [vmem:[%s5] sm:$0x1]
    %v485 = vlaneseq
    %v486 = vshrl.u32 %v485, 7
    %v487 = vsub.s32 0, %v486
    %v488 = vrot.slane %v483, %v487
    %vm490 = vcmask 523264
    %v492 = vsel %vm490, %v467, 0
    %v495 = vsel %vm490, %v468, 0
    %v498 = vsel %vm490, %v469, 0
    %v501 = vsel %vm490, %v470, 0
    %v504 = vsel %vm490, %v471, 0
    %v507 = vsel %vm490, %v472, 0
    %v510 = vsel %vm490, %v473, 0
    %v513 = vsel %vm490, %v474, 0
    %515 = vmatprep.subr.mxu0 0.0
    %516 = vmatpush1.msra.mxu0 %v475
    %517 = vmatprep.subr.mxu0 0.0
    %518 = vmatpush1.msra.mxu0 %v476
    %519 = vmatprep.subr.mxu0 0.0
    %520 = vmatpush1.msra.mxu0 %v477
    %521 = vmatprep.subr.mxu0 0.0
    %522 = vmatpush1.msra.mxu0 %v478
    %523 = vmatprep.subr.mxu0 0.0
    %524 = vmatpush1.msra.mxu0 %v479
    %525 = vmatprep.subr.mxu0 0.0
    %526 = vmatpush1.msra.mxu0 %v480
    %527 = vmatprep.subr.mxu0 0.0
    %528 = vmatpush1.msra.mxu0 %v481
    %529 = vmatprep.subr.mxu0 0.0
    %530 = vmatpush1.msra.mxu0 %v482
    %531 = vmatprep.subr.mxu0 0.0
    %532 = vmatpush1.msra.mxu0 0.0
    %533 = vmatprep.subr.mxu0 0.0
    %534 = vmatpush1.msra.mxu0 0.0
    %535 = vmatprep.subr.mxu0 0.0
    %536 = vmatpush1.msra.mxu0 0.0
    %537 = vmatprep.subr.mxu0 0.0
    %538 = vmatpush1.msra.mxu0 0.0
    %539 = vmatprep.subr.mxu0 0.0
    %540 = vmatpush1.msra.mxu0 0.0
    %541 = vmatprep.subr.mxu0 0.0
    %542 = vmatpush1.msra.mxu0 0.0
    %543 = vmatprep.subr.mxu0 0.0
    %544 = vmatpush1.msra.mxu0 0.0
    %545 = vmatprep.subr.mxu0 0.0
    %546 = vmatpush1.msra.mxu0 0.0
    %547 = vmatprep.subr.mxu0 0.0
    %548 = vmatpush1.msra.mxu0 0.0
    %549 = vmatprep.subr.mxu0 0.0
    %550 = vmatpush1.msra.mxu0 0.0
    %551 = vmatprep.subr.mxu0 0.0
    %552 = vmatpush1.msra.mxu0 0.0
    %553 = vmatprep.subr.mxu0 0.0
    %554 = vmatpush1.msra.mxu0 0.0
    %555 = vmatprep.subr.mxu0 0.0
    %556 = vmatpush1.msra.mxu0 0.0
    %557 = vmatprep.subr.mxu0 0.0
    %558 = vmatpush1.msra.mxu0 0.0
    %559 = vmatprep.subr.mxu0 0.0
    %560 = vmatpush1.msra.mxu0 0.0
    %561 = vmatprep.subr.mxu0 0.0
    %562 = vmatpush1.msra.mxu0 0.0
    %563 = vmatprep.subr.mxu0 0.0
    %564 = vmatpush1.msra.mxu0 0.0
    %565 = vmatprep.subr.mxu0 0.0
    %566 = vmatpush1.msra.mxu0 0.0
    %567 = vmatprep.subr.mxu0 0.0
    %568 = vmatpush1.msra.mxu0 0.0
    %569 = vmatprep.subr.mxu0 0.0
    %570 = vmatpush1.msra.mxu0 0.0
    %571 = vmatprep.subr.mxu0 0.0
    %572 = vmatpush1.msra.mxu0 0.0
    %573 = vmatprep.subr.mxu0 0.0
    %574 = vmatpush1.msra.mxu0 0.0
    %575 = vmatprep.subr.mxu0 0.0
    %576 = vmatpush1.msra.mxu0 0.0
    %577 = vmatprep.subr.mxu0 0.0
    %578 = vmatpush1.msra.mxu0 0.0
    %579 = vmatprep.mubr.f32.mxu0 0.0
    %580 = vmatmul.mubr.f32.gmra.mrb[0].mxu0 %v492
    %v581 = vpop.f32.mrb[0].mxu0
    %v582 = vadd.f32 %v488, %v581
    %v583 = vpop.f32.mrb[0].mxu0
    %584 = vmatprep.mubr.f32.mxu0 0.0
    %585 = vmatmul.mubr.f32.gmra.mrb[0].mxu0 %v495
    %v586 = vpop.f32.mrb[0].mxu0
    %v587 = vadd.f32 %v488, %v586
    %v588 = vpop.f32.mrb[0].mxu0
    %589 = vmatprep.mubr.f32.mxu0 0.0
    %590 = vmatmul.mubr.f32.gmra.mrb[0].mxu0 %v498
    %v591 = vpop.f32.mrb[0].mxu0
    %v592 = vadd.f32 %v488, %v591
    %v593 = vpop.f32.mrb[0].mxu0
    %594 = vmatprep.mubr.f32.mxu0 0.0
    %595 = vmatmul.mubr.f32.gmra.mrb[0].mxu0 %v501
    %v596 = vpop.f32.mrb[0].mxu0
    %v597 = vadd.f32 %v488, %v596
    %v598 = vpop.f32.mrb[0].mxu0
    %599 = vmatprep.mubr.f32.mxu0 0.0
    %600 = vmatmul.mubr.f32.gmra.mrb[0].mxu0 %v504
    %v601 = vpop.f32.mrb[0].mxu0
    %v602 = vadd.f32 %v488, %v601
    %v603 = vpop.f32.mrb[0].mxu0
    %604 = vmatprep.mubr.f32.mxu0 0.0
    %605 = vmatmul.mubr.f32.gmra.mrb[0].mxu0 %v507
    %v606 = vpop.f32.mrb[0].mxu0
    %v607 = vadd.f32 %v488, %v606
    %v608 = vpop.f32.mrb[0].mxu0
    %609 = vmatprep.mubr.f32.mxu0 0.0
    %610 = vmatmul.mubr.f32.gmra.mrb[0].mxu0 %v510
    %v611 = vpop.f32.mrb[0].mxu0
    %v612 = vadd.f32 %v488, %v611
    %v613 = vpop.f32.mrb[0].mxu0
    %614 = vmatprep.mubr.f32.mxu0 0.0
    %615 = vmatmul.mubr.f32.gmra.mrb[0].mxu0 %v513
    %v616 = vpop.f32.mrb[0].mxu0
    %v617 = vadd.f32 %v488, %v616
    %v618 = vpop.f32.mrb[0].mxu0
    %619 = vdwg.mxu0
    %v620 = vld [vmem:[%s4] sm:$0xff]
    %v621 = vld [vmem:[%s4 + $0x8] sm:$0xff]
    %v622 = vld [vmem:[%s4 + $0x10] sm:$0xff]
    %v623 = vld [vmem:[%s4 + $0x18] sm:$0xff]
    %v624 = vld [vmem:[%s6] sm:$0xff]
    %v625 = vld [vmem:[%s6 + $0x8] sm:$0xff]
    %v626 = vld [vmem:[%s6 + $0x10] sm:$0xff]
    %v627 = vld [vmem:[%s6 + $0x18] sm:$0xff]
    %v628 = vld [vmem:[%s8] sm:$0x1]
    %vm629 = vcmask 261120
    %v631 = vsel %vm629, 0.0, 0
    %633 = vmatprep.subr.mxu0 0.0
    %634 = vmatpush1.msra.mxu0 %v620
    %635 = vmatprep.subr.mxu0 0.0
    %636 = vmatpush1.msra.mxu0 %v621
    %637 = vmatprep.subr.mxu0 0.0
    %638 = vmatpush1.msra.mxu0 %v622
    %639 = vmatprep.subr.mxu0 0.0
    %640 = vmatpush1.msra.mxu0 %v623
    %641 = vmatprep.subr.mxu0 0.0
    %642 = vmatpush1.msra.mxu0 0.0
    %643 = vmatprep.subr.mxu0 0.0
    %644 = vmatpush1.msra.mxu0 0.0
    %645 = vmatprep.subr.mxu0 0.0
    %646 = vmatpush1.msra.mxu0 0.0
    %647 = vmatprep.subr.mxu0 0.0
    %648 = vmatpush1.msra.mxu0 0.0
    %649 = vmatprep.subr.mxu0 0.0
    %650 = vmatpush1.msra.mxu0 0.0
    %651 = vmatprep.subr.mxu0 0.0
    %652 = vmatpush1.msra.mxu0 0.0
    %653 = vmatprep.subr.mxu0 0.0
    %654 = vmatpush1.msra.mxu0 0.0
    %655 = vmatprep.subr.mxu0 0.0
    %656 = vmatpush1.msra.mxu0 0.0
    %657 = vmatprep.subr.mxu0 0.0
    %658 = vmatpush1.msra.mxu0 0.0
    %659 = vmatprep.subr.mxu0 0.0
    %660 = vmatpush1.msra.mxu0 0.0
    %661 = vmatprep.subr.mxu0 0.0
    %662 = vmatpush1.msra.mxu0 0.0
    %663 = vmatprep.subr.mxu0 0.0
    %664 = vmatpush1.msra.mxu0 0.0
    %665 = vmatprep.subr.mxu0 0.0
    %666 = vmatpush1.msra.mxu0 0.0
    %667 = vmatprep.subr.mxu0 0.0
    %668 = vmatpush1.msra.mxu0 0.0
    %669 = vmatprep.subr.mxu0 0.0
    %670 = vmatpush1.msra.mxu0 0.0
    %671 = vmatprep.subr.mxu0 0.0
    %672 = vmatpush1.msra.mxu0 0.0
    %673 = vmatprep.subr.mxu0 0.0
    %674 = vmatpush1.msra.mxu0 0.0
    %675 = vmatprep.subr.mxu0 0.0
    %676 = vmatpush1.msra.mxu0 0.0
    %677 = vmatprep.subr.mxu0 0.0
    %678 = vmatpush1.msra.mxu0 0.0
    %679 = vmatprep.subr.mxu0 0.0
    %680 = vmatpush1.msra.mxu0 0.0
    %681 = vmatprep.subr.mxu0 0.0
    %682 = vmatpush1.msra.mxu0 0.0
    %683 = vmatprep.subr.mxu0 0.0
    %684 = vmatpush1.msra.mxu0 0.0
    %685 = vmatprep.subr.mxu0 0.0
    %686 = vmatpush1.msra.mxu0 0.0
    %687 = vmatprep.subr.mxu0 0.0
    %688 = vmatpush1.msra.mxu0 0.0
    %689 = vmatprep.subr.mxu0 0.0
    %690 = vmatpush1.msra.mxu0 0.0
    %691 = vmatprep.subr.mxu0 0.0
    %692 = vmatpush1.msra.mxu0 0.0
    %693 = vmatprep.subr.mxu0 0.0
    %694 = vmatpush1.msra.mxu0 0.0
    %695 = vmatprep.subr.mxu0 0.0
    %696 = vmatpush1.msra.mxu0 0.0
    %697 = vmatprep.mubr.f32.mxu0 0.0
    %698 = vmatmul.mubr.f32.gmra.mrb[0].mxu0 %v631
    %v699 = vpop.f32.mrb[0].mxu0
    %v700 = vadd.f32 0.0, %v699
    %v701 = vpop.f32.mrb[0].mxu0
    %702 = vdwg.mxu0
    %v703 = vadd.f32 %v582, %v700
    %v704 = vmul.f32 %v703, %v71
    %v705 = vtanh.pop %v704
    %v706 = vmul.f32 %v705, %v71
    %v707 = vadd.f32 %v706, %v72
    %v708 = vmul.f32 %v707, 0.0
    %710 = vrot.lane.b32.xlu0 %v707, 64
    %v711 = vpop.permute.xlu0 %710
    %v713 = vmul.f32 %v707, %v711
    %715 = vrot.lane.b32.xlu0 %v713, 32
    %v716 = vpop.permute.xlu0 %715
    %v718 = vadd.f32 %v708, %v716
    %v719 = vtanh.pop %v718
    %721 = vrot.lane.b32.xlu0 %v719, 64
    %v722 = vpop.permute.xlu0 %721
    %v724 = vmul.f32 %v707, %v722
    %v726 = vlaneseq
    %v727 = vshrl.u32 %v726, 7
    %v728 = vsub.s32 0, %v727
    %v729 = vrot.slane %v628, %v728
    %732 = vrot.lane.b32.xlu0 %v724, 32
    %v733 = vpop.permute.xlu0 %732
    %v734 = vsel %vm629, %v733, 0
    %736 = vmatprep.subr.mxu0 0.0
    %737 = vmatpush1.msra.mxu0 %v624
    %738 = vmatprep.subr.mxu0 0.0
    %739 = vmatpush1.msra.mxu0 %v625
    %740 = vmatprep.subr.mxu0 0.0
    %741 = vmatpush1.msra.mxu0 %v626
    %742 = vmatprep.subr.mxu0 0.0
    %743 = vmatpush1.msra.mxu0 %v627
    %744 = vmatprep.subr.mxu0 0.0
    %745 = vmatpush1.msra.mxu0 0.0
    %746 = vmatprep.subr.mxu0 0.0
    %747 = vmatpush1.msra.mxu0 0.0
    %748 = vmatprep.subr.mxu0 0.0
    %749 = vmatpush1.msra.mxu0 0.0
    %750 = vmatprep.subr.mxu0 0.0
    %751 = vmatpush1.msra.mxu0 0.0
    %752 = vmatprep.subr.mxu0 0.0
    %753 = vmatpush1.msra.mxu0 0.0
    %754 = vmatprep.subr.mxu0 0.0
    %755 = vmatpush1.msra.mxu0 0.0
    %756 = vmatprep.subr.mxu0 0.0
    %757 = vmatpush1.msra.mxu0 0.0
    %758 = vmatprep.subr.mxu0 0.0
    %759 = vmatpush1.msra.mxu0 0.0
    %760 = vmatprep.subr.mxu0 0.0
    %761 = vmatpush1.msra.mxu0 0.0
    %762 = vmatprep.subr.mxu0 0.0
    %763 = vmatpush1.msra.mxu0 0.0
    %764 = vmatprep.subr.mxu0 0.0
    %765 = vmatpush1.msra.mxu0 0.0
    %766 = vmatprep.subr.mxu0 0.0
    %767 = vmatpush1.msra.mxu0 0.0
    %768 = vmatprep.subr.mxu0 0.0
    %769 = vmatpush1.msra.mxu0 0.0
    %770 = vmatprep.subr.mxu0 0.0
    %771 = vmatpush1.msra.mxu0 0.0
    %772 = vmatprep.subr.mxu0 0.0
    %773 = vmatpush1.msra.mxu0 0.0
    %774 = vmatprep.subr.mxu0 0.0
    %775 = vmatpush1.msra.mxu0 0.0
    %776 = vmatprep.subr.mxu0 0.0
    %777 = vmatpush1.msra.mxu0 0.0
    %778 = vmatprep.subr.mxu0 0.0
    %779 = vmatpush1.msra.mxu0 0.0
    %780 = vmatprep.subr.mxu0 0.0
    %781 = vmatpush1.msra.mxu0 0.0
    %782 = vmatprep.subr.mxu0 0.0
    %783 = vmatpush1.msra.mxu0 0.0
    %784 = vmatprep.subr.mxu0 0.0
    %785 = vmatpush1.msra.mxu0 0.0
    %786 = vmatprep.subr.mxu0 0.0
    %787 = vmatpush1.msra.mxu0 0.0
    %788 = vmatprep.subr.mxu0 0.0
    %789 = vmatpush1.msra.mxu0 0.0
    %790 = vmatprep.subr.mxu0 0.0
    %791 = vmatpush1.msra.mxu0 0.0
    %792 = vmatprep.subr.mxu0 0.0
    %793 = vmatpush1.msra.mxu0 0.0
    %794 = vmatprep.subr.mxu0 0.0
    %795 = vmatpush1.msra.mxu0 0.0
    %796 = vmatprep.subr.mxu0 0.0
    %797 = vmatpush1.msra.mxu0 0.0
    %798 = vmatprep.subr.mxu0 0.0
    %799 = vmatpush1.msra.mxu0 0.0
    %800 = vmatprep.mubr.f32.mxu0 0.0
    %801 = vmatmul.mubr.f32.gmra.mrb[0].mxu0 %v734
    %v802 = vpop.f32.mrb[0].mxu0
    %v803 = vadd.f32 %v729, %v802
    %v804 = vpop.f32.mrb[0].mxu0
    %805 = vdwg.mxu0
    %806 = vmatprep.subr.mxu0 0.0
    %807 = vmatpush1.msra.mxu0 %v620
    %808 = vmatprep.subr.mxu0 0.0
    %809 = vmatpush1.msra.mxu0 %v621
    %810 = vmatprep.subr.mxu0 0.0
    %811 = vmatpush1.msra.mxu0 %v622
    %812 = vmatprep.subr.mxu0 0.0
    %813 = vmatpush1.msra.mxu0 %v623
    %814 = vmatprep.subr.mxu0 0.0
    %815 = vmatpush1.msra.mxu0 0.0
    %816 = vmatprep.subr.mxu0 0.0
    %817 = vmatpush1.msra.mxu0 0.0
    %818 = vmatprep.subr.mxu0 0.0
    %819 = vmatpush1.msra.mxu0 0.0
    %820 = vmatprep.subr.mxu0 0.0
    %821 = vmatpush1.msra.mxu0 0.0
    %822 = vmatprep.subr.mxu0 0.0
    %823 = vmatpush1.msra.mxu0 0.0
    %824 = vmatprep.subr.mxu0 0.0
    %825 = vmatpush1.msra.mxu0 0.0
    %826 = vmatprep.subr.mxu0 0.0
    %827 = vmatpush1.msra.mxu0 0.0
    %828 = vmatprep.subr.mxu0 0.0
    %829 = vmatpush1.msra.mxu0 0.0
    %830 = vmatprep.subr.mxu0 0.0
    %831 = vmatpush1.msra.mxu0 0.0
    %832 = vmatprep.subr.mxu0 0.0
    %833 = vmatpush1.msra.mxu0 0.0
    %834 = vmatprep.subr.mxu0 0.0
    %835 = vmatpush1.msra.mxu0 0.0
    %836 = vmatprep.subr.mxu0 0.0
    %837 = vmatpush1.msra.mxu0 0.0
    %838 = vmatprep.subr.mxu0 0.0
    %839 = vmatpush1.msra.mxu0 0.0
    %840 = vmatprep.subr.mxu0 0.0
    %841 = vmatpush1.msra.mxu0 0.0
    %842 = vmatprep.subr.mxu0 0.0
    %843 = vmatpush1.msra.mxu0 0.0
    %844 = vmatprep.subr.mxu0 0.0
    %845 = vmatpush1.msra.mxu0 0.0
    %846 = vmatprep.subr.mxu0 0.0
    %847 = vmatpush1.msra.mxu0 0.0
    %848 = vmatprep.subr.mxu0 0.0
    %849 = vmatpush1.msra.mxu0 0.0
    %850 = vmatprep.subr.mxu0 0.0
    %851 = vmatpush1.msra.mxu0 0.0
    %852 = vmatprep.subr.mxu0 0.0
    %853 = vmatpush1.msra.mxu0 0.0
    %854 = vmatprep.subr.mxu0 0.0
    %855 = vmatpush1.msra.mxu0 0.0
    %856 = vmatprep.subr.mxu0 0.0
    %857 = vmatpush1.msra.mxu0 0.0
    %858 = vmatprep.subr.mxu0 0.0
    %859 = vmatpush1.msra.mxu0 0.0
    %860 = vmatprep.subr.mxu0 0.0
    %861 = vmatpush1.msra.mxu0 0.0
    %862 = vmatprep.subr.mxu0 0.0
    %863 = vmatpush1.msra.mxu0 0.0
    %864 = vmatprep.subr.mxu0 0.0
    %865 = vmatpush1.msra.mxu0 0.0
    %866 = vmatprep.subr.mxu0 0.0
    %867 = vmatpush1.msra.mxu0 0.0
    %868 = vmatprep.subr.mxu0 0.0
    %869 = vmatpush1.msra.mxu0 0.0
    %870 = vmatprep.mubr.f32.mxu0 0.0
    %871 = vmatmul.mubr.f32.gmra.mrb[0].mxu0 %v734
    %v872 = vpop.f32.mrb[0].mxu0
    %v873 = vadd.f32 0.0, %v872
    %v874 = vpop.f32.mrb[0].mxu0
    %875 = vdwg.mxu0
    %v876 = vadd.f32 %v587, %v873
    %v877 = vmul.f32 %v876, %v71
    %v878 = vtanh.pop %v877
    %v879 = vmul.f32 %v878, %v71
    %v880 = vadd.f32 %v879, %v72
    %v881 = vmul.f32 %v880, %v718
    %883 = vrot.lane.b32.xlu0 %v880, 64
    %v884 = vpop.permute.xlu0 %883
    %v886 = vmul.f32 %v880, %v884
    %888 = vrot.lane.b32.xlu0 %v886, 32
    %v889 = vpop.permute.xlu0 %888
    %v891 = vadd.f32 %v881, %v889
    %v892 = vtanh.pop %v891
    %894 = vrot.lane.b32.xlu0 %v892, 64
    %v895 = vpop.permute.xlu0 %894
    %v897 = vmul.f32 %v880, %v895
    %899 = vrot.lane.b32.xlu0 %v897, 32
    %v900 = vpop.permute.xlu0 %899
    %v901 = vsel %vm629, %v900, 0
    %903 = vmatprep.subr.mxu0 0.0
    %904 = vmatpush1.msra.mxu0 %v624
    %905 = vmatprep.subr.mxu0 0.0
    %906 = vmatpush1.msra.mxu0 %v625
    %907 = vmatprep.subr.mxu0 0.0
    %908 = vmatpush1.msra.mxu0 %v626
    %909 = vmatprep.subr.mxu0 0.0
    %910 = vmatpush1.msra.mxu0 %v627
    %911 = vmatprep.subr.mxu0 0.0
    %912 = vmatpush1.msra.mxu0 0.0
    %913 = vmatprep.subr.mxu0 0.0
    %914 = vmatpush1.msra.mxu0 0.0
    %915 = vmatprep.subr.mxu0 0.0
    %916 = vmatpush1.msra.mxu0 0.0
    %917 = vmatprep.subr.mxu0 0.0
    %918 = vmatpush1.msra.mxu0 0.0
    %919 = vmatprep.subr.mxu0 0.0
    %920 = vmatpush1.msra.mxu0 0.0
    %921 = vmatprep.subr.mxu0 0.0
    %922 = vmatpush1.msra.mxu0 0.0
    %923 = vmatprep.subr.mxu0 0.0
    %924 = vmatpush1.msra.mxu0 0.0
    %925 = vmatprep.subr.mxu0 0.0
    %926 = vmatpush1.msra.mxu0 0.0
    %927 = vmatprep.subr.mxu0 0.0
    %928 = vmatpush1.msra.mxu0 0.0
    %929 = vmatprep.subr.mxu0 0.0
    %930 = vmatpush1.msra.mxu0 0.0
    %931 = vmatprep.subr.mxu0 0.0
    %932 = vmatpush1.msra.mxu0 0.0
    %933 = vmatprep.subr.mxu0 0.0
    %934 = vmatpush1.msra.mxu0 0.0
    %935 = vmatprep.subr.mxu0 0.0
    %936 = vmatpush1.msra.mxu0 0.0
    %937 = vmatprep.subr.mxu0 0.0
    %938 = vmatpush1.msra.mxu0 0.0
    %939 = vmatprep.subr.mxu0 0.0
    %940 = vmatpush1.msra.mxu0 0.0
    %941 = vmatprep.subr.mxu0 0.0
    %942 = vmatpush1.msra.mxu0 0.0
    %943 = vmatprep.subr.mxu0 0.0
    %944 = vmatpush1.msra.mxu0 0.0
    %945 = vmatprep.subr.mxu0 0.0
    %946 = vmatpush1.msra.mxu0 0.0
    %947 = vmatprep.subr.mxu0 0.0
    %948 = vmatpush1.msra.mxu0 0.0
    %949 = vmatprep.subr.mxu0 0.0
    %950 = vmatpush1.msra.mxu0 0.0
    %951 = vmatprep.subr.mxu0 0.0
    %952 = vmatpush1.msra.mxu0 0.0
    %953 = vmatprep.subr.mxu0 0.0
    %954 = vmatpush1.msra.mxu0 0.0
    %955 = vmatprep.subr.mxu0 0.0
    %956 = vmatpush1.msra.mxu0 0.0
    %957 = vmatprep.subr.mxu0 0.0
    %958 = vmatpush1.msra.mxu0 0.0
    %959 = vmatprep.subr.mxu0 0.0
    %960 = vmatpush1.msra.mxu0 0.0
    %961 = vmatprep.subr.mxu0 0.0
    %962 = vmatpush1.msra.mxu0 0.0
    %963 = vmatprep.subr.mxu0 0.0
    %964 = vmatpush1.msra.mxu0 0.0
    %965 = vmatprep.subr.mxu0 0.0
    %966 = vmatpush1.msra.mxu0 0.0
    %967 = vmatprep.mubr.f32.mxu0 0.0
    %968 = vmatmul.mubr.f32.gmra.mrb[0].mxu0 %v901
    %v969 = vpop.f32.mrb[0].mxu0
    %v970 = vadd.f32 %v729, %v969
    %v971 = vpop.f32.mrb[0].mxu0
    %972 = vdwg.mxu0
    %973 = vmatprep.subr.mxu0 0.0
    %974 = vmatpush1.msra.mxu0 %v620
    %975 = vmatprep.subr.mxu0 0.0
    %976 = vmatpush1.msra.mxu0 %v621
    %977 = vmatprep.subr.mxu0 0.0
    %978 = vmatpush1.msra.mxu0 %v622
    %979 = vmatprep.subr.mxu0 0.0
    %980 = vmatpush1.msra.mxu0 %v623
    %981 = vmatprep.subr.mxu0 0.0
    %982 = vmatpush1.msra.mxu0 0.0
    %983 = vmatprep.subr.mxu0 0.0
    %984 = vmatpush1.msra.mxu0 0.0
    %985 = vmatprep.subr.mxu0 0.0
    %986 = vmatpush1.msra.mxu0 0.0
    %987 = vmatprep.subr.mxu0 0.0
    %988 = vmatpush1.msra.mxu0 0.0
    %989 = vmatprep.subr.mxu0 0.0
    %990 = vmatpush1.msra.mxu0 0.0
    %991 = vmatprep.subr.mxu0 0.0
    %992 = vmatpush1.msra.mxu0 0.0
    %993 = vmatprep.subr.mxu0 0.0
    %994 = vmatpush1.msra.mxu0 0.0
    %995 = vmatprep.subr.mxu0 0.0
    %996 = vmatpush1.msra.mxu0 0.0
    %997 = vmatprep.subr.mxu0 0.0
    %998 = vmatpush1.msra.mxu0 0.0
    %999 = vmatprep.subr.mxu0 0.0
    %1000 = vmatpush1.msra.mxu0 0.0
    %1001 = vmatprep.subr.mxu0 0.0
    %1002 = vmatpush1.msra.mxu0 0.0
    %1003 = vmatprep.subr.mxu0 0.0
    %1004 = vmatpush1.msra.mxu0 0.0
    %1005 = vmatprep.subr.mxu0 0.0
    %1006 = vmatpush1.msra.mxu0 0.0
    %1007 = vmatprep.subr.mxu0 0.0
    %1008 = vmatpush1.msra.mxu0 0.0
    %1009 = vmatprep.subr.mxu0 0.0
    %1010 = vmatpush1.msra.mxu0 0.0
    %1011 = vmatprep.subr.mxu0 0.0
    %1012 = vmatpush1.msra.mxu0 0.0
    %1013 = vmatprep.subr.mxu0 0.0
    %1014 = vmatpush1.msra.mxu0 0.0
    %1015 = vmatprep.subr.mxu0 0.0
    %1016 = vmatpush1.msra.mxu0 0.0
    %1017 = vmatprep.subr.mxu0 0.0
    %1018 = vmatpush1.msra.mxu0 0.0
    %1019 = vmatprep.subr.mxu0 0.0
    %1020 = vmatpush1.msra.mxu0 0.0
    %1021 = vmatprep.subr.mxu0 0.0
    %1022 = vmatpush1.msra.mxu0 0.0
    %1023 = vmatprep.subr.mxu0 0.0
    %1024 = vmatpush1.msra.mxu0 0.0
    %1025 = vmatprep.subr.mxu0 0.0
    %1026 = vmatpush1.msra.mxu0 0.0
    %1027 = vmatprep.subr.mxu0 0.0
    %1028 = vmatpush1.msra.mxu0 0.0
    %1029 = vmatprep.subr.mxu0 0.0
    %1030 = vmatpush1.msra.mxu0 0.0
    %1031 = vmatprep.subr.mxu0 0.0
    %1032 = vmatpush1.msra.mxu0 0.0
    %1033 = vmatprep.subr.mxu0 0.0
    %1034 = vmatpush1.msra.mxu0 0.0
    %1035 = vmatprep.subr.mxu0 0.0
    %1036 = vmatpush1.msra.mxu0 0.0
    %1037 = vmatprep.mubr.f32.mxu0 0.0
    %1038 = vmatmul.mubr.f32.gmra.mrb[0].mxu0 %v901
    %v1039 = vpop.f32.mrb[0].mxu0
    %v1040 = vadd.f32 0.0, %v1039
    %v1041 = vpop.f32.mrb[0].mxu0
    %1042 = vdwg.mxu0
    %v1043 = vadd.f32 %v592, %v1040
    %v1044 = vmul.f32 %v1043, %v71
    %v1045 = vtanh.pop %v1044
    %v1046 = vmul.f32 %v1045, %v71
    %v1047 = vadd.f32 %v1046, %v72
    %v1048 = vmul.f32 %v1047, %v891
    %1050 = vrot.lane.b32.xlu0 %v1047, 64
    %v1051 = vpop.permute.xlu0 %1050
    %v1053 = vmul.f32 %v1047, %v1051
    %1055 = vrot.lane.b32.xlu0 %v1053, 32
    %v1056 = vpop.permute.xlu0 %1055
    %v1058 = vadd.f32 %v1048, %v1056
    %v1059 = vtanh.pop %v1058
    %1061 = vrot.lane.b32.xlu0 %v1059, 64
    %v1062 = vpop.permute.xlu0 %1061
    %v1064 = vmul.f32 %v1047, %v1062
    %1066 = vrot.lane.b32.xlu0 %v1064, 32
    %v1067 = vpop.permute.xlu0 %1066
    %v1068 = vsel %vm629, %v1067, 0
    %1070 = vmatprep.subr.mxu0 0.0
    %1071 = vmatpush1.msra.mxu0 %v624
    %1072 = vmatprep.subr.mxu0 0.0
    %1073 = vmatpush1.msra.mxu0 %v625
    %1074 = vmatprep.subr.mxu0 0.0
    %1075 = vmatpush1.msra.mxu0 %v626
    %1076 = vmatprep.subr.mxu0 0.0
    %1077 = vmatpush1.msra.mxu0 %v627
    %1078 = vmatprep.subr.mxu0 0.0
    %1079 = vmatpush1.msra.mxu0 0.0
    %1080 = vmatprep.subr.mxu0 0.0
    %1081 = vmatpush1.msra.mxu0 0.0
    %1082 = vmatprep.subr.mxu0 0.0
    %1083 = vmatpush1.msra.mxu0 0.0
    %1084 = vmatprep.subr.mxu0 0.0
    %1085 = vmatpush1.msra.mxu0 0.0
    %1086 = vmatprep.subr.mxu0 0.0
    %1087 = vmatpush1.msra.mxu0 0.0
    %1088 = vmatprep.subr.mxu0 0.0
    %1089 = vmatpush1.msra.mxu0 0.0
    %1090 = vmatprep.subr.mxu0 0.0
    %1091 = vmatpush1.msra.mxu0 0.0
    %1092 = vmatprep.subr.mxu0 0.0
    %1093 = vmatpush1.msra.mxu0 0.0
    %1094 = vmatprep.subr.mxu0 0.0
    %1095 = vmatpush1.msra.mxu0 0.0
    %1096 = vmatprep.subr.mxu0 0.0
    %1097 = vmatpush1.msra.mxu0 0.0
    %1098 = vmatprep.subr.mxu0 0.0
    %1099 = vmatpush1.msra.mxu0 0.0
    %1100 = vmatprep.subr.mxu0 0.0
    %1101 = vmatpush1.msra.mxu0 0.0
    %1102 = vmatprep.subr.mxu0 0.0
    %1103 = vmatpush1.msra.mxu0 0.0
    %1104 = vmatprep.subr.mxu0 0.0
    %1105 = vmatpush1.msra.mxu0 0.0
    %1106 = vmatprep.subr.mxu0 0.0
    %1107 = vmatpush1.msra.mxu0 0.0
    %1108 = vmatprep.subr.mxu0 0.0
    %1109 = vmatpush1.msra.mxu0 0.0
    %1110 = vmatprep.subr.mxu0 0.0
    %1111 = vmatpush1.msra.mxu0 0.0
    %1112 = vmatprep.subr.mxu0 0.0
    %1113 = vmatpush1.msra.mxu0 0.0
    %1114 = vmatprep.subr.mxu0 0.0
    %1115 = vmatpush1.msra.mxu0 0.0
    %1116 = vmatprep.subr.mxu0 0.0
    %1117 = vmatpush1.msra.mxu0 0.0
    %1118 = vmatprep.subr.mxu0 0.0
    %1119 = vmatpush1.msra.mxu0 0.0
    %1120 = vmatprep.subr.mxu0 0.0
    %1121 = vmatpush1.msra.mxu0 0.0
    %1122 = vmatprep.subr.mxu0 0.0
    %1123 = vmatpush1.msra.mxu0 0.0
    %1124 = vmatprep.subr.mxu0 0.0
    %1125 = vmatpush1.msra.mxu0 0.0
    %1126 = vmatprep.subr.mxu0 0.0
    %1127 = vmatpush1.msra.mxu0 0.0
    %1128 = vmatprep.subr.mxu0 0.0
    %1129 = vmatpush1.msra.mxu0 0.0
    %1130 = vmatprep.subr.mxu0 0.0
    %1131 = vmatpush1.msra.mxu0 0.0
    %1132 = vmatprep.subr.mxu0 0.0
    %1133 = vmatpush1.msra.mxu0 0.0
    %1134 = vmatprep.mubr.f32.mxu0 0.0
    %1135 = vmatmul.mubr.f32.gmra.mrb[0].mxu0 %v1068
    %v1136 = vpop.f32.mrb[0].mxu0
    %v1137 = vadd.f32 %v729, %v1136
    %v1138 = vpop.f32.mrb[0].mxu0
    %1139 = vdwg.mxu0
    %1140 = vmatprep.subr.mxu0 0.0
    %1141 = vmatpush1.msra.mxu0 %v620
    %1142 = vmatprep.subr.mxu0 0.0
    %1143 = vmatpush1.msra.mxu0 %v621
    %1144 = vmatprep.subr.mxu0 0.0
    %1145 = vmatpush1.msra.mxu0 %v622
    %1146 = vmatprep.subr.mxu0 0.0
    %1147 = vmatpush1.msra.mxu0 %v623
    %1148 = vmatprep.subr.mxu0 0.0
    %1149 = vmatpush1.msra.mxu0 0.0
    %1150 = vmatprep.subr.mxu0 0.0
    %1151 = vmatpush1.msra.mxu0 0.0
    %1152 = vmatprep.subr.mxu0 0.0
    %1153 = vmatpush1.msra.mxu0 0.0
    %1154 = vmatprep.subr.mxu0 0.0
    %1155 = vmatpush1.msra.mxu0 0.0
    %1156 = vmatprep.subr.mxu0 0.0
    %1157 = vmatpush1.msra.mxu0 0.0
    %1158 = vmatprep.subr.mxu0 0.0
    %1159 = vmatpush1.msra.mxu0 0.0
    %1160 = vmatprep.subr.mxu0 0.0
    %1161 = vmatpush1.msra.mxu0 0.0
    %1162 = vmatprep.subr.mxu0 0.0
    %1163 = vmatpush1.msra.mxu0 0.0
    %1164 = vmatprep.subr.mxu0 0.0
    %1165 = vmatpush1.msra.mxu0 0.0
    %1166 = vmatprep.subr.mxu0 0.0
    %1167 = vmatpush1.msra.mxu0 0.0
    %1168 = vmatprep.subr.mxu0 0.0
    %1169 = vmatpush1.msra.mxu0 0.0
    %1170 = vmatprep.subr.mxu0 0.0
    %1171 = vmatpush1.msra.mxu0 0.0
    %1172 = vmatprep.subr.mxu0 0.0
    %1173 = vmatpush1.msra.mxu0 0.0
    %1174 = vmatprep.subr.mxu0 0.0
    %1175 = vmatpush1.msra.mxu0 0.0
    %1176 = vmatprep.subr.mxu0 0.0
    %1177 = vmatpush1.msra.mxu0 0.0
    %1178 = vmatprep.subr.mxu0 0.0
    %1179 = vmatpush1.msra.mxu0 0.0
    %1180 = vmatprep.subr.mxu0 0.0
    %1181 = vmatpush1.msra.mxu0 0.0
    %1182 = vmatprep.subr.mxu0 0.0
    %1183 = vmatpush1.msra.mxu0 0.0
    %1184 = vmatprep.subr.mxu0 0.0
    %1185 = vmatpush1.msra.mxu0 0.0
    %1186 = vmatprep.subr.mxu0 0.0
    %1187 = vmatpush1.msra.mxu0 0.0
    %1188 = vmatprep.subr.mxu0 0.0
    %1189 = vmatpush1.msra.mxu0 0.0
    %1190 = vmatprep.subr.mxu0 0.0
    %1191 = vmatpush1.msra.mxu0 0.0
    %1192 = vmatprep.subr.mxu0 0.0
    %1193 = vmatpush1.msra.mxu0 0.0
    %1194 = vmatprep.subr.mxu0 0.0
    %1195 = vmatpush1.msra.mxu0 0.0
    %1196 = vmatprep.subr.mxu0 0.0
    %1197 = vmatpush1.msra.mxu0 0.0
    %1198 = vmatprep.subr.mxu0 0.0
    %1199 = vmatpush1.msra.mxu0 0.0
    %1200 = vmatprep.subr.mxu0 0.0
    %1201 = vmatpush1.msra.mxu0 0.0
    %1202 = vmatprep.subr.mxu0 0.0
    %1203 = vmatpush1.msra.mxu0 0.0
    %1204 = vmatprep.mubr.f32.mxu0 0.0
    %1205 = vmatmul.mubr.f32.gmra.mrb[0].mxu0 %v1068
    %v1206 = vpop.f32.mrb[0].mxu0
    %v1207 = vadd.f32 0.0, %v1206
    %v1208 = vpop.f32.mrb[0].mxu0
    %1209 = vdwg.mxu0
    %v1210 = vadd.f32 %v597, %v1207
    %v1211 = vmul.f32 %v1210, %v71
    %v1212 = vtanh.pop %v1211
    %v1213 = vmul.f32 %v1212, %v71
    %v1214 = vadd.f32 %v1213, %v72
    %v1215 = vmul.f32 %v1214, %v1058
    %1217 = vrot.lane.b32.xlu0 %v1214, 64
    %v1218 = vpop.permute.xlu0 %1217
    %v1220 = vmul.f32 %v1214, %v1218
    %1222 = vrot.lane.b32.xlu0 %v1220, 32
    %v1223 = vpop.permute.xlu0 %1222
    %v1225 = vadd.f32 %v1215, %v1223
    %v1226 = vtanh.pop %v1225
    %1228 = vrot.lane.b32.xlu0 %v1226, 64
    %v1229 = vpop.permute.xlu0 %1228
    %v1231 = vmul.f32 %v1214, %v1229
    %1233 = vrot.lane.b32.xlu0 %v1231, 32
    %v1234 = vpop.permute.xlu0 %1233
    %v1235 = vsel %vm629, %v1234, 0
    %1237 = vmatprep.subr.mxu0 0.0
    %1238 = vmatpush1.msra.mxu0 %v624
    %1239 = vmatprep.subr.mxu0 0.0
    %1240 = vmatpush1.msra.mxu0 %v625
    %1241 = vmatprep.subr.mxu0 0.0
    %1242 = vmatpush1.msra.mxu0 %v626
    %1243 = vmatprep.subr.mxu0 0.0
    %1244 = vmatpush1.msra.mxu0 %v627
    %1245 = vmatprep.subr.mxu0 0.0
    %1246 = vmatpush1.msra.mxu0 0.0
    %1247 = vmatprep.subr.mxu0 0.0
    %1248 = vmatpush1.msra.mxu0 0.0
    %1249 = vmatprep.subr.mxu0 0.0
    %1250 = vmatpush1.msra.mxu0 0.0
    %1251 = vmatprep.subr.mxu0 0.0
    %1252 = vmatpush1.msra.mxu0 0.0
    %1253 = vmatprep.subr.mxu0 0.0
    %1254 = vmatpush1.msra.mxu0 0.0
    %1255 = vmatprep.subr.mxu0 0.0
    %1256 = vmatpush1.msra.mxu0 0.0
    %1257 = vmatprep.subr.mxu0 0.0
    %1258 = vmatpush1.msra.mxu0 0.0
    %1259 = vmatprep.subr.mxu0 0.0
    %1260 = vmatpush1.msra.mxu0 0.0
    %1261 = vmatprep.subr.mxu0 0.0
    %1262 = vmatpush1.msra.mxu0 0.0
    %1263 = vmatprep.subr.mxu0 0.0
    %1264 = vmatpush1.msra.mxu0 0.0
    %1265 = vmatprep.subr.mxu0 0.0
    %1266 = vmatpush1.msra.mxu0 0.0
    %1267 = vmatprep.subr.mxu0 0.0
    %1268 = vmatpush1.msra.mxu0 0.0
    %1269 = vmatprep.subr.mxu0 0.0
    %1270 = vmatpush1.msra.mxu0 0.0
    %1271 = vmatprep.subr.mxu0 0.0
    %1272 = vmatpush1.msra.mxu0 0.0
    %1273 = vmatprep.subr.mxu0 0.0
    %1274 = vmatpush1.msra.mxu0 0.0
    %1275 = vmatprep.subr.mxu0 0.0
    %1276 = vmatpush1.msra.mxu0 0.0
    %1277 = vmatprep.subr.mxu0 0.0
    %1278 = vmatpush1.msra.mxu0 0.0
    %1279 = vmatprep.subr.mxu0 0.0
    %1280 = vmatpush1.msra.mxu0 0.0
    %1281 = vmatprep.subr.mxu0 0.0
    %1282 = vmatpush1.msra.mxu0 0.0
    %1283 = vmatprep.subr.mxu0 0.0
    %1284 = vmatpush1.msra.mxu0 0.0
    %1285 = vmatprep.subr.mxu0 0.0
    %1286 = vmatpush1.msra.mxu0 0.0
    %1287 = vmatprep.subr.mxu0 0.0
    %1288 = vmatpush1.msra.mxu0 0.0
    %1289 = vmatprep.subr.mxu0 0.0
    %1290 = vmatpush1.msra.mxu0 0.0
    %1291 = vmatprep.subr.mxu0 0.0
    %1292 = vmatpush1.msra.mxu0 0.0
    %1293 = vmatprep.subr.mxu0 0.0
    %1294 = vmatpush1.msra.mxu0 0.0
    %1295 = vmatprep.subr.mxu0 0.0
    %1296 = vmatpush1.msra.mxu0 0.0
    %1297 = vmatprep.subr.mxu0 0.0
    %1298 = vmatpush1.msra.mxu0 0.0
    %1299 = vmatprep.subr.mxu0 0.0
    %1300 = vmatpush1.msra.mxu0 0.0
    %1301 = vmatprep.mubr.f32.mxu0 0.0
    %1302 = vmatmul.mubr.f32.gmra.mrb[0].mxu0 %v1235
    %v1303 = vpop.f32.mrb[0].mxu0
    %v1304 = vadd.f32 %v729, %v1303
    %v1305 = vpop.f32.mrb[0].mxu0
    %1306 = vdwg.mxu0
    %1307 = vmatprep.subr.mxu0 0.0
    %1308 = vmatpush1.msra.mxu0 %v620
    %1309 = vmatprep.subr.mxu0 0.0
    %1310 = vmatpush1.msra.mxu0 %v621
    %1311 = vmatprep.subr.mxu0 0.0
    %1312 = vmatpush1.msra.mxu0 %v622
    %1313 = vmatprep.subr.mxu0 0.0
    %1314 = vmatpush1.msra.mxu0 %v623
    %1315 = vmatprep.subr.mxu0 0.0
    %1316 = vmatpush1.msra.mxu0 0.0
    %1317 = vmatprep.subr.mxu0 0.0
    %1318 = vmatpush1.msra.mxu0 0.0
    %1319 = vmatprep.subr.mxu0 0.0
    %1320 = vmatpush1.msra.mxu0 0.0
    %1321 = vmatprep.subr.mxu0 0.0
    %1322 = vmatpush1.msra.mxu0 0.0
    %1323 = vmatprep.subr.mxu0 0.0
    %1324 = vmatpush1.msra.mxu0 0.0
    %1325 = vmatprep.subr.mxu0 0.0
    %1326 = vmatpush1.msra.mxu0 0.0
    %1327 = vmatprep.subr.mxu0 0.0
    %1328 = vmatpush1.msra.mxu0 0.0
    %1329 = vmatprep.subr.mxu0 0.0
    %1330 = vmatpush1.msra.mxu0 0.0
    %1331 = vmatprep.subr.mxu0 0.0
    %1332 = vmatpush1.msra.mxu0 0.0
    %1333 = vmatprep.subr.mxu0 0.0
    %1334 = vmatpush1.msra.mxu0 0.0
    %1335 = vmatprep.subr.mxu0 0.0
    %1336 = vmatpush1.msra.mxu0 0.0
    %1337 = vmatprep.subr.mxu0 0.0
    %1338 = vmatpush1.msra.mxu0 0.0
    %1339 = vmatprep.subr.mxu0 0.0
    %1340 = vmatpush1.msra.mxu0 0.0
    %1341 = vmatprep.subr.mxu0 0.0
    %1342 = vmatpush1.msra.mxu0 0.0
    %1343 = vmatprep.subr.mxu0 0.0
    %1344 = vmatpush1.msra.mxu0 0.0
    %1345 = vmatprep.subr.mxu0 0.0
    %1346 = vmatpush1.msra.mxu0 0.0
    %1347 = vmatprep.subr.mxu0 0.0
    %1348 = vmatpush1.msra.mxu0 0.0
    %1349 = vmatprep.subr.mxu0 0.0
    %1350 = vmatpush1.msra.mxu0 0.0
    %1351 = vmatprep.subr.mxu0 0.0
    %1352 = vmatpush1.msra.mxu0 0.0
    %1353 = vmatprep.subr.mxu0 0.0
    %1354 = vmatpush1.msra.mxu0 0.0
    %1355 = vmatprep.subr.mxu0 0.0
    %1356 = vmatpush1.msra.mxu0 0.0
    %1357 = vmatprep.subr.mxu0 0.0
    %1358 = vmatpush1.msra.mxu0 0.0
    %1359 = vmatprep.subr.mxu0 0.0
    %1360 = vmatpush1.msra.mxu0 0.0
    %1361 = vmatprep.subr.mxu0 0.0
    %1362 = vmatpush1.msra.mxu0 0.0
    %1363 = vmatprep.subr.mxu0 0.0
    %1364 = vmatpush1.msra.mxu0 0.0
    %1365 = vmatprep.subr.mxu0 0.0
    %1366 = vmatpush1.msra.mxu0 0.0
    %1367 = vmatprep.subr.mxu0 0.0
    %1368 = vmatpush1.msra.mxu0 0.0
    %1369 = vmatprep.subr.mxu0 0.0
    %1370 = vmatpush1.msra.mxu0 0.0
    %1371 = vmatprep.mubr.f32.mxu0 0.0
    %1372 = vmatmul.mubr.f32.gmra.mrb[0].mxu0 %v1235
    %v1373 = vpop.f32.mrb[0].mxu0
    %v1374 = vadd.f32 0.0, %v1373
    %v1375 = vpop.f32.mrb[0].mxu0
    %1376 = vdwg.mxu0
    %v1377 = vadd.f32 %v602, %v1374
    %v1378 = vmul.f32 %v1377, %v71
    %v1379 = vtanh.pop %v1378
    %v1380 = vmul.f32 %v1379, %v71
    %v1381 = vadd.f32 %v1380, %v72
    %v1382 = vmul.f32 %v1381, %v1225
    %1384 = vrot.lane.b32.xlu0 %v1381, 64
    %v1385 = vpop.permute.xlu0 %1384
    %v1387 = vmul.f32 %v1381, %v1385
    %1389 = vrot.lane.b32.xlu0 %v1387, 32
    %v1390 = vpop.permute.xlu0 %1389
    %v1392 = vadd.f32 %v1382, %v1390
    %v1393 = vtanh.pop %v1392
    %1395 = vrot.lane.b32.xlu0 %v1393, 64
    %v1396 = vpop.permute.xlu0 %1395
    %v1398 = vmul.f32 %v1381, %v1396
    %1400 = vrot.lane.b32.xlu0 %v1398, 32
    %v1401 = vpop.permute.xlu0 %1400
    %v1402 = vsel %vm629, %v1401, 0
    %1404 = vmatprep.subr.mxu0 0.0
    %1405 = vmatpush1.msra.mxu0 %v624
    %1406 = vmatprep.subr.mxu0 0.0
    %1407 = vmatpush1.msra.mxu0 %v625
    %1408 = vmatprep.subr.mxu0 0.0
    %1409 = vmatpush1.msra.mxu0 %v626
    %1410 = vmatprep.subr.mxu0 0.0
    %1411 = vmatpush1.msra.mxu0 %v627
    %1412 = vmatprep.subr.mxu0 0.0
    %1413 = vmatpush1.msra.mxu0 0.0
    %1414 = vmatprep.subr.mxu0 0.0
    %1415 = vmatpush1.msra.mxu0 0.0
    %1416 = vmatprep.subr.mxu0 0.0
    %1417 = vmatpush1.msra.mxu0 0.0
    %1418 = vmatprep.subr.mxu0 0.0
    %1419 = vmatpush1.msra.mxu0 0.0
    %1420 = vmatprep.subr.mxu0 0.0
    %1421 = vmatpush1.msra.mxu0 0.0
    %1422 = vmatprep.subr.mxu0 0.0
    %1423 = vmatpush1.msra.mxu0 0.0
    %1424 = vmatprep.subr.mxu0 0.0
    %1425 = vmatpush1.msra.mxu0 0.0
    %1426 = vmatprep.subr.mxu0 0.0
    %1427 = vmatpush1.msra.mxu0 0.0
    %1428 = vmatprep.subr.mxu0 0.0
    %1429 = vmatpush1.msra.mxu0 0.0
    %1430 = vmatprep.subr.mxu0 0.0
    %1431 = vmatpush1.msra.mxu0 0.0
    %1432 = vmatprep.subr.mxu0 0.0
    %1433 = vmatpush1.msra.mxu0 0.0
    %1434 = vmatprep.subr.mxu0 0.0
    %1435 = vmatpush1.msra.mxu0 0.0
    %1436 = vmatprep.subr.mxu0 0.0
    %1437 = vmatpush1.msra.mxu0 0.0
    %1438 = vmatprep.subr.mxu0 0.0
    %1439 = vmatpush1.msra.mxu0 0.0
    %1440 = vmatprep.subr.mxu0 0.0
    %1441 = vmatpush1.msra.mxu0 0.0
    %1442 = vmatprep.subr.mxu0 0.0
    %1443 = vmatpush1.msra.mxu0 0.0
    %1444 = vmatprep.subr.mxu0 0.0
    %1445 = vmatpush1.msra.mxu0 0.0
    %1446 = vmatprep.subr.mxu0 0.0
    %1447 = vmatpush1.msra.mxu0 0.0
    %1448 = vmatprep.subr.mxu0 0.0
    %1449 = vmatpush1.msra.mxu0 0.0
    %1450 = vmatprep.subr.mxu0 0.0
    %1451 = vmatpush1.msra.mxu0 0.0
    %1452 = vmatprep.subr.mxu0 0.0
    %1453 = vmatpush1.msra.mxu0 0.0
    %1454 = vmatprep.subr.mxu0 0.0
    %1455 = vmatpush1.msra.mxu0 0.0
    %1456 = vmatprep.subr.mxu0 0.0
    %1457 = vmatpush1.msra.mxu0 0.0
    %1458 = vmatprep.subr.mxu0 0.0
    %1459 = vmatpush1.msra.mxu0 0.0
    %1460 = vmatprep.subr.mxu0 0.0
    %1461 = vmatpush1.msra.mxu0 0.0
    %1462 = vmatprep.subr.mxu0 0.0
    %1463 = vmatpush1.msra.mxu0 0.0
    %1464 = vmatprep.subr.mxu0 0.0
    %1465 = vmatpush1.msra.mxu0 0.0
    %1466 = vmatprep.subr.mxu0 0.0
    %1467 = vmatpush1.msra.mxu0 0.0
    %1468 = vmatprep.mubr.f32.mxu0 0.0
    %1469 = vmatmul.mubr.f32.gmra.mrb[0].mxu0 %v1402
    %v1470 = vpop.f32.mrb[0].mxu0
    %v1471 = vadd.f32 %v729, %v1470
    %v1472 = vpop.f32.mrb[0].mxu0
    %1473 = vdwg.mxu0
    %1474 = vmatprep.subr.mxu0 0.0
    %1475 = vmatpush1.msra.mxu0 %v620
    %1476 = vmatprep.subr.mxu0 0.0
    %1477 = vmatpush1.msra.mxu0 %v621
    %1478 = vmatprep.subr.mxu0 0.0
    %1479 = vmatpush1.msra.mxu0 %v622
    %1480 = vmatprep.subr.mxu0 0.0
    %1481 = vmatpush1.msra.mxu0 %v623
    %1482 = vmatprep.subr.mxu0 0.0
    %1483 = vmatpush1.msra.mxu0 0.0
    %1484 = vmatprep.subr.mxu0 0.0
    %1485 = vmatpush1.msra.mxu0 0.0
    %1486 = vmatprep.subr.mxu0 0.0
    %1487 = vmatpush1.msra.mxu0 0.0
    %1488 = vmatprep.subr.mxu0 0.0
    %1489 = vmatpush1.msra.mxu0 0.0
    %1490 = vmatprep.subr.mxu0 0.0
    %1491 = vmatpush1.msra.mxu0 0.0
    %1492 = vmatprep.subr.mxu0 0.0
    %1493 = vmatpush1.msra.mxu0 0.0
    %1494 = vmatprep.subr.mxu0 0.0
    %1495 = vmatpush1.msra.mxu0 0.0
    %1496 = vmatprep.subr.mxu0 0.0
    %1497 = vmatpush1.msra.mxu0 0.0
    %1498 = vmatprep.subr.mxu0 0.0
    %1499 = vmatpush1.msra.mxu0 0.0
    %1500 = vmatprep.subr.mxu0 0.0
    %1501 = vmatpush1.msra.mxu0 0.0
    %1502 = vmatprep.subr.mxu0 0.0
    %1503 = vmatpush1.msra.mxu0 0.0
    %1504 = vmatprep.subr.mxu0 0.0
    %1505 = vmatpush1.msra.mxu0 0.0
    %1506 = vmatprep.subr.mxu0 0.0
    %1507 = vmatpush1.msra.mxu0 0.0
    %1508 = vmatprep.subr.mxu0 0.0
    %1509 = vmatpush1.msra.mxu0 0.0
    %1510 = vmatprep.subr.mxu0 0.0
    %1511 = vmatpush1.msra.mxu0 0.0
    %1512 = vmatprep.subr.mxu0 0.0
    %1513 = vmatpush1.msra.mxu0 0.0
    %1514 = vmatprep.subr.mxu0 0.0
    %1515 = vmatpush1.msra.mxu0 0.0
    %1516 = vmatprep.subr.mxu0 0.0
    %1517 = vmatpush1.msra.mxu0 0.0
    %1518 = vmatprep.subr.mxu0 0.0
    %1519 = vmatpush1.msra.mxu0 0.0
    %1520 = vmatprep.subr.mxu0 0.0
    %1521 = vmatpush1.msra.mxu0 0.0
    %1522 = vmatprep.subr.mxu0 0.0
    %1523 = vmatpush1.msra.mxu0 0.0
    %1524 = vmatprep.subr.mxu0 0.0
    %1525 = vmatpush1.msra.mxu0 0.0
    %1526 = vmatprep.subr.mxu0 0.0
    %1527 = vmatpush1.msra.mxu0 0.0
    %1528 = vmatprep.subr.mxu0 0.0
    %1529 = vmatpush1.msra.mxu0 0.0
    %1530 = vmatprep.subr.mxu0 0.0
    %1531 = vmatpush1.msra.mxu0 0.0
    %1532 = vmatprep.subr.mxu0 0.0
    %1533 = vmatpush1.msra.mxu0 0.0
    %1534 = vmatprep.subr.mxu0 0.0
    %1535 = vmatpush1.msra.mxu0 0.0
    %1536 = vmatprep.subr.mxu0 0.0
    %1537 = vmatpush1.msra.mxu0 0.0
    %1538 = vmatprep.mubr.f32.mxu0 0.0
    %1539 = vmatmul.mubr.f32.gmra.mrb[0].mxu0 %v1402
    %v1540 = vpop.f32.mrb[0].mxu0
    %v1541 = vadd.f32 0.0, %v1540
    %v1542 = vpop.f32.mrb[0].mxu0
    %1543 = vdwg.mxu0
    %v1544 = vadd.f32 %v607, %v1541
    %v1545 = vmul.f32 %v1544, %v71
    %v1546 = vtanh.pop %v1545
    %v1547 = vmul.f32 %v1546, %v71
    %v1548 = vadd.f32 %v1547, %v72
    %v1549 = vmul.f32 %v1548, %v1392
    %1551 = vrot.lane.b32.xlu0 %v1548, 64
    %v1552 = vpop.permute.xlu0 %1551
    %v1554 = vmul.f32 %v1548, %v1552
    %1556 = vrot.lane.b32.xlu0 %v1554, 32
    %v1557 = vpop.permute.xlu0 %1556
    %v1559 = vadd.f32 %v1549, %v1557
    %v1560 = vtanh.pop %v1559
    %1562 = vrot.lane.b32.xlu0 %v1560, 64
    %v1563 = vpop.permute.xlu0 %1562
    %v1565 = vmul.f32 %v1548, %v1563
    %1567 = vrot.lane.b32.xlu0 %v1565, 32
    %v1568 = vpop.permute.xlu0 %1567
    %v1569 = vsel %vm629, %v1568, 0
    %1571 = vmatprep.subr.mxu0 0.0
    %1572 = vmatpush1.msra.mxu0 %v624
    %1573 = vmatprep.subr.mxu0 0.0
    %1574 = vmatpush1.msra.mxu0 %v625
    %1575 = vmatprep.subr.mxu0 0.0
    %1576 = vmatpush1.msra.mxu0 %v626
    %1577 = vmatprep.subr.mxu0 0.0
    %1578 = vmatpush1.msra.mxu0 %v627
    %1579 = vmatprep.subr.mxu0 0.0
    %1580 = vmatpush1.msra.mxu0 0.0
    %1581 = vmatprep.subr.mxu0 0.0
    %1582 = vmatpush1.msra.mxu0 0.0
    %1583 = vmatprep.subr.mxu0 0.0
    %1584 = vmatpush1.msra.mxu0 0.0
    %1585 = vmatprep.subr.mxu0 0.0
    %1586 = vmatpush1.msra.mxu0 0.0
    %1587 = vmatprep.subr.mxu0 0.0
    %1588 = vmatpush1.msra.mxu0 0.0
    %1589 = vmatprep.subr.mxu0 0.0
    %1590 = vmatpush1.msra.mxu0 0.0
    %1591 = vmatprep.subr.mxu0 0.0
    %1592 = vmatpush1.msra.mxu0 0.0
    %1593 = vmatprep.subr.mxu0 0.0
    %1594 = vmatpush1.msra.mxu0 0.0
    %1595 = vmatprep.subr.mxu0 0.0
    %1596 = vmatpush1.msra.mxu0 0.0
    %1597 = vmatprep.subr.mxu0 0.0
    %1598 = vmatpush1.msra.mxu0 0.0
    %1599 = vmatprep.subr.mxu0 0.0
    %1600 = vmatpush1.msra.mxu0 0.0
    %1601 = vmatprep.subr.mxu0 0.0
    %1602 = vmatpush1.msra.mxu0 0.0
    %1603 = vmatprep.subr.mxu0 0.0
    %1604 = vmatpush1.msra.mxu0 0.0
    %1605 = vmatprep.subr.mxu0 0.0
    %1606 = vmatpush1.msra.mxu0 0.0
    %1607 = vmatprep.subr.mxu0 0.0
    %1608 = vmatpush1.msra.mxu0 0.0
    %1609 = vmatprep.subr.mxu0 0.0
    %1610 = vmatpush1.msra.mxu0 0.0
    %1611 = vmatprep.subr.mxu0 0.0
    %1612 = vmatpush1.msra.mxu0 0.0
    %1613 = vmatprep.subr.mxu0 0.0
    %1614 = vmatpush1.msra.mxu0 0.0
    %1615 = vmatprep.subr.mxu0 0.0
    %1616 = vmatpush1.msra.mxu0 0.0
    %1617 = vmatprep.subr.mxu0 0.0
    %1618 = vmatpush1.msra.mxu0 0.0
    %1619 = vmatprep.subr.mxu0 0.0
    %1620 = vmatpush1.msra.mxu0 0.0
    %1621 = vmatprep.subr.mxu0 0.0
    %1622 = vmatpush1.msra.mxu0 0.0
    %1623 = vmatprep.subr.mxu0 0.0
    %1624 = vmatpush1.msra.mxu0 0.0
    %1625 = vmatprep.subr.mxu0 0.0
    %1626 = vmatpush1.msra.mxu0 0.0
    %1627 = vmatprep.subr.mxu0 0.0
    %1628 = vmatpush1.msra.mxu0 0.0
    %1629 = vmatprep.subr.mxu0 0.0
    %1630 = vmatpush1.msra.mxu0 0.0
    %1631 = vmatprep.subr.mxu0 0.0
    %1632 = vmatpush1.msra.mxu0 0.0
    %1633 = vmatprep.subr.mxu0 0.0
    %1634 = vmatpush1.msra.mxu0 0.0
    %1635 = vmatprep.mubr.f32.mxu0 0.0
    %1636 = vmatmul.mubr.f32.gmra.mrb[0].mxu0 %v1569
    %v1637 = vpop.f32.mrb[0].mxu0
    %v1638 = vadd.f32 %v729, %v1637
    %v1639 = vpop.f32.mrb[0].mxu0
    %1640 = vdwg.mxu0
    %1641 = vmatprep.subr.mxu0 0.0
    %1642 = vmatpush1.msra.mxu0 %v620
    %1643 = vmatprep.subr.mxu0 0.0
    %1644 = vmatpush1.msra.mxu0 %v621
    %1645 = vmatprep.subr.mxu0 0.0
    %1646 = vmatpush1.msra.mxu0 %v622
    %1647 = vmatprep.subr.mxu0 0.0
    %1648 = vmatpush1.msra.mxu0 %v623
    %1649 = vmatprep.subr.mxu0 0.0
    %1650 = vmatpush1.msra.mxu0 0.0
    %1651 = vmatprep.subr.mxu0 0.0
    %1652 = vmatpush1.msra.mxu0 0.0
    %1653 = vmatprep.subr.mxu0 0.0
    %1654 = vmatpush1.msra.mxu0 0.0
    %1655 = vmatprep.subr.mxu0 0.0
    %1656 = vmatpush1.msra.mxu0 0.0
    %1657 = vmatprep.subr.mxu0 0.0
    %1658 = vmatpush1.msra.mxu0 0.0
    %1659 = vmatprep.subr.mxu0 0.0
    %1660 = vmatpush1.msra.mxu0 0.0
    %1661 = vmatprep.subr.mxu0 0.0
    %1662 = vmatpush1.msra.mxu0 0.0
    %1663 = vmatprep.subr.mxu0 0.0
    %1664 = vmatpush1.msra.mxu0 0.0
    %1665 = vmatprep.subr.mxu0 0.0
    %1666 = vmatpush1.msra.mxu0 0.0
    %1667 = vmatprep.subr.mxu0 0.0
    %1668 = vmatpush1.msra.mxu0 0.0
    %1669 = vmatprep.subr.mxu0 0.0
    %1670 = vmatpush1.msra.mxu0 0.0
    %1671 = vmatprep.subr.mxu0 0.0
    %1672 = vmatpush1.msra.mxu0 0.0
    %1673 = vmatprep.subr.mxu0 0.0
    %1674 = vmatpush1.msra.mxu0 0.0
    %1675 = vmatprep.subr.mxu0 0.0
    %1676 = vmatpush1.msra.mxu0 0.0
    %1677 = vmatprep.subr.mxu0 0.0
    %1678 = vmatpush1.msra.mxu0 0.0
    %1679 = vmatprep.subr.mxu0 0.0
    %1680 = vmatpush1.msra.mxu0 0.0
    %1681 = vmatprep.subr.mxu0 0.0
    %1682 = vmatpush1.msra.mxu0 0.0
    %1683 = vmatprep.subr.mxu0 0.0
    %1684 = vmatpush1.msra.mxu0 0.0
    %1685 = vmatprep.subr.mxu0 0.0
    %1686 = vmatpush1.msra.mxu0 0.0
    %1687 = vmatprep.subr.mxu0 0.0
    %1688 = vmatpush1.msra.mxu0 0.0
    %1689 = vmatprep.subr.mxu0 0.0
    %1690 = vmatpush1.msra.mxu0 0.0
    %1691 = vmatprep.subr.mxu0 0.0
    %1692 = vmatpush1.msra.mxu0 0.0
    %1693 = vmatprep.subr.mxu0 0.0
    %1694 = vmatpush1.msra.mxu0 0.0
    %1695 = vmatprep.subr.mxu0 0.0
    %1696 = vmatpush1.msra.mxu0 0.0
    %1697 = vmatprep.subr.mxu0 0.0
    %1698 = vmatpush1.msra.mxu0 0.0
    %1699 = vmatprep.subr.mxu0 0.0
    %1700 = vmatpush1.msra.mxu0 0.0
    %1701 = vmatprep.subr.mxu0 0.0
    %1702 = vmatpush1.msra.mxu0 0.0
    %1703 = vmatprep.subr.mxu0 0.0
    %1704 = vmatpush1.msra.mxu0 0.0
    %1705 = vmatprep.mubr.f32.mxu0 0.0
    %1706 = vmatmul.mubr.f32.gmra.mrb[0].mxu0 %v1569
    %v1707 = vpop.f32.mrb[0].mxu0
    %v1708 = vadd.f32 0.0, %v1707
    %v1709 = vpop.f32.mrb[0].mxu0
    %1710 = vdwg.mxu0
    %v1711 = vadd.f32 %v612, %v1708
    %v1712 = vmul.f32 %v1711, %v71
    %v1713 = vtanh.pop %v1712
    %v1714 = vmul.f32 %v1713, %v71
    %v1715 = vadd.f32 %v1714, %v72
    %v1716 = vmul.f32 %v1715, %v1559
    %1718 = vrot.lane.b32.xlu0 %v1715, 64
    %v1719 = vpop.permute.xlu0 %1718
    %v1721 = vmul.f32 %v1715, %v1719
    %1723 = vrot.lane.b32.xlu0 %v1721, 32
    %v1724 = vpop.permute.xlu0 %1723
    %v1726 = vadd.f32 %v1716, %v1724
    %v1727 = vtanh.pop %v1726
    %1729 = vrot.lane.b32.xlu0 %v1727, 64
    %v1730 = vpop.permute.xlu0 %1729
    %v1732 = vmul.f32 %v1715, %v1730
    %1734 = vrot.lane.b32.xlu0 %v1732, 32
    %v1735 = vpop.permute.xlu0 %1734
    %v1736 = vsel %vm629, %v1735, 0
    %1738 = vmatprep.subr.mxu0 0.0
    %1739 = vmatpush1.msra.mxu0 %v624
    %1740 = vmatprep.subr.mxu0 0.0
    %1741 = vmatpush1.msra.mxu0 %v625
    %1742 = vmatprep.subr.mxu0 0.0
    %1743 = vmatpush1.msra.mxu0 %v626
    %1744 = vmatprep.subr.mxu0 0.0
    %1745 = vmatpush1.msra.mxu0 %v627
    %1746 = vmatprep.subr.mxu0 0.0
    %1747 = vmatpush1.msra.mxu0 0.0
    %1748 = vmatprep.subr.mxu0 0.0
    %1749 = vmatpush1.msra.mxu0 0.0
    %1750 = vmatprep.subr.mxu0 0.0
    %1751 = vmatpush1.msra.mxu0 0.0
    %1752 = vmatprep.subr.mxu0 0.0
    %1753 = vmatpush1.msra.mxu0 0.0
    %1754 = vmatprep.subr.mxu0 0.0
    %1755 = vmatpush1.msra.mxu0 0.0
    %1756 = vmatprep.subr.mxu0 0.0
    %1757 = vmatpush1.msra.mxu0 0.0
    %1758 = vmatprep.subr.mxu0 0.0
    %1759 = vmatpush1.msra.mxu0 0.0
    %1760 = vmatprep.subr.mxu0 0.0
    %1761 = vmatpush1.msra.mxu0 0.0
    %1762 = vmatprep.subr.mxu0 0.0
    %1763 = vmatpush1.msra.mxu0 0.0
    %1764 = vmatprep.subr.mxu0 0.0
    %1765 = vmatpush1.msra.mxu0 0.0
    %1766 = vmatprep.subr.mxu0 0.0
    %1767 = vmatpush1.msra.mxu0 0.0
    %1768 = vmatprep.subr.mxu0 0.0
    %1769 = vmatpush1.msra.mxu0 0.0
    %1770 = vmatprep.subr.mxu0 0.0
    %1771 = vmatpush1.msra.mxu0 0.0
    %1772 = vmatprep.subr.mxu0 0.0
    %1773 = vmatpush1.msra.mxu0 0.0
    %1774 = vmatprep.subr.mxu0 0.0
    %1775 = vmatpush1.msra.mxu0 0.0
    %1776 = vmatprep.subr.mxu0 0.0
    %1777 = vmatpush1.msra.mxu0 0.0
    %1778 = vmatprep.subr.mxu0 0.0
    %1779 = vmatpush1.msra.mxu0 0.0
    %1780 = vmatprep.subr.mxu0 0.0
    %1781 = vmatpush1.msra.mxu0 0.0
    %1782 = vmatprep.subr.mxu0 0.0
    %1783 = vmatpush1.msra.mxu0 0.0
    %1784 = vmatprep.subr.mxu0 0.0
    %1785 = vmatpush1.msra.mxu0 0.0
    %1786 = vmatprep.subr.mxu0 0.0
    %1787 = vmatpush1.msra.mxu0 0.0
    %1788 = vmatprep.subr.mxu0 0.0
    %1789 = vmatpush1.msra.mxu0 0.0
    %1790 = vmatprep.subr.mxu0 0.0
    %1791 = vmatpush1.msra.mxu0 0.0
    %1792 = vmatprep.subr.mxu0 0.0
    %1793 = vmatpush1.msra.mxu0 0.0
    %1794 = vmatprep.subr.mxu0 0.0
    %1795 = vmatpush1.msra.mxu0 0.0
    %1796 = vmatprep.subr.mxu0 0.0
    %1797 = vmatpush1.msra.mxu0 0.0
    %1798 = vmatprep.subr.mxu0 0.0
    %1799 = vmatpush1.msra.mxu0 0.0
    %1800 = vmatprep.subr.mxu0 0.0
    %1801 = vmatpush1.msra.mxu0 0.0
    %1802 = vmatprep.mubr.f32.mxu0 0.0
    %1803 = vmatmul.mubr.f32.gmra.mrb[0].mxu0 %v1736
    %v1804 = vpop.f32.mrb[0].mxu0
    %v1805 = vadd.f32 %v729, %v1804
    %v1806 = vpop.f32.mrb[0].mxu0
    %1807 = vdwg.mxu0
    %1808 = vmatprep.subr.mxu0 0.0
    %1809 = vmatpush1.msra.mxu0 %v620
    %1810 = vmatprep.subr.mxu0 0.0
    %1811 = vmatpush1.msra.mxu0 %v621
    %1812 = vmatprep.subr.mxu0 0.0
    %1813 = vmatpush1.msra.mxu0 %v622
    %1814 = vmatprep.subr.mxu0 0.0
    %1815 = vmatpush1.msra.mxu0 %v623
    %1816 = vmatprep.subr.mxu0 0.0
    %1817 = vmatpush1.msra.mxu0 0.0
    %1818 = vmatprep.subr.mxu0 0.0
    %1819 = vmatpush1.msra.mxu0 0.0
    %1820 = vmatprep.subr.mxu0 0.0
    %1821 = vmatpush1.msra.mxu0 0.0
    %1822 = vmatprep.subr.mxu0 0.0
    %1823 = vmatpush1.msra.mxu0 0.0
    %1824 = vmatprep.subr.mxu0 0.0
    %1825 = vmatpush1.msra.mxu0 0.0
    %1826 = vmatprep.subr.mxu0 0.0
    %1827 = vmatpush1.msra.mxu0 0.0
    %1828 = vmatprep.subr.mxu0 0.0
    %1829 = vmatpush1.msra.mxu0 0.0
    %1830 = vmatprep.subr.mxu0 0.0
    %1831 = vmatpush1.msra.mxu0 0.0
    %1832 = vmatprep.subr.mxu0 0.0
    %1833 = vmatpush1.msra.mxu0 0.0
    %1834 = vmatprep.subr.mxu0 0.0
    %1835 = vmatpush1.msra.mxu0 0.0
    %1836 = vmatprep.subr.mxu0 0.0
    %1837 = vmatpush1.msra.mxu0 0.0
    %1838 = vmatprep.subr.mxu0 0.0
    %1839 = vmatpush1.msra.mxu0 0.0
    %1840 = vmatprep.subr.mxu0 0.0
    %1841 = vmatpush1.msra.mxu0 0.0
    %1842 = vmatprep.subr.mxu0 0.0
    %1843 = vmatpush1.msra.mxu0 0.0
    %1844 = vmatprep.subr.mxu0 0.0
    %1845 = vmatpush1.msra.mxu0 0.0
    %1846 = vmatprep.subr.mxu0 0.0
    %1847 = vmatpush1.msra.mxu0 0.0
    %1848 = vmatprep.subr.mxu0 0.0
    %1849 = vmatpush1.msra.mxu0 0.0
    %1850 = vmatprep.subr.mxu0 0.0
    %1851 = vmatpush1.msra.mxu0 0.0
    %1852 = vmatprep.subr.mxu0 0.0
    %1853 = vmatpush1.msra.mxu0 0.0
    %1854 = vmatprep.subr.mxu0 0.0
    %1855 = vmatpush1.msra.mxu0 0.0
    %1856 = vmatprep.subr.mxu0 0.0
    %1857 = vmatpush1.msra.mxu0 0.0
    %1858 = vmatprep.subr.mxu0 0.0
    %1859 = vmatpush1.msra.mxu0 0.0
    %1860 = vmatprep.subr.mxu0 0.0
    %1861 = vmatpush1.msra.mxu0 0.0
    %1862 = vmatprep.subr.mxu0 0.0
    %1863 = vmatpush1.msra.mxu0 0.0
    %1864 = vmatprep.subr.mxu0 0.0
    %1865 = vmatpush1.msra.mxu0 0.0
    %1866 = vmatprep.subr.mxu0 0.0
    %1867 = vmatpush1.msra.mxu0 0.0
    %1868 = vmatprep.subr.mxu0 0.0
    %1869 = vmatpush1.msra.mxu0 0.0
    %1870 = vmatprep.subr.mxu0 0.0
    %1871 = vmatpush1.msra.mxu0 0.0
    %1872 = vmatprep.mubr.f32.mxu0 0.0
    %1873 = vmatmul.mubr.f32.gmra.mrb[0].mxu0 %v1736
    %v1874 = vpop.f32.mrb[0].mxu0
    %v1875 = vadd.f32 0.0, %v1874
    %v1876 = vpop.f32.mrb[0].mxu0
    %1877 = vdwg.mxu0
    %v1878 = vadd.f32 %v617, %v1875
    %v1879 = vmul.f32 %v1878, %v71
    %v1880 = vtanh.pop %v1879
    %v1881 = vmul.f32 %v1880, %v71
    %v1882 = vadd.f32 %v1881, %v72
    %v1883 = vmul.f32 %v1882, %v1726
    %1885 = vrot.lane.b32.xlu0 %v1882, 64
    %v1886 = vpop.permute.xlu0 %1885
    %v1888 = vmul.f32 %v1882, %v1886
    %1890 = vrot.lane.b32.xlu0 %v1888, 32
    %v1891 = vpop.permute.xlu0 %1890
    %v1893 = vadd.f32 %v1883, %v1891
    %v1894 = vtanh.pop %v1893
    %1896 = vrot.lane.b32.xlu0 %v1894, 64
    %v1897 = vpop.permute.xlu0 %1896
    %v1899 = vmul.f32 %v1882, %v1897
    %1901 = vrot.lane.b32.xlu0 %v1899, 32
    %v1902 = vpop.permute.xlu0 %1901
    %v1903 = vsel %vm629, %v1902, 0
    %1905 = vmatprep.subr.mxu0 0.0
    %1906 = vmatpush1.msra.mxu0 %v624
    %1907 = vmatprep.subr.mxu0 0.0
    %1908 = vmatpush1.msra.mxu0 %v625
    %1909 = vmatprep.subr.mxu0 0.0
    %1910 = vmatpush1.msra.mxu0 %v626
    %1911 = vmatprep.subr.mxu0 0.0
    %1912 = vmatpush1.msra.mxu0 %v627
    %1913 = vmatprep.subr.mxu0 0.0
    %1914 = vmatpush1.msra.mxu0 0.0
    %1915 = vmatprep.subr.mxu0 0.0
    %1916 = vmatpush1.msra.mxu0 0.0
    %1917 = vmatprep.subr.mxu0 0.0
    %1918 = vmatpush1.msra.mxu0 0.0
    %1919 = vmatprep.subr.mxu0 0.0
    %1920 = vmatpush1.msra.mxu0 0.0
    %1921 = vmatprep.subr.mxu0 0.0
    %1922 = vmatpush1.msra.mxu0 0.0
    %1923 = vmatprep.subr.mxu0 0.0
    %1924 = vmatpush1.msra.mxu0 0.0
    %1925 = vmatprep.subr.mxu0 0.0
    %1926 = vmatpush1.msra.mxu0 0.0
    %1927 = vmatprep.subr.mxu0 0.0
    %1928 = vmatpush1.msra.mxu0 0.0
    %1929 = vmatprep.subr.mxu0 0.0
    %1930 = vmatpush1.msra.mxu0 0.0
    %1931 = vmatprep.subr.mxu0 0.0
    %1932 = vmatpush1.msra.mxu0 0.0
    %1933 = vmatprep.subr.mxu0 0.0
    %1934 = vmatpush1.msra.mxu0 0.0
    %1935 = vmatprep.subr.mxu0 0.0
    %1936 = vmatpush1.msra.mxu0 0.0
    %1937 = vmatprep.subr.mxu0 0.0
    %1938 = vmatpush1.msra.mxu0 0.0
    %1939 = vmatprep.subr.mxu0 0.0
    %1940 = vmatpush1.msra.mxu0 0.0
    %1941 = vmatprep.subr.mxu0 0.0
    %1942 = vmatpush1.msra.mxu0 0.0
    %1943 = vmatprep.subr.mxu0 0.0
    %1944 = vmatpush1.msra.mxu0 0.0
    %1945 = vmatprep.subr.mxu0 0.0
    %1946 = vmatpush1.msra.mxu0 0.0
    %1947 = vmatprep.subr.mxu0 0.0
    %1948 = vmatpush1.msra.mxu0 0.0
    %1949 = vmatprep.subr.mxu0 0.0
    %1950 = vmatpush1.msra.mxu0 0.0
    %1951 = vmatprep.subr.mxu0 0.0
    %1952 = vmatpush1.msra.mxu0 0.0
    %1953 = vmatprep.subr.mxu0 0.0
    %1954 = vmatpush1.msra.mxu0 0.0
    %1955 = vmatprep.subr.mxu0 0.0
    %1956 = vmatpush1.msra.mxu0 0.0
    %1957 = vmatprep.subr.mxu0 0.0
    %1958 = vmatpush1.msra.mxu0 0.0
    %1959 = vmatprep.subr.mxu0 0.0
    %1960 = vmatpush1.msra.mxu0 0.0
    %1961 = vmatprep.subr.mxu0 0.0
    %1962 = vmatpush1.msra.mxu0 0.0
    %1963 = vmatprep.subr.mxu0 0.0
    %1964 = vmatpush1.msra.mxu0 0.0
    %1965 = vmatprep.subr.mxu0 0.0
    %1966 = vmatpush1.msra.mxu0 0.0
    %1967 = vmatprep.subr.mxu0 0.0
    %1968 = vmatpush1.msra.mxu0 0.0
    %1969 = vmatprep.mubr.f32.mxu0 0.0
    %1970 = vmatmul.mubr.f32.gmra.mrb[0].mxu0 %v1903
    %v1971 = vpop.f32.mrb[0].mxu0
    %v1972 = vadd.f32 %v729, %v1971
    %v1973 = vpop.f32.mrb[0].mxu0
    %1974 = vdwg.mxu0
    %v1975 = vld [vmem:[%s7] sm:$0xff]
    %v1976 = vld [vmem:[%s7 + $0x8] sm:$0xff]
    %v1977 = vld [vmem:[%s7 + $0x10] sm:$0xff]
    %v1978 = vld [vmem:[%s7 + $0x18] sm:$0xff]
    %1979 = vmatprep.subr.mxu0 0.0
    %1980 = vmatpush1.msra.mxu0 %v1975
    %1981 = vmatprep.subr.mxu0 0.0
    %1982 = vmatpush1.msra.mxu0 %v1976
    %1983 = vmatprep.subr.mxu0 0.0
    %1984 = vmatpush1.msra.mxu0 %v1977
    %1985 = vmatprep.subr.mxu0 0.0
    %1986 = vmatpush1.msra.mxu0 %v1978
    %1987 = vmatprep.subr.mxu0 0.0
    %1988 = vmatpush1.msra.mxu0 0.0
    %1989 = vmatprep.subr.mxu0 0.0
    %1990 = vmatpush1.msra.mxu0 0.0
    %1991 = vmatprep.subr.mxu0 0.0
    %1992 = vmatpush1.msra.mxu0 0.0
    %1993 = vmatprep.subr.mxu0 0.0
    %1994 = vmatpush1.msra.mxu0 0.0
    %1995 = vmatprep.subr.mxu0 0.0
    %1996 = vmatpush1.msra.mxu0 0.0
    %1997 = vmatprep.subr.mxu0 0.0
    %1998 = vmatpush1.msra.mxu0 0.0
    %1999 = vmatprep.subr.mxu0 0.0
    %2000 = vmatpush1.msra.mxu0 0.0
    %2001 = vmatprep.subr.mxu0 0.0
    %2002 = vmatpush1.msra.mxu0 0.0
    %2003 = vmatprep.subr.mxu0 0.0
    %2004 = vmatpush1.msra.mxu0 0.0
    %2005 = vmatprep.subr.mxu0 0.0
    %2006 = vmatpush1.msra.mxu0 0.0
    %2007 = vmatprep.subr.mxu0 0.0
    %2008 = vmatpush1.msra.mxu0 0.0
    %2009 = vmatprep.subr.mxu0 0.0
    %2010 = vmatpush1.msra.mxu0 0.0
    %2011 = vmatprep.subr.mxu0 0.0
    %2012 = vmatpush1.msra.mxu0 0.0
    %2013 = vmatprep.subr.mxu0 0.0
    %2014 = vmatpush1.msra.mxu0 0.0
    %2015 = vmatprep.subr.mxu0 0.0
    %2016 = vmatpush1.msra.mxu0 0.0
    %2017 = vmatprep.subr.mxu0 0.0
    %2018 = vmatpush1.msra.mxu0 0.0
    %2019 = vmatprep.subr.mxu0 0.0
    %2020 = vmatpush1.msra.mxu0 0.0
    %2021 = vmatprep.subr.mxu0 0.0
    %2022 = vmatpush1.msra.mxu0 0.0
    %2023 = vmatprep.subr.mxu0 0.0
    %2024 = vmatpush1.msra.mxu0 0.0
    %2025 = vmatprep.subr.mxu0 0.0
    %2026 = vmatpush1.msra.mxu0 0.0
    %2027 = vmatprep.subr.mxu0 0.0
    %2028 = vmatpush1.msra.mxu0 0.0
    %2029 = vmatprep.subr.mxu0 0.0
    %2030 = vmatpush1.msra.mxu0 0.0
    %2031 = vmatprep.subr.mxu0 0.0
    %2032 = vmatpush1.msra.mxu0 0.0
    %2033 = vmatprep.subr.mxu0 0.0
    %2034 = vmatpush1.msra.mxu0 0.0
    %2035 = vmatprep.subr.mxu0 0.0
    %2036 = vmatpush1.msra.mxu0 0.0
    %2037 = vmatprep.subr.mxu0 0.0
    %2038 = vmatpush1.msra.mxu0 0.0
    %2039 = vmatprep.subr.mxu0 0.0
    %2040 = vmatpush1.msra.mxu0 0.0
    %2041 = vmatprep.subr.mxu0 0.0
    %2042 = vmatpush1.msra.mxu0 0.0
    %2043 = vmatprep.mubr.f32.mxu0 0.0
    %2044 = vmatmul.mubr.f32.gmra.mrb[0].mxu0 %v631
    %v2045 = vpop.f32.mrb[0].mxu0
    %v2046 = vadd.f32 0.0, %v2045
    %v2047 = vpop.f32.mrb[0].mxu0
    %2048 = vdwg.mxu0
    %v2049 = vadd.f32 %v803, %v2046
    %v2050 = vmul.f32 %v2049, %v71
    %v2051 = vtanh.pop %v2050
    %v2052 = vmul.f32 %v2051, %v71
    %v2053 = vadd.f32 %v2052, %v72
    %v2054 = vmul.f32 %v2053, 0.0
    %2056 = vrot.lane.b32.xlu0 %v2053, 64
    %v2057 = vpop.permute.xlu0 %2056
    %v2059 = vmul.f32 %v2053, %v2057
    %2061 = vrot.lane.b32.xlu0 %v2059, 32
    %v2062 = vpop.permute.xlu0 %2061
    %v2064 = vadd.f32 %v2054, %v2062
    %v2065 = vtanh.pop %v2064
    %2067 = vrot.lane.b32.xlu0 %v2065, 64
    %v2068 = vpop.permute.xlu0 %2067
    %v2070 = vmul.f32 %v2053, %v2068
    %2072 = vrot.lane.b32.xlu0 %v2070, 32
    %v2073 = vpop.permute.xlu0 %2072
    %v2074 = vsel %vm629, %v2073, 0
    %2076 = vmatprep.subr.mxu0 0.0
    %2077 = vmatpush1.msra.mxu0 %v1975
    %2078 = vmatprep.subr.mxu0 0.0
    %2079 = vmatpush1.msra.mxu0 %v1976
    %2080 = vmatprep.subr.mxu0 0.0
    %2081 = vmatpush1.msra.mxu0 %v1977
    %2082 = vmatprep.subr.mxu0 0.0
    %2083 = vmatpush1.msra.mxu0 %v1978
    %2084 = vmatprep.subr.mxu0 0.0
    %2085 = vmatpush1.msra.mxu0 0.0
    %2086 = vmatprep.subr.mxu0 0.0
    %2087 = vmatpush1.msra.mxu0 0.0
    %2088 = vmatprep.subr.mxu0 0.0
    %2089 = vmatpush1.msra.mxu0 0.0
    %2090 = vmatprep.subr.mxu0 0.0
    %2091 = vmatpush1.msra.mxu0 0.0
    %2092 = vmatprep.subr.mxu0 0.0
    %2093 = vmatpush1.msra.mxu0 0.0
    %2094 = vmatprep.subr.mxu0 0.0
    %2095 = vmatpush1.msra.mxu0 0.0
    %2096 = vmatprep.subr.mxu0 0.0
    %2097 = vmatpush1.msra.mxu0 0.0
    %2098 = vmatprep.subr.mxu0 0.0
    %2099 = vmatpush1.msra.mxu0 0.0
    %2100 = vmatprep.subr.mxu0 0.0
    %2101 = vmatpush1.msra.mxu0 0.0
    %2102 = vmatprep.subr.mxu0 0.0
    %2103 = vmatpush1.msra.mxu0 0.0
    %2104 = vmatprep.subr.mxu0 0.0
    %2105 = vmatpush1.msra.mxu0 0.0
    %2106 = vmatprep.subr.mxu0 0.0
    %2107 = vmatpush1.msra.mxu0 0.0
    %2108 = vmatprep.subr.mxu0 0.0
    %2109 = vmatpush1.msra.mxu0 0.0
    %2110 = vmatprep.subr.mxu0 0.0
    %2111 = vmatpush1.msra.mxu0 0.0
    %2112 = vmatprep.subr.mxu0 0.0
    %2113 = vmatpush1.msra.mxu0 0.0
    %2114 = vmatprep.subr.mxu0 0.0
    %2115 = vmatpush1.msra.mxu0 0.0
    %2116 = vmatprep.subr.mxu0 0.0
    %2117 = vmatpush1.msra.mxu0 0.0
    %2118 = vmatprep.subr.mxu0 0.0
    %2119 = vmatpush1.msra.mxu0 0.0
    %2120 = vmatprep.subr.mxu0 0.0
    %2121 = vmatpush1.msra.mxu0 0.0
    %2122 = vmatprep.subr.mxu0 0.0
    %2123 = vmatpush1.msra.mxu0 0.0
    %2124 = vmatprep.subr.mxu0 0.0
    %2125 = vmatpush1.msra.mxu0 0.0
    %2126 = vmatprep.subr.mxu0 0.0
    %2127 = vmatpush1.msra.mxu0 0.0
    %2128 = vmatprep.subr.mxu0 0.0
    %2129 = vmatpush1.msra.mxu0 0.0
    %2130 = vmatprep.subr.mxu0 0.0
    %2131 = vmatpush1.msra.mxu0 0.0
    %2132 = vmatprep.subr.mxu0 0.0
    %2133 = vmatpush1.msra.mxu0 0.0
    %2134 = vmatprep.subr.mxu0 0.0
    %2135 = vmatpush1.msra.mxu0 0.0
    %2136 = vmatprep.subr.mxu0 0.0
    %2137 = vmatpush1.msra.mxu0 0.0
    %2138 = vmatprep.subr.mxu0 0.0
    %2139 = vmatpush1.msra.mxu0 0.0
    %2140 = vmatprep.mubr.f32.mxu0 0.0
    %2141 = vmatmul.mubr.f32.gmra.mrb[0].mxu0 %v2074
    %v2142 = vpop.f32.mrb[0].mxu0
    %v2143 = vadd.f32 0.0, %v2142
    %v2144 = vpop.f32.mrb[0].mxu0
    %2145 = vdwg.mxu0
    %v2146 = vadd.f32 %v970, %v2143
    %v2147 = vmul.f32 %v2146, %v71
    %v2148 = vtanh.pop %v2147
    %v2149 = vmul.f32 %v2148, %v71
    %v2150 = vadd.f32 %v2149, %v72
    %v2151 = vmul.f32 %v2150, %v2064
    %2153 = vrot.lane.b32.xlu0 %v2150, 64
    %v2154 = vpop.permute.xlu0 %2153
    %v2156 = vmul.f32 %v2150, %v2154
    %2158 = vrot.lane.b32.xlu0 %v2156, 32
    %v2159 = vpop.permute.xlu0 %2158
    %v2161 = vadd.f32 %v2151, %v2159
    %v2162 = vtanh.pop %v2161
    %2164 = vrot.lane.b32.xlu0 %v2162, 64
    %v2165 = vpop.permute.xlu0 %2164
    %v2167 = vmul.f32 %v2150, %v2165
    %2169 = vrot.lane.b32.xlu0 %v2167, 32
    %v2170 = vpop.permute.xlu0 %2169
    %v2171 = vsel %vm629, %v2170, 0
    %2173 = vmatprep.subr.mxu0 0.0
    %2174 = vmatpush1.msra.mxu0 %v1975
    %2175 = vmatprep.subr.mxu0 0.0
    %2176 = vmatpush1.msra.mxu0 %v1976
    %2177 = vmatprep.subr.mxu0 0.0
    %2178 = vmatpush1.msra.mxu0 %v1977
    %2179 = vmatprep.subr.mxu0 0.0
    %2180 = vmatpush1.msra.mxu0 %v1978
    %2181 = vmatprep.subr.mxu0 0.0
    %2182 = vmatpush1.msra.mxu0 0.0
    %2183 = vmatprep.subr.mxu0 0.0
    %2184 = vmatpush1.msra.mxu0 0.0
    %2185 = vmatprep.subr.mxu0 0.0
    %2186 = vmatpush1.msra.mxu0 0.0
    %2187 = vmatprep.subr.mxu0 0.0
    %2188 = vmatpush1.msra.mxu0 0.0
    %2189 = vmatprep.subr.mxu0 0.0
    %2190 = vmatpush1.msra.mxu0 0.0
    %2191 = vmatprep.subr.mxu0 0.0
    %2192 = vmatpush1.msra.mxu0 0.0
    %2193 = vmatprep.subr.mxu0 0.0
    %2194 = vmatpush1.msra.mxu0 0.0
    %2195 = vmatprep.subr.mxu0 0.0
    %2196 = vmatpush1.msra.mxu0 0.0
    %2197 = vmatprep.subr.mxu0 0.0
    %2198 = vmatpush1.msra.mxu0 0.0
    %2199 = vmatprep.subr.mxu0 0.0
    %2200 = vmatpush1.msra.mxu0 0.0
    %2201 = vmatprep.subr.mxu0 0.0
    %2202 = vmatpush1.msra.mxu0 0.0
    %2203 = vmatprep.subr.mxu0 0.0
    %2204 = vmatpush1.msra.mxu0 0.0
    %2205 = vmatprep.subr.mxu0 0.0
    %2206 = vmatpush1.msra.mxu0 0.0
    %2207 = vmatprep.subr.mxu0 0.0
    %2208 = vmatpush1.msra.mxu0 0.0
    %2209 = vmatprep.subr.mxu0 0.0
    %2210 = vmatpush1.msra.mxu0 0.0
    %2211 = vmatprep.subr.mxu0 0.0
    %2212 = vmatpush1.msra.mxu0 0.0
    %2213 = vmatprep.subr.mxu0 0.0
    %2214 = vmatpush1.msra.mxu0 0.0
    %2215 = vmatprep.subr.mxu0 0.0
    %2216 = vmatpush1.msra.mxu0 0.0
    %2217 = vmatprep.subr.mxu0 0.0
    %2218 = vmatpush1.msra.mxu0 0.0
    %2219 = vmatprep.subr.mxu0 0.0
    %2220 = vmatpush1.msra.mxu0 0.0
    %2221 = vmatprep.subr.mxu0 0.0
    %2222 = vmatpush1.msra.mxu0 0.0
    %2223 = vmatprep.subr.mxu0 0.0
    %2224 = vmatpush1.msra.mxu0 0.0
    %2225 = vmatprep.subr.mxu0 0.0
    %2226 = vmatpush1.msra.mxu0 0.0
    %2227 = vmatprep.subr.mxu0 0.0
    %2228 = vmatpush1.msra.mxu0 0.0
    %2229 = vmatprep.subr.mxu0 0.0
    %2230 = vmatpush1.msra.mxu0 0.0
    %2231 = vmatprep.subr.mxu0 0.0
    %2232 = vmatpush1.msra.mxu0 0.0
    %2233 = vmatprep.subr.mxu0 0.0
    %2234 = vmatpush1.msra.mxu0 0.0
    %2235 = vmatprep.subr.mxu0 0.0
    %2236 = vmatpush1.msra.mxu0 0.0
    %2237 = vmatprep.mubr.f32.mxu0 0.0
    %2238 = vmatmul.mubr.f32.gmra.mrb[0].mxu0 %v2171
    %v2239 = vpop.f32.mrb[0].mxu0
    %v2240 = vadd.f32 0.0, %v2239
    %v2241 = vpop.f32.mrb[0].mxu0
    %2242 = vdwg.mxu0
    %v2243 = vadd.f32 %v1137, %v2240
    %v2244 = vmul.f32 %v2243, %v71
    %v2245 = vtanh.pop %v2244
    %v2246 = vmul.f32 %v2245, %v71
    %v2247 = vadd.f32 %v2246, %v72
    %v2248 = vmul.f32 %v2247, %v2161
    %2250 = vrot.lane.b32.xlu0 %v2247, 64
    %v2251 = vpop.permute.xlu0 %2250
    %v2253 = vmul.f32 %v2247, %v2251
    %2255 = vrot.lane.b32.xlu0 %v2253, 32
    %v2256 = vpop.permute.xlu0 %2255
    %v2258 = vadd.f32 %v2248, %v2256
    %v2259 = vtanh.pop %v2258
    %2261 = vrot.lane.b32.xlu0 %v2259, 64
    %v2262 = vpop.permute.xlu0 %2261
    %v2264 = vmul.f32 %v2247, %v2262
    %2266 = vrot.lane.b32.xlu0 %v2264, 32
    %v2267 = vpop.permute.xlu0 %2266
    %v2268 = vsel %vm629, %v2267, 0
    %2270 = vmatprep.subr.mxu0 0.0
    %2271 = vmatpush1.msra.mxu0 %v1975
    %2272 = vmatprep.subr.mxu0 0.0
    %2273 = vmatpush1.msra.mxu0 %v1976
    %2274 = vmatprep.subr.mxu0 0.0
    %2275 = vmatpush1.msra.mxu0 %v1977
    %2276 = vmatprep.subr.mxu0 0.0
    %2277 = vmatpush1.msra.mxu0 %v1978
    %2278 = vmatprep.subr.mxu0 0.0
    %2279 = vmatpush1.msra.mxu0 0.0
    %2280 = vmatprep.subr.mxu0 0.0
    %2281 = vmatpush1.msra.mxu0 0.0
    %2282 = vmatprep.subr.mxu0 0.0
    %2283 = vmatpush1.msra.mxu0 0.0
    %2284 = vmatprep.subr.mxu0 0.0
    %2285 = vmatpush1.msra.mxu0 0.0
    %2286 = vmatprep.subr.mxu0 0.0
    %2287 = vmatpush1.msra.mxu0 0.0
    %2288 = vmatprep.subr.mxu0 0.0
    %2289 = vmatpush1.msra.mxu0 0.0
    %2290 = vmatprep.subr.mxu0 0.0
    %2291 = vmatpush1.msra.mxu0 0.0
    %2292 = vmatprep.subr.mxu0 0.0
    %2293 = vmatpush1.msra.mxu0 0.0
    %2294 = vmatprep.subr.mxu0 0.0
    %2295 = vmatpush1.msra.mxu0 0.0
    %2296 = vmatprep.subr.mxu0 0.0
    %2297 = vmatpush1.msra.mxu0 0.0
    %2298 = vmatprep.subr.mxu0 0.0
    %2299 = vmatpush1.msra.mxu0 0.0
    %2300 = vmatprep.subr.mxu0 0.0
    %2301 = vmatpush1.msra.mxu0 0.0
    %2302 = vmatprep.subr.mxu0 0.0
    %2303 = vmatpush1.msra.mxu0 0.0
    %2304 = vmatprep.subr.mxu0 0.0
    %2305 = vmatpush1.msra.mxu0 0.0
    %2306 = vmatprep.subr.mxu0 0.0
    %2307 = vmatpush1.msra.mxu0 0.0
    %2308 = vmatprep.subr.mxu0 0.0
    %2309 = vmatpush1.msra.mxu0 0.0
    %2310 = vmatprep.subr.mxu0 0.0
    %2311 = vmatpush1.msra.mxu0 0.0
    %2312 = vmatprep.subr.mxu0 0.0
    %2313 = vmatpush1.msra.mxu0 0.0
    %2314 = vmatprep.subr.mxu0 0.0
    %2315 = vmatpush1.msra.mxu0 0.0
    %2316 = vmatprep.subr.mxu0 0.0
    %2317 = vmatpush1.msra.mxu0 0.0
    %2318 = vmatprep.subr.mxu0 0.0
    %2319 = vmatpush1.msra.mxu0 0.0
    %2320 = vmatprep.subr.mxu0 0.0
    %2321 = vmatpush1.msra.mxu0 0.0
    %2322 = vmatprep.subr.mxu0 0.0
    %2323 = vmatpush1.msra.mxu0 0.0
    %2324 = vmatprep.subr.mxu0 0.0
    %2325 = vmatpush1.msra.mxu0 0.0
    %2326 = vmatprep.subr.mxu0 0.0
    %2327 = vmatpush1.msra.mxu0 0.0
    %2328 = vmatprep.subr.mxu0 0.0
    %2329 = vmatpush1.msra.mxu0 0.0
    %2330 = vmatprep.subr.mxu0 0.0
    %2331 = vmatpush1.msra.mxu0 0.0
    %2332 = vmatprep.subr.mxu0 0.0
    %2333 = vmatpush1.msra.mxu0 0.0
    %2334 = vmatprep.mubr.f32.mxu0 0.0
    %2335 = vmatmul.mubr.f32.gmra.mrb[0].mxu0 %v2268
    %v2336 = vpop.f32.mrb[0].mxu0
    %v2337 = vadd.f32 0.0, %v2336
    %v2338 = vpop.f32.mrb[0].mxu0
    %2339 = vdwg.mxu0
    %v2340 = vadd.f32 %v1304, %v2337
    %v2341 = vmul.f32 %v2340, %v71
    %v2342 = vtanh.pop %v2341
    %v2343 = vmul.f32 %v2342, %v71
    %v2344 = vadd.f32 %v2343, %v72
    %v2345 = vmul.f32 %v2344, %v2258
    %2347 = vrot.lane.b32.xlu0 %v2344, 64
    %v2348 = vpop.permute.xlu0 %2347
    %v2350 = vmul.f32 %v2344, %v2348
    %2352 = vrot.lane.b32.xlu0 %v2350, 32
    %v2353 = vpop.permute.xlu0 %2352
    %v2355 = vadd.f32 %v2345, %v2353
    %v2356 = vtanh.pop %v2355
    %2358 = vrot.lane.b32.xlu0 %v2356, 64
    %v2359 = vpop.permute.xlu0 %2358
    %v2361 = vmul.f32 %v2344, %v2359
    %2363 = vrot.lane.b32.xlu0 %v2361, 32
    %v2364 = vpop.permute.xlu0 %2363
    %v2365 = vsel %vm629, %v2364, 0
    %2367 = vmatprep.subr.mxu0 0.0
    %2368 = vmatpush1.msra.mxu0 %v1975
    %2369 = vmatprep.subr.mxu0 0.0
    %2370 = vmatpush1.msra.mxu0 %v1976
    %2371 = vmatprep.subr.mxu0 0.0
    %2372 = vmatpush1.msra.mxu0 %v1977
    %2373 = vmatprep.subr.mxu0 0.0
    %2374 = vmatpush1.msra.mxu0 %v1978
    %2375 = vmatprep.subr.mxu0 0.0
    %2376 = vmatpush1.msra.mxu0 0.0
    %2377 = vmatprep.subr.mxu0 0.0
    %2378 = vmatpush1.msra.mxu0 0.0
    %2379 = vmatprep.subr.mxu0 0.0
    %2380 = vmatpush1.msra.mxu0 0.0
    %2381 = vmatprep.subr.mxu0 0.0
    %2382 = vmatpush1.msra.mxu0 0.0
    %2383 = vmatprep.subr.mxu0 0.0
    %2384 = vmatpush1.msra.mxu0 0.0
    %2385 = vmatprep.subr.mxu0 0.0
    %2386 = vmatpush1.msra.mxu0 0.0
    %2387 = vmatprep.subr.mxu0 0.0
    %2388 = vmatpush1.msra.mxu0 0.0
    %2389 = vmatprep.subr.mxu0 0.0
    %2390 = vmatpush1.msra.mxu0 0.0
    %2391 = vmatprep.subr.mxu0 0.0
    %2392 = vmatpush1.msra.mxu0 0.0
    %2393 = vmatprep.subr.mxu0 0.0
    %2394 = vmatpush1.msra.mxu0 0.0
    %2395 = vmatprep.subr.mxu0 0.0
    %2396 = vmatpush1.msra.mxu0 0.0
    %2397 = vmatprep.subr.mxu0 0.0
    %2398 = vmatpush1.msra.mxu0 0.0
    %2399 = vmatprep.subr.mxu0 0.0
    %2400 = vmatpush1.msra.mxu0 0.0
    %2401 = vmatprep.subr.mxu0 0.0
    %2402 = vmatpush1.msra.mxu0 0.0
    %2403 = vmatprep.subr.mxu0 0.0
    %2404 = vmatpush1.msra.mxu0 0.0
    %2405 = vmatprep.subr.mxu0 0.0
    %2406 = vmatpush1.msra.mxu0 0.0
    %2407 = vmatprep.subr.mxu0 0.0
    %2408 = vmatpush1.msra.mxu0 0.0
    %2409 = vmatprep.subr.mxu0 0.0
    %2410 = vmatpush1.msra.mxu0 0.0
    %2411 = vmatprep.subr.mxu0 0.0
    %2412 = vmatpush1.msra.mxu0 0.0
    %2413 = vmatprep.subr.mxu0 0.0
    %2414 = vmatpush1.msra.mxu0 0.0
    %2415 = vmatprep.subr.mxu0 0.0
    %2416 = vmatpush1.msra.mxu0 0.0
    %2417 = vmatprep.subr.mxu0 0.0
    %2418 = vmatpush1.msra.mxu0 0.0
    %2419 = vmatprep.subr.mxu0 0.0
    %2420 = vmatpush1.msra.mxu0 0.0
    %2421 = vmatprep.subr.mxu0 0.0
    %2422 = vmatpush1.msra.mxu0 0.0
    %2423 = vmatprep.subr.mxu0 0.0
    %2424 = vmatpush1.msra.mxu0 0.0
    %2425 = vmatprep.subr.mxu0 0.0
    %2426 = vmatpush1.msra.mxu0 0.0
    %2427 = vmatprep.subr.mxu0 0.0
    %2428 = vmatpush1.msra.mxu0 0.0
    %2429 = vmatprep.subr.mxu0 0.0
    %2430 = vmatpush1.msra.mxu0 0.0
    %2431 = vmatprep.mubr.f32.mxu0 0.0
    %2432 = vmatmul.mubr.f32.gmra.mrb[0].mxu0 %v2365
    %v2433 = vpop.f32.mrb[0].mxu0
    %v2434 = vadd.f32 0.0, %v2433
    %v2435 = vpop.f32.mrb[0].mxu0
    %2436 = vdwg.mxu0
    %v2437 = vadd.f32 %v1471, %v2434
    %v2438 = vmul.f32 %v2437, %v71
    %v2439 = vtanh.pop %v2438
    %v2440 = vmul.f32 %v2439, %v71
    %v2441 = vadd.f32 %v2440, %v72
    %v2442 = vmul.f32 %v2441, %v2355
    %2444 = vrot.lane.b32.xlu0 %v2441, 64
    %v2445 = vpop.permute.xlu0 %2444
    %v2447 = vmul.f32 %v2441, %v2445
    %2449 = vrot.lane.b32.xlu0 %v2447, 32
    %v2450 = vpop.permute.xlu0 %2449
    %v2452 = vadd.f32 %v2442, %v2450
    %v2453 = vtanh.pop %v2452
    %2455 = vrot.lane.b32.xlu0 %v2453, 64
    %v2456 = vpop.permute.xlu0 %2455
    %v2458 = vmul.f32 %v2441, %v2456
    %2460 = vrot.lane.b32.xlu0 %v2458, 32
    %v2461 = vpop.permute.xlu0 %2460
    %v2462 = vsel %vm629, %v2461, 0
    %2464 = vmatprep.subr.mxu0 0.0
    %2465 = vmatpush1.msra.mxu0 %v1975
    %2466 = vmatprep.subr.mxu0 0.0
    %2467 = vmatpush1.msra.mxu0 %v1976
    %2468 = vmatprep.subr.mxu0 0.0
    %2469 = vmatpush1.msra.mxu0 %v1977
    %2470 = vmatprep.subr.mxu0 0.0
    %2471 = vmatpush1.msra.mxu0 %v1978
    %2472 = vmatprep.subr.mxu0 0.0
    %2473 = vmatpush1.msra.mxu0 0.0
    %2474 = vmatprep.subr.mxu0 0.0
    %2475 = vmatpush1.msra.mxu0 0.0
    %2476 = vmatprep.subr.mxu0 0.0
    %2477 = vmatpush1.msra.mxu0 0.0
    %2478 = vmatprep.subr.mxu0 0.0
    %2479 = vmatpush1.msra.mxu0 0.0
    %2480 = vmatprep.subr.mxu0 0.0
    %2481 = vmatpush1.msra.mxu0 0.0
    %2482 = vmatprep.subr.mxu0 0.0
    %2483 = vmatpush1.msra.mxu0 0.0
    %2484 = vmatprep.subr.mxu0 0.0
    %2485 = vmatpush1.msra.mxu0 0.0
    %2486 = vmatprep.subr.mxu0 0.0
    %2487 = vmatpush1.msra.mxu0 0.0
    %2488 = vmatprep.subr.mxu0 0.0
    %2489 = vmatpush1.msra.mxu0 0.0
    %2490 = vmatprep.subr.mxu0 0.0
    %2491 = vmatpush1.msra.mxu0 0.0
    %2492 = vmatprep.subr.mxu0 0.0
    %2493 = vmatpush1.msra.mxu0 0.0
    %2494 = vmatprep.subr.mxu0 0.0
    %2495 = vmatpush1.msra.mxu0 0.0
    %2496 = vmatprep.subr.mxu0 0.0
    %2497 = vmatpush1.msra.mxu0 0.0
    %2498 = vmatprep.subr.mxu0 0.0
    %2499 = vmatpush1.msra.mxu0 0.0
    %2500 = vmatprep.subr.mxu0 0.0
    %2501 = vmatpush1.msra.mxu0 0.0
    %2502 = vmatprep.subr.mxu0 0.0
    %2503 = vmatpush1.msra.mxu0 0.0
    %2504 = vmatprep.subr.mxu0 0.0
    %2505 = vmatpush1.msra.mxu0 0.0
    %2506 = vmatprep.subr.mxu0 0.0
    %2507 = vmatpush1.msra.mxu0 0.0
    %2508 = vmatprep.subr.mxu0 0.0
    %2509 = vmatpush1.msra.mxu0 0.0
    %2510 = vmatprep.subr.mxu0 0.0
    %2511 = vmatpush1.msra.mxu0 0.0
    %2512 = vmatprep.subr.mxu0 0.0
    %2513 = vmatpush1.msra.mxu0 0.0
    %2514 = vmatprep.subr.mxu0 0.0
    %2515 = vmatpush1.msra.mxu0 0.0
    %2516 = vmatprep.subr.mxu0 0.0
    %2517 = vmatpush1.msra.mxu0 0.0
    %2518 = vmatprep.subr.mxu0 0.0
    %2519 = vmatpush1.msra.mxu0 0.0
    %2520 = vmatprep.subr.mxu0 0.0
    %2521 = vmatpush1.msra.mxu0 0.0
    %2522 = vmatprep.subr.mxu0 0.0
    %2523 = vmatpush1.msra.mxu0 0.0
    %2524 = vmatprep.subr.mxu0 0.0
    %2525 = vmatpush1.msra.mxu0 0.0
    %2526 = vmatprep.subr.mxu0 0.0
    %2527 = vmatpush1.msra.mxu0 0.0
    %2528 = vmatprep.mubr.f32.mxu0 0.0
    %2529 = vmatmul.mubr.f32.gmra.mrb[0].mxu0 %v2462
    %v2530 = vpop.f32.mrb[0].mxu0
    %v2531 = vadd.f32 0.0, %v2530
    %v2532 = vpop.f32.mrb[0].mxu0
    %2533 = vdwg.mxu0
    %v2534 = vadd.f32 %v1638, %v2531
    %v2535 = vmul.f32 %v2534, %v71
    %v2536 = vtanh.pop %v2535
    %v2537 = vmul.f32 %v2536, %v71
    %v2538 = vadd.f32 %v2537, %v72
    %v2539 = vmul.f32 %v2538, %v2452
    %2541 = vrot.lane.b32.xlu0 %v2538, 64
    %v2542 = vpop.permute.xlu0 %2541
    %v2544 = vmul.f32 %v2538, %v2542
    %2546 = vrot.lane.b32.xlu0 %v2544, 32
    %v2547 = vpop.permute.xlu0 %2546
    %v2549 = vadd.f32 %v2539, %v2547
    %v2550 = vtanh.pop %v2549
    %2552 = vrot.lane.b32.xlu0 %v2550, 64
    %v2553 = vpop.permute.xlu0 %2552
    %v2555 = vmul.f32 %v2538, %v2553
    %2557 = vrot.lane.b32.xlu0 %v2555, 32
    %v2558 = vpop.permute.xlu0 %2557
    %v2559 = vsel %vm629, %v2558, 0
    %2561 = vmatprep.subr.mxu0 0.0
    %2562 = vmatpush1.msra.mxu0 %v1975
    %2563 = vmatprep.subr.mxu0 0.0
    %2564 = vmatpush1.msra.mxu0 %v1976
    %2565 = vmatprep.subr.mxu0 0.0
    %2566 = vmatpush1.msra.mxu0 %v1977
    %2567 = vmatprep.subr.mxu0 0.0
    %2568 = vmatpush1.msra.mxu0 %v1978
    %2569 = vmatprep.subr.mxu0 0.0
    %2570 = vmatpush1.msra.mxu0 0.0
    %2571 = vmatprep.subr.mxu0 0.0
    %2572 = vmatpush1.msra.mxu0 0.0
    %2573 = vmatprep.subr.mxu0 0.0
    %2574 = vmatpush1.msra.mxu0 0.0
    %2575 = vmatprep.subr.mxu0 0.0
    %2576 = vmatpush1.msra.mxu0 0.0
    %2577 = vmatprep.subr.mxu0 0.0
    %2578 = vmatpush1.msra.mxu0 0.0
    %2579 = vmatprep.subr.mxu0 0.0
    %2580 = vmatpush1.msra.mxu0 0.0
    %2581 = vmatprep.subr.mxu0 0.0
    %2582 = vmatpush1.msra.mxu0 0.0
    %2583 = vmatprep.subr.mxu0 0.0
    %2584 = vmatpush1.msra.mxu0 0.0
    %2585 = vmatprep.subr.mxu0 0.0
    %2586 = vmatpush1.msra.mxu0 0.0
    %2587 = vmatprep.subr.mxu0 0.0
    %2588 = vmatpush1.msra.mxu0 0.0
    %2589 = vmatprep.subr.mxu0 0.0
    %2590 = vmatpush1.msra.mxu0 0.0
    %2591 = vmatprep.subr.mxu0 0.0
    %2592 = vmatpush1.msra.mxu0 0.0
    %2593 = vmatprep.subr.mxu0 0.0
    %2594 = vmatpush1.msra.mxu0 0.0
    %2595 = vmatprep.subr.mxu0 0.0
    %2596 = vmatpush1.msra.mxu0 0.0
    %2597 = vmatprep.subr.mxu0 0.0
    %2598 = vmatpush1.msra.mxu0 0.0
    %2599 = vmatprep.subr.mxu0 0.0
    %2600 = vmatpush1.msra.mxu0 0.0
    %2601 = vmatprep.subr.mxu0 0.0
    %2602 = vmatpush1.msra.mxu0 0.0
    %2603 = vmatprep.subr.mxu0 0.0
    %2604 = vmatpush1.msra.mxu0 0.0
    %2605 = vmatprep.subr.mxu0 0.0
    %2606 = vmatpush1.msra.mxu0 0.0
    %2607 = vmatprep.subr.mxu0 0.0
    %2608 = vmatpush1.msra.mxu0 0.0
    %2609 = vmatprep.subr.mxu0 0.0
    %2610 = vmatpush1.msra.mxu0 0.0
    %2611 = vmatprep.subr.mxu0 0.0
    %2612 = vmatpush1.msra.mxu0 0.0
    %2613 = vmatprep.subr.mxu0 0.0
    %2614 = vmatpush1.msra.mxu0 0.0
    %2615 = vmatprep.subr.mxu0 0.0
    %2616 = vmatpush1.msra.mxu0 0.0
    %2617 = vmatprep.subr.mxu0 0.0
    %2618 = vmatpush1.msra.mxu0 0.0
    %2619 = vmatprep.subr.mxu0 0.0
    %2620 = vmatpush1.msra.mxu0 0.0
    %2621 = vmatprep.subr.mxu0 0.0
    %2622 = vmatpush1.msra.mxu0 0.0
    %2623 = vmatprep.subr.mxu0 0.0
    %2624 = vmatpush1.msra.mxu0 0.0
    %2625 = vmatprep.mubr.f32.mxu0 0.0
    %2626 = vmatmul.mubr.f32.gmra.mrb[0].mxu0 %v2559
    %v2627 = vpop.f32.mrb[0].mxu0
    %v2628 = vadd.f32 0.0, %v2627
    %v2629 = vpop.f32.mrb[0].mxu0
    %2630 = vdwg.mxu0
    %v2631 = vadd.f32 %v1805, %v2628
    %v2632 = vmul.f32 %v2631, %v71
    %v2633 = vtanh.pop %v2632
    %v2634 = vmul.f32 %v2633, %v71
    %v2635 = vadd.f32 %v2634, %v72
    %v2636 = vmul.f32 %v2635, %v2549
    %2638 = vrot.lane.b32.xlu0 %v2635, 64
    %v2639 = vpop.permute.xlu0 %2638
    %v2641 = vmul.f32 %v2635, %v2639
    %2643 = vrot.lane.b32.xlu0 %v2641, 32
    %v2644 = vpop.permute.xlu0 %2643
    %v2646 = vadd.f32 %v2636, %v2644
    %v2647 = vtanh.pop %v2646
    %2649 = vrot.lane.b32.xlu0 %v2647, 64
    %v2650 = vpop.permute.xlu0 %2649
    %v2652 = vmul.f32 %v2635, %v2650
    %2654 = vrot.lane.b32.xlu0 %v2652, 32
    %v2655 = vpop.permute.xlu0 %2654
    %v2656 = vsel %vm629, %v2655, 0
    %2658 = vmatprep.subr.mxu0 0.0
    %2659 = vmatpush1.msra.mxu0 %v1975
    %2660 = vmatprep.subr.mxu0 0.0
    %2661 = vmatpush1.msra.mxu0 %v1976
    %2662 = vmatprep.subr.mxu0 0.0
    %2663 = vmatpush1.msra.mxu0 %v1977
    %2664 = vmatprep.subr.mxu0 0.0
    %2665 = vmatpush1.msra.mxu0 %v1978
    %2666 = vmatprep.subr.mxu0 0.0
    %2667 = vmatpush1.msra.mxu0 0.0
    %2668 = vmatprep.subr.mxu0 0.0
    %2669 = vmatpush1.msra.mxu0 0.0
    %2670 = vmatprep.subr.mxu0 0.0
    %2671 = vmatpush1.msra.mxu0 0.0
    %2672 = vmatprep.subr.mxu0 0.0
    %2673 = vmatpush1.msra.mxu0 0.0
    %2674 = vmatprep.subr.mxu0 0.0
    %2675 = vmatpush1.msra.mxu0 0.0
    %2676 = vmatprep.subr.mxu0 0.0
    %2677 = vmatpush1.msra.mxu0 0.0
    %2678 = vmatprep.subr.mxu0 0.0
    %2679 = vmatpush1.msra.mxu0 0.0
    %2680 = vmatprep.subr.mxu0 0.0
    %2681 = vmatpush1.msra.mxu0 0.0
    %2682 = vmatprep.subr.mxu0 0.0
    %2683 = vmatpush1.msra.mxu0 0.0
    %2684 = vmatprep.subr.mxu0 0.0
    %2685 = vmatpush1.msra.mxu0 0.0
    %2686 = vmatprep.subr.mxu0 0.0
    %2687 = vmatpush1.msra.mxu0 0.0
    %2688 = vmatprep.subr.mxu0 0.0
    %2689 = vmatpush1.msra.mxu0 0.0
    %2690 = vmatprep.subr.mxu0 0.0
    %2691 = vmatpush1.msra.mxu0 0.0
    %2692 = vmatprep.subr.mxu0 0.0
    %2693 = vmatpush1.msra.mxu0 0.0
    %2694 = vmatprep.subr.mxu0 0.0
    %2695 = vmatpush1.msra.mxu0 0.0
    %2696 = vmatprep.subr.mxu0 0.0
    %2697 = vmatpush1.msra.mxu0 0.0
    %2698 = vmatprep.subr.mxu0 0.0
    %2699 = vmatpush1.msra.mxu0 0.0
    %2700 = vmatprep.subr.mxu0 0.0
    %2701 = vmatpush1.msra.mxu0 0.0
    %2702 = vmatprep.subr.mxu0 0.0
    %2703 = vmatpush1.msra.mxu0 0.0
    %2704 = vmatprep.subr.mxu0 0.0
    %2705 = vmatpush1.msra.mxu0 0.0
    %2706 = vmatprep.subr.mxu0 0.0
    %2707 = vmatpush1.msra.mxu0 0.0
    %2708 = vmatprep.subr.mxu0 0.0
    %2709 = vmatpush1.msra.mxu0 0.0
    %2710 = vmatprep.subr.mxu0 0.0
    %2711 = vmatpush1.msra.mxu0 0.0
    %2712 = vmatprep.subr.mxu0 0.0
    %2713 = vmatpush1.msra.mxu0 0.0
    %2714 = vmatprep.subr.mxu0 0.0
    %2715 = vmatpush1.msra.mxu0 0.0
    %2716 = vmatprep.subr.mxu0 0.0
    %2717 = vmatpush1.msra.mxu0 0.0
    %2718 = vmatprep.subr.mxu0 0.0
    %2719 = vmatpush1.msra.mxu0 0.0
    %2720 = vmatprep.subr.mxu0 0.0
    %2721 = vmatpush1.msra.mxu0 0.0
    %2722 = vmatprep.mubr.f32.mxu0 0.0
    %2723 = vmatmul.mubr.f32.gmra.mrb[0].mxu0 %v2656
    %v2724 = vpop.f32.mrb[0].mxu0
    %v2725 = vadd.f32 0.0, %v2724
    %v2726 = vpop.f32.mrb[0].mxu0
    %2727 = vdwg.mxu0
    %v2728 = vadd.f32 %v1972, %v2725
    %v2729 = vmul.f32 %v2728, %v71
    %v2730 = vtanh.pop %v2729
    %v2731 = vmul.f32 %v2730, %v71
    %v2732 = vadd.f32 %v2731, %v72
    %v2733 = vmul.f32 %v2732, %v2646
    %2735 = vrot.lane.b32.xlu0 %v2732, 64
    %v2736 = vpop.permute.xlu0 %2735
    %v2738 = vmul.f32 %v2732, %v2736
    %2740 = vrot.lane.b32.xlu0 %v2738, 32
    %v2741 = vpop.permute.xlu0 %2740
    %v2743 = vadd.f32 %v2733, %v2741
    %v2744 = vtanh.pop %v2743
    %2746 = vrot.lane.b32.xlu0 %v2744, 64
    %v2747 = vpop.permute.xlu0 %2746
    %v2749 = vmul.f32 %v2732, %v2747
    %v2750 = vld [vmem:[#allocation4] sm:$0xff]
    %v2751 = vld [vmem:[#allocation4 + $0x8] sm:$0xff]
    %v2752 = vld [vmem:[#allocation4 + $0x10] sm:$0xff]
    %v2753 = vld [vmem:[#allocation4 + $0x18] sm:$0xff]
    %v2754 = vld [vmem:[%s10] sm:$0x1]
    %v2756 = vlaneseq
    %v2757 = vshrl.u32 %v2756, 7
    %v2758 = vsub.s32 0, %v2757
    %v2759 = vrot.slane %v2754, %v2758
    %2762 = vrot.lane.b32.xlu0 %v2749, 32
    %v2763 = vpop.permute.xlu0 %2762
    %v2764 = vsel %vm629, %v2763, 0
    %2766 = vmatprep.subr.mxu0 0.0
    %2767 = vmatpush1.msra.mxu0 %v2750
    %2768 = vmatprep.subr.mxu0 0.0
    %2769 = vmatpush1.msra.mxu0 %v2751
    %2770 = vmatprep.subr.mxu0 0.0
    %2771 = vmatpush1.msra.mxu0 %v2752
    %2772 = vmatprep.subr.mxu0 0.0
    %2773 = vmatpush1.msra.mxu0 %v2753
    %2774 = vmatprep.subr.mxu0 0.0
    %2775 = vmatpush1.msra.mxu0 0.0
    %2776 = vmatprep.subr.mxu0 0.0
    %2777 = vmatpush1.msra.mxu0 0.0
    %2778 = vmatprep.subr.mxu0 0.0
    %2779 = vmatpush1.msra.mxu0 0.0
    %2780 = vmatprep.subr.mxu0 0.0
    %2781 = vmatpush1.msra.mxu0 0.0
    %2782 = vmatprep.subr.mxu0 0.0
    %2783 = vmatpush1.msra.mxu0 0.0
    %2784 = vmatprep.subr.mxu0 0.0
    %2785 = vmatpush1.msra.mxu0 0.0
    %2786 = vmatprep.subr.mxu0 0.0
    %2787 = vmatpush1.msra.mxu0 0.0
    %2788 = vmatprep.subr.mxu0 0.0
    %2789 = vmatpush1.msra.mxu0 0.0
    %2790 = vmatprep.subr.mxu0 0.0
    %2791 = vmatpush1.msra.mxu0 0.0
    %2792 = vmatprep.subr.mxu0 0.0
    %2793 = vmatpush1.msra.mxu0 0.0
    %2794 = vmatprep.subr.mxu0 0.0
    %2795 = vmatpush1.msra.mxu0 0.0
    %2796 = vmatprep.subr.mxu0 0.0
    %2797 = vmatpush1.msra.mxu0 0.0
    %2798 = vmatprep.subr.mxu0 0.0
    %2799 = vmatpush1.msra.mxu0 0.0
    %2800 = vmatprep.subr.mxu0 0.0
    %2801 = vmatpush1.msra.mxu0 0.0
    %2802 = vmatprep.subr.mxu0 0.0
    %2803 = vmatpush1.msra.mxu0 0.0
    %2804 = vmatprep.subr.mxu0 0.0
    %2805 = vmatpush1.msra.mxu0 0.0
    %2806 = vmatprep.subr.mxu0 0.0
    %2807 = vmatpush1.msra.mxu0 0.0
    %2808 = vmatprep.subr.mxu0 0.0
    %2809 = vmatpush1.msra.mxu0 0.0
    %2810 = vmatprep.subr.mxu0 0.0
    %2811 = vmatpush1.msra.mxu0 0.0
    %2812 = vmatprep.subr.mxu0 0.0
    %2813 = vmatpush1.msra.mxu0 0.0
    %2814 = vmatprep.subr.mxu0 0.0
    %2815 = vmatpush1.msra.mxu0 0.0
    %2816 = vmatprep.subr.mxu0 0.0
    %2817 = vmatpush1.msra.mxu0 0.0
    %2818 = vmatprep.subr.mxu0 0.0
    %2819 = vmatpush1.msra.mxu0 0.0
    %2820 = vmatprep.subr.mxu0 0.0
    %2821 = vmatpush1.msra.mxu0 0.0
    %2822 = vmatprep.subr.mxu0 0.0
    %2823 = vmatpush1.msra.mxu0 0.0
    %2824 = vmatprep.subr.mxu0 0.0
    %2825 = vmatpush1.msra.mxu0 0.0
    %2826 = vmatprep.subr.mxu0 0.0
    %2827 = vmatpush1.msra.mxu0 0.0
    %2828 = vmatprep.subr.mxu0 0.0
    %2829 = vmatpush1.msra.mxu0 0.0
    %2830 = vmatprep.mubr.f32.mxu0 0.0
    %2831 = vmatmul.mubr.f32.gmra.mrb[0].mxu0 %v2764
    %v2832 = vpop.f32.mrb[0].mxu0
    %v2833 = vadd.f32 %v2759, %v2832
    %v2834 = vpop.f32.mrb[0].mxu0
    %2835 = vdwg.mxu0
    %2836 = vst [vmem:[%s11] sm:$0xff] %v2833
    // Predicated region
    $region54: #{cnn_lstm_forward.1} parent=1 // pred_check
      _
    $region55: #{cnn_lstm_forward.1} parent=1 // pred_check_branch
      %2838 = sbr.rel (0) target = $region57
    $region56: #{cnn_lstm_forward.1} parent=1 // pred_region
      _
    $region57: #{cnn_lstm_forward.1} parent=1 // pred_fallthru
      _
    // Predicated region
    $region58: #{cnn_lstm_forward.1} parent=1 // pred_check
      _
    $region59: #{cnn_lstm_forward.1} parent=1 // pred_check_branch
      %2840 = sbr.rel (0) target = $region61
    $region60: #{cnn_lstm_forward.1} parent=1 // pred_region
      _
    $region61: #{cnn_lstm_forward.1} parent=1 // pred_fallthru
      _
    %2841 = vsyncpa [#allocation3], 1
    %2842 = vsyncpa [#allocation5], 1

</llo_original>
